<compile_context>
chip_gen: v5e
topology: v5e:2x2
jax: 0.10.0
libtpu: 0.0.40
codegen_flags: <defaults>
</compile_context>

<pallas_src>
import functools

import jax
import jax.numpy as jnp
from jax import lax
from jax.experimental import pallas as pl
from jax.experimental.pallas import tpu as pltpu


def _fused_block1_kernel(p_ref, w1_ref, b1_ref, w2_ref, b2_ref, o_ref, h1_ref,
                         *, img_h):
    """One (batch n, row-tile i) grid step.

    p_ref : (TH+2, W+2, K1)  conv1 im2col tile (bf16), K1 = padded 3*3*Cin
    w1_ref: (K1, 64)         conv1 weights with taps folded into K (bf16)
    b1_ref: (1, 1, 64)       conv1 bias (f32)
    w2_ref: (3, 3, 64, 64)   conv2 weights, HWIO (bf16)
    b2_ref: (1, 1, 64)       conv2 bias (f32)
    o_ref : (TH, W, 64)      output tile (f32)
    h1_ref: (TH+2, W+2, 64)  VMEM scratch: conv1 activations incl. conv2's
                             zero-padding ring (bf16)
    """
    TH, W, Cout = o_ref.shape
    row0 = pl.program_id(1) * TH

    # ---- conv1 + bias + ReLU: a single MXU matmul (3x3xCin folded into K) ---
    acc1 = lax.dot_general(
        p_ref[...], w1_ref[...],
        dimension_numbers=(((2,), (0,)), ((), ())),
        preferred_element_type=jnp.float32)                 # (TH+2, W+2, 64)
    h1 = jnp.maximum(acc1 + b1_ref[...], 0.0)

    # Zero conv2's padding ring: h1 rows that fall outside the image and the
    # first/last (padded) columns must be exact zeros, not conv1(zero-padded x).
    gr = lax.broadcasted_iota(jnp.int32, h1.shape, 0) + (row0 - 1)
    gc = lax.broadcasted_iota(jnp.int32, h1.shape, 1)
    keep = (gr >= 0) & (gr < img_h) & (gc >= 1) & (gc <= W)
    h1_ref[...] = jnp.where(keep, h1, 0.0).astype(h1_ref.dtype)

    # ---- conv2 + bias + ReLU: 9 shifted MXU matmuls on the resident h1 ----
    acc2 = jnp.zeros((TH, W, Cout), jnp.float32)
    for kh in range(3):
        for kw in range(3):
            acc2 += lax.dot_general(
                h1_ref[kh:kh + TH, kw:kw + W, :], w2_ref[kh, kw],
                dimension_numbers=(((2,), (0,)), ((), ())),
                preferred_element_type=jnp.float32)
    o_ref[...] = jnp.maximum(acc2 + b2_ref[...], 0.0).astype(o_ref.dtype)


def _pick_row_tile(h, target):
    """Largest divisor of h that is <= target and gives >= 2 row tiles."""
    for t in range(min(h, target), 0, -1):
        if h % t == 0 and h // t >= 2:
            return t
    return h


def block1_forward(x_nchw, params, *, row_tile=16, compute_dtype=jnp.bfloat16):
    """VGG19 features[:4] forward. x_nchw: (N, 3, H, W) f32 -> (N, 64, H, W) f32."""
    w1, b1, w2, b2 = params                     # w1: (3,3,3,64), w2: (3,3,64,64) HWIO
    N, Cin, H, W = x_nchw.shape
    Cout = w1.shape[-1]

    TH = _pick_row_tile(H, row_tile)
    T = H // TH

    # ---------------- glue: layout + conv1 im2col + halo row tiles ----------
    x = jnp.transpose(x_nchw, (0, 2, 3, 1)).astype(compute_dtype)   # NHWC, bf16
    xp2 = jnp.pad(x, ((0, 0), (2, 2), (2, 2), (0, 0)))              # pad=2 each side

    # conv1 im2col: P[n, r, c, (kh*3+kw)*Cin+ci] = xp2[n, r+kh, c+kw, ci]
    # (r, c) index the *padded* h1 grid of size (H+2, W+2).
    taps = [xp2[:, kh:kh + H + 2, kw:kw + W + 2, :]
            for kh in range(3) for kw in range(3)]
    P = jnp.concatenate(taps, axis=-1)                               # (N, H+2, W+2, 9*Cin)
    K1 = 9 * Cin
    K1p = ((K1 + 7) // 8) * 8                                        # 27 -> 32
    if K1p > K1:
        P = jnp.pad(P, ((0, 0), (0, 0), (0, 0), (0, K1p - K1)))

    # Overlapping row windows (2-row halo) so BlockSpecs stay plainly blocked.
    p_tiles = jnp.stack([P[:, i * TH: i * TH + TH + 2] for i in range(T)],
                        axis=1)                                      # (N, T, TH+2, W+2, K1p)

    w1f = w1.reshape(K1, Cout)
    if K1p > K1:
        w1f = jnp.pad(w1f, ((0, K1p - K1), (0, 0)))
    w1f = w1f.astype(compute_dtype)
    w2c = w2.astype(compute_dtype)
    b1r = b1.reshape(1, 1, Cout).astype(jnp.float32)
    b2r = b2.reshape(1, 1, Cout).astype(jnp.float32)

    kernel = functools.partial(_fused_block1_kernel, img_h=H)

    out_nhwc = pl.pallas_call(
        kernel,
        out_shape=jax.ShapeDtypeStruct((N, H, W, Cout), jnp.float32),
        grid_spec=pltpu.PrefetchScalarGridSpec(
            num_scalar_prefetch=0,
            grid=(N, T),
            in_specs=[
                pl.BlockSpec((None, None, TH + 2, W + 2, K1p),
                             lambda n, i: (n, i, 0, 0, 0)),
                pl.BlockSpec((K1p, Cout), lambda n, i: (0, 0)),
                pl.BlockSpec((1, 1, Cout), lambda n, i: (0, 0, 0)),
                pl.BlockSpec((3, 3, Cout, Cout), lambda n, i: (0, 0, 0, 0)),
                pl.BlockSpec((1, 1, Cout), lambda n, i: (0, 0, 0)),
            ],
            out_specs=pl.BlockSpec((None, TH, W, Cout),
                                   lambda n, i: (n, i, 0, 0)),
            scratch_shapes=[pltpu.VMEM((TH + 2, W + 2, Cout), compute_dtype)],
        ),
        compiler_params=pltpu.CompilerParams(
            dimension_semantics=("parallel", "parallel"),
            vmem_limit_bytes=32 * 1024 * 1024,
        ),
    )(p_tiles, w1f, b1r, w2c, b2r)

    return jnp.transpose(out_nhwc, (0, 3, 1, 2))                     # NHWC -> NCHW


def init_params(key):
    """Synthetic weights with the VGG19 features[:4] shapes, stored HWIO.
    # TODO(synk): pretrained VGG19 weights cannot be loaded in-sandbox (no
    # files / network); deterministic synthetic weights of identical shape
    # are used instead."""
    k1, k2, k3, k4 = jax.random.split(key, 4)
    w1 = jax.random.normal(k1, (3, 3, 3, 64), jnp.float32) * 0.1
    b1 = jax.random.normal(k2, (64,), jnp.float32) * 0.1
    w2 = jax.random.normal(k3, (3, 3, 64, 64), jnp.float32) * 0.05
    b2 = jax.random.normal(k4, (64,), jnp.float32) * 0.1
    return (w1, b1, w2, b2)


def _reference(x_nchw, params, compute_dtype=jnp.bfloat16):
    """Pure-JAX reference matching the kernel's quantization points
    (bf16 inputs/weights/h1, f32 accumulation and epilogues)."""
    w1, b1, w2, b2 = params
    f32 = jnp.float32
    x = x_nchw.astype(compute_dtype).astype(f32)
    w1q = w1.astype(compute_dtype).astype(f32)
    w2q = w2.astype(compute_dtype).astype(f32)

    dn1 = lax.conv_dimension_numbers(x.shape, w1q.shape, ("NCHW", "HWIO", "NCHW"))
    h = lax.conv_general_dilated(x, w1q, (1, 1), ((1, 1), (1, 1)),
                                 dimension_numbers=dn1)
    h = jnp.maximum(h + b1.reshape(1, -1, 1, 1).astype(f32), 0.0)
    h = h.astype(compute_dtype).astype(f32)      # kernel stores h1 in bf16 VMEM

    dn2 = lax.conv_dimension_numbers(h.shape, w2q.shape, ("NCHW", "HWIO", "NCHW"))
    h = lax.conv_general_dilated(h, w2q, (1, 1), ((1, 1), (1, 1)),
                                 dimension_numbers=dn2)
    return jnp.maximum(h + b2.reshape(1, -1, 1, 1).astype(f32), 0.0)


if __name__ == "__main__":
    key = jax.random.PRNGKey(0)
    kx, kp = jax.random.split(key)

    # Small input consistent with the module: RGB image batch, NCHW.
    x = jax.random.normal(kx, (2, 3, 16, 16), jnp.float32)
    params = init_params(kp)

    fwd = jax.jit(block1_forward)
    out = jax.block_until_ready(fwd(x, params))

    ref = _reference(x, params)
    assert out.shape == (2, 64, 16, 16), out.shape
    max_err = float(jnp.max(jnp.abs(out - ref)))
    assert jnp.allclose(out, ref, atol=1e-3, rtol=1e-3), max_err

    print("KERNEL_OK")
</pallas_src>

<mosaic_0001>
module attributes {stable_mosaic.version = 11 : i64} {
  func.func @_fused_block1_kernel(%arg0: i32, %arg1: i32, %arg2: memref<1x1x10x18x32xbf16, #tpu.memory_space<vmem>>, %arg3: memref<32x64xbf16, #tpu.memory_space<vmem>>, %arg4: memref<1x1x64xf32, #tpu.memory_space<vmem>>, %arg5: memref<3x3x64x64xbf16, #tpu.memory_space<vmem>>, %arg6: memref<1x1x64xf32, #tpu.memory_space<vmem>>, %arg7: memref<1x8x16x64xf32, #tpu.memory_space<vmem>>, %arg8: memref<10x18x64xbf16, #tpu.memory_space<vmem>>) attributes {dimension_semantics = [#tpu.dimension_semantics<parallel>, #tpu.dimension_semantics<parallel>], iteration_bounds = array<i64: 2, 2>, scalar_prefetch = 0 : i64, scratch_operands = 1 : i64, tpu.core_type = #tpu.core_type<tc>, window_params = [{transform_indices = @transform_0, window_bounds = array<i64: 1, 1, 10, 18, 32>}, {pipeline_mode = #tpu.pipeline_mode<synchronous>, transform_indices = @transform_1, window_bounds = array<i64: 32, 64>}, {pipeline_mode = #tpu.pipeline_mode<synchronous>, transform_indices = @transform_2, window_bounds = array<i64: 1, 1, 64>}, {pipeline_mode = #tpu.pipeline_mode<synchronous>, transform_indices = @transform_3, window_bounds = array<i64: 3, 3, 64, 64>}, {pipeline_mode = #tpu.pipeline_mode<synchronous>, transform_indices = @transform_4, window_bounds = array<i64: 1, 1, 64>}, {transform_indices = @transform_5, window_bounds = array<i64: 1, 8, 16, 64>}]} {
    %c8_i32 = arith.constant 8 : i32
    %0 = arith.muli %arg1, %c8_i32 : i32
    %c0 = arith.constant 0 : index
    %c0_0 = arith.constant 0 : index
    %c0_1 = arith.constant 0 : index
    %c0_2 = arith.constant 0 : index
    %c0_3 = arith.constant 0 : index
    %1 = vector.load %arg2[%c0, %c0_0, %c0_1, %c0_2, %c0_3] : memref<1x1x10x18x32xbf16, #tpu.memory_space<vmem>>, vector<1x1x10x18x32xbf16>
    %2 = vector.shape_cast %1 : vector<1x1x10x18x32xbf16> to vector<10x18x32xbf16>
    %c0_4 = arith.constant 0 : index
    %c0_5 = arith.constant 0 : index
    %3 = vector.load %arg3[%c0_4, %c0_5] : memref<32x64xbf16, #tpu.memory_space<vmem>>, vector<32x64xbf16>
    %cst = arith.constant dense<0.000000e+00> : vector<10x18x64xf32>
    %4 = tpu.matmul %2, %3, %cst {dimension_numbers = #tpu.dot_dimension_numbers<[2], [0], [0, 1], [1], [0, 0, 0, 1, 1, 1], [], []>} : vector<10x18x32xbf16>, vector<32x64xbf16>, vector<10x18x64xf32> -> vector<10x18x64xf32>
    %c0_6 = arith.constant 0 : index
    %c0_7 = arith.constant 0 : index
    %c0_8 = arith.constant 0 : index
    %5 = vector.load %arg4[%c0_6, %c0_7, %c0_8] : memref<1x1x64xf32, #tpu.memory_space<vmem>>, vector<1x1x64xf32>
    %6 = vector.broadcast %5 : vector<1x1x64xf32> to vector<10x18x64xf32>
    %7 = arith.addf %4, %6 : vector<10x18x64xf32>
    %cst_9 = arith.constant 0.000000e+00 : f32
    %8 = vector.broadcast %cst_9 : f32 to vector<10x18x64xf32>
    %9 = arith.maximumf %7, %8 : vector<10x18x64xf32>
    %10 = tpu.iota {dimensions = array<i32: 0>} : vector<10x18x64xi32>
    %c1_i32 = arith.constant 1 : i32
    %11 = arith.subi %0, %c1_i32 : i32
    %12 = vector.broadcast %11 : i32 to vector<10x18x64xi32>
    %13 = arith.addi %10, %12 : vector<10x18x64xi32>
    %14 = tpu.iota {dimensions = array<i32: 1>} : vector<10x18x64xi32>
    %c0_i32 = arith.constant 0 : i32
    %15 = vector.broadcast %c0_i32 : i32 to vector<10x18x64xi32>
    %16 = arith.cmpi sge, %13, %15 : vector<10x18x64xi32>
    %c16_i32 = arith.constant 16 : i32
    %17 = vector.broadcast %c16_i32 : i32 to vector<10x18x64xi32>
    %18 = arith.cmpi slt, %13, %17 : vector<10x18x64xi32>
    %19 = arith.andi %16, %18 : vector<10x18x64xi1>
    %c1_i32_10 = arith.constant 1 : i32
    %20 = vector.broadcast %c1_i32_10 : i32 to vector<10x18x64xi32>
    %21 = arith.cmpi sge, %14, %20 : vector<10x18x64xi32>
    %22 = arith.andi %19, %21 : vector<10x18x64xi1>
    %c16_i32_11 = arith.constant 16 : i32
    %23 = vector.broadcast %c16_i32_11 : i32 to vector<10x18x64xi32>
    %24 = arith.cmpi sle, %14, %23 : vector<10x18x64xi32>
    %25 = arith.andi %22, %24 : vector<10x18x64xi1>
    %cst_12 = arith.constant 0.000000e+00 : f32
    %26 = vector.broadcast %cst_12 : f32 to vector<10x18x64xf32>
    %27 = arith.select %25, %9, %26 : vector<10x18x64xi1>, vector<10x18x64xf32>
    %28 = arith.truncf %27 : vector<10x18x64xf32> to vector<10x18x64xbf16>
    %c0_13 = arith.constant 0 : index
    %c0_14 = arith.constant 0 : index
    %c0_15 = arith.constant 0 : index
    %29 = vector.load %arg8[%c0_13, %c0_14, %c0_15] : memref<10x18x64xbf16, #tpu.memory_space<vmem>>, vector<10x18x64xbf16>
    tpu.vector_store %arg8[%c0_13, %c0_14, %c0_15], %28 {strides = array<i32>} : memref<10x18x64xbf16, #tpu.memory_space<vmem>>, vector<10x18x64xbf16>,
    %cst_16 = arith.constant 0.000000e+00 : f32
    %30 = vector.broadcast %cst_16 : f32 to vector<8x16x64xf32>
    %c0_17 = arith.constant 0 : index
    %c0_18 = arith.constant 0 : index
    %c0_19 = arith.constant 0 : index
    %31 = vector.load %arg8[%c0_17, %c0_18, %c0_19] : memref<10x18x64xbf16, #tpu.memory_space<vmem>>, vector<8x16x64xbf16>
    %c0_20 = arith.constant 0 : index
    %c0_21 = arith.constant 0 : index
    %c0_22 = arith.constant 0 : index
    %c0_23 = arith.constant 0 : index
    %32 = vector.load %arg5[%c0_20, %c0_21, %c0_22, %c0_23] : memref<3x3x64x64xbf16, #tpu.memory_space<vmem>>, vector<1x1x64x64xbf16>
    %33 = vector.shape_cast %32 : vector<1x1x64x64xbf16> to vector<64x64xbf16>
    %cst_24 = arith.constant dense<0.000000e+00> : vector<8x16x64xf32>
    %34 = tpu.matmul %31, %33, %cst_24 {dimension_numbers = #tpu.dot_dimension_numbers<[2], [0], [0, 1], [1], [0, 0, 0, 1, 1, 1], [], []>} : vector<8x16x64xbf16>, vector<64x64xbf16>, vector<8x16x64xf32> -> vector<8x16x64xf32>
    %35 = arith.addf %30, %34 : vector<8x16x64xf32>
    %c0_25 = arith.constant 0 : index
    %c1 = arith.constant 1 : index
    %c0_26 = arith.constant 0 : index
    %36 = vector.load %arg8[%c0_25, %c1, %c0_26] : memref<10x18x64xbf16, #tpu.memory_space<vmem>>, vector<8x16x64xbf16>
    %c0_27 = arith.constant 0 : index
    %c1_28 = arith.constant 1 : index
    %c0_29 = arith.constant 0 : index
    %c0_30 = arith.constant 0 : index
    %37 = vector.load %arg5[%c0_27, %c1_28, %c0_29, %c0_30] : memref<3x3x64x64xbf16, #tpu.memory_space<vmem>>, vector<1x1x64x64xbf16>
    %38 = vector.shape_cast %37 : vector<1x1x64x64xbf16> to vector<64x64xbf16>
    %cst_31 = arith.constant dense<0.000000e+00> : vector<8x16x64xf32>
    %39 = tpu.matmul %36, %38, %cst_31 {dimension_numbers = #tpu.dot_dimension_numbers<[2], [0], [0, 1], [1], [0, 0, 0, 1, 1, 1], [], []>} : vector<8x16x64xbf16>, vector<64x64xbf16>, vector<8x16x64xf32> -> vector<8x16x64xf32>
    %40 = arith.addf %35, %39 : vector<8x16x64xf32>
    %c0_32 = arith.constant 0 : index
    %c2 = arith.constant 2 : index
    %c0_33 = arith.constant 0 : index
    %41 = vector.load %arg8[%c0_32, %c2, %c0_33] : memref<10x18x64xbf16, #tpu.memory_space<vmem>>, vector<8x16x64xbf16>
    %c0_34 = arith.constant 0 : index
    %c2_35 = arith.constant 2 : index
    %c0_36 = arith.constant 0 : index
    %c0_37 = arith.constant 0 : index
    %42 = vector.load %arg5[%c0_34, %c2_35, %c0_36, %c0_37] : memref<3x3x64x64xbf16, #tpu.memory_space<vmem>>, vector<1x1x64x64xbf16>
    %43 = vector.shape_cast %42 : vector<1x1x64x64xbf16> to vector<64x64xbf16>
    %cst_38 = arith.constant dense<0.000000e+00> : vector<8x16x64xf32>
    %44 = tpu.matmul %41, %43, %cst_38 {dimension_numbers = #tpu.dot_dimension_numbers<[2], [0], [0, 1], [1], [0, 0, 0, 1, 1, 1], [], []>} : vector<8x16x64xbf16>, vector<64x64xbf16>, vector<8x16x64xf32> -> vector<8x16x64xf32>
    %45 = arith.addf %40, %44 : vector<8x16x64xf32>
    %c1_39 = arith.constant 1 : index
    %c0_40 = arith.constant 0 : index
    %c0_41 = arith.constant 0 : index
    %46 = vector.load %arg8[%c1_39, %c0_40, %c0_41] : memref<10x18x64xbf16, #tpu.memory_space<vmem>>, vector<8x16x64xbf16>
    %c1_42 = arith.constant 1 : index
    %c0_43 = arith.constant 0 : index
    %c0_44 = arith.constant 0 : index
    %c0_45 = arith.constant 0 : index
    %47 = vector.load %arg5[%c1_42, %c0_43, %c0_44, %c0_45] : memref<3x3x64x64xbf16, #tpu.memory_space<vmem>>, vector<1x1x64x64xbf16>
    %48 = vector.shape_cast %47 : vector<1x1x64x64xbf16> to vector<64x64xbf16>
    %cst_46 = arith.constant dense<0.000000e+00> : vector<8x16x64xf32>
    %49 = tpu.matmul %46, %48, %cst_46 {dimension_numbers = #tpu.dot_dimension_numbers<[2], [0], [0, 1], [1], [0, 0, 0, 1, 1, 1], [], []>} : vector<8x16x64xbf16>, vector<64x64xbf16>, vector<8x16x64xf32> -> vector<8x16x64xf32>
    %50 = arith.addf %45, %49 : vector<8x16x64xf32>
    %c1_47 = arith.constant 1 : index
    %c1_48 = arith.constant 1 : index
    %c0_49 = arith.constant 0 : index
    %51 = vector.load %arg8[%c1_47, %c1_48, %c0_49] : memref<10x18x64xbf16, #tpu.memory_space<vmem>>, vector<8x16x64xbf16>
    %c1_50 = arith.constant 1 : index
    %c1_51 = arith.constant 1 : index
    %c0_52 = arith.constant 0 : index
    %c0_53 = arith.constant 0 : index
    %52 = vector.load %arg5[%c1_50, %c1_51, %c0_52, %c0_53] : memref<3x3x64x64xbf16, #tpu.memory_space<vmem>>, vector<1x1x64x64xbf16>
    %53 = vector.shape_cast %52 : vector<1x1x64x64xbf16> to vector<64x64xbf16>
    %cst_54 = arith.constant dense<0.000000e+00> : vector<8x16x64xf32>
    %54 = tpu.matmul %51, %53, %cst_54 {dimension_numbers = #tpu.dot_dimension_numbers<[2], [0], [0, 1], [1], [0, 0, 0, 1, 1, 1], [], []>} : vector<8x16x64xbf16>, vector<64x64xbf16>, vector<8x16x64xf32> -> vector<8x16x64xf32>
    %55 = arith.addf %50, %54 : vector<8x16x64xf32>
    %c1_55 = arith.constant 1 : index
    %c2_56 = arith.constant 2 : index
    %c0_57 = arith.constant 0 : index
    %56 = vector.load %arg8[%c1_55, %c2_56, %c0_57] : memref<10x18x64xbf16, #tpu.memory_space<vmem>>, vector<8x16x64xbf16>
    %c1_58 = arith.constant 1 : index
    %c2_59 = arith.constant 2 : index
    %c0_60 = arith.constant 0 : index
    %c0_61 = arith.constant 0 : index
    %57 = vector.load %arg5[%c1_58, %c2_59, %c0_60, %c0_61] : memref<3x3x64x64xbf16, #tpu.memory_space<vmem>>, vector<1x1x64x64xbf16>
    %58 = vector.shape_cast %57 : vector<1x1x64x64xbf16> to vector<64x64xbf16>
    %cst_62 = arith.constant dense<0.000000e+00> : vector<8x16x64xf32>
    %59 = tpu.matmul %56, %58, %cst_62 {dimension_numbers = #tpu.dot_dimension_numbers<[2], [0], [0, 1], [1], [0, 0, 0, 1, 1, 1], [], []>} : vector<8x16x64xbf16>, vector<64x64xbf16>, vector<8x16x64xf32> -> vector<8x16x64xf32>
    %60 = arith.addf %55, %59 : vector<8x16x64xf32>
    %c2_63 = arith.constant 2 : index
    %c0_64 = arith.constant 0 : index
    %c0_65 = arith.constant 0 : index
    %61 = vector.load %arg8[%c2_63, %c0_64, %c0_65] : memref<10x18x64xbf16, #tpu.memory_space<vmem>>, vector<8x16x64xbf16>
    %c2_66 = arith.constant 2 : index
    %c0_67 = arith.constant 0 : index
    %c0_68 = arith.constant 0 : index
    %c0_69 = arith.constant 0 : index
    %62 = vector.load %arg5[%c2_66, %c0_67, %c0_68, %c0_69] : memref<3x3x64x64xbf16, #tpu.memory_space<vmem>>, vector<1x1x64x64xbf16>
    %63 = vector.shape_cast %62 : vector<1x1x64x64xbf16> to vector<64x64xbf16>
    %cst_70 = arith.constant dense<0.000000e+00> : vector<8x16x64xf32>
    %64 = tpu.matmul %61, %63, %cst_70 {dimension_numbers = #tpu.dot_dimension_numbers<[2], [0], [0, 1], [1], [0, 0, 0, 1, 1, 1], [], []>} : vector<8x16x64xbf16>, vector<64x64xbf16>, vector<8x16x64xf32> -> vector<8x16x64xf32>
    %65 = arith.addf %60, %64 : vector<8x16x64xf32>
    %c2_71 = arith.constant 2 : index
    %c1_72 = arith.constant 1 : index
    %c0_73 = arith.constant 0 : index
    %66 = vector.load %arg8[%c2_71, %c1_72, %c0_73] : memref<10x18x64xbf16, #tpu.memory_space<vmem>>, vector<8x16x64xbf16>
    %c2_74 = arith.constant 2 : index
    %c1_75 = arith.constant 1 : index
    %c0_76 = arith.constant 0 : index
    %c0_77 = arith.constant 0 : index
    %67 = vector.load %arg5[%c2_74, %c1_75, %c0_76, %c0_77] : memref<3x3x64x64xbf16, #tpu.memory_space<vmem>>, vector<1x1x64x64xbf16>
    %68 = vector.shape_cast %67 : vector<1x1x64x64xbf16> to vector<64x64xbf16>
    %cst_78 = arith.constant dense<0.000000e+00> : vector<8x16x64xf32>
    %69 = tpu.matmul %66, %68, %cst_78 {dimension_numbers = #tpu.dot_dimension_numbers<[2], [0], [0, 1], [1], [0, 0, 0, 1, 1, 1], [], []>} : vector<8x16x64xbf16>, vector<64x64xbf16>, vector<8x16x64xf32> -> vector<8x16x64xf32>
    %70 = arith.addf %65, %69 : vector<8x16x64xf32>
    %c2_79 = arith.constant 2 : index
    %c2_80 = arith.constant 2 : index
    %c0_81 = arith.constant 0 : index
    %71 = vector.load %arg8[%c2_79, %c2_80, %c0_81] : memref<10x18x64xbf16, #tpu.memory_space<vmem>>, vector<8x16x64xbf16>
    %c2_82 = arith.constant 2 : index
    %c2_83 = arith.constant 2 : index
    %c0_84 = arith.constant 0 : index
    %c0_85 = arith.constant 0 : index
    %72 = vector.load %arg5[%c2_82, %c2_83, %c0_84, %c0_85] : memref<3x3x64x64xbf16, #tpu.memory_space<vmem>>, vector<1x1x64x64xbf16>
    %73 = vector.shape_cast %72 : vector<1x1x64x64xbf16> to vector<64x64xbf16>
    %cst_86 = arith.constant dense<0.000000e+00> : vector<8x16x64xf32>
    %74 = tpu.matmul %71, %73, %cst_86 {dimension_numbers = #tpu.dot_dimension_numbers<[2], [0], [0, 1], [1], [0, 0, 0, 1, 1, 1], [], []>} : vector<8x16x64xbf16>, vector<64x64xbf16>, vector<8x16x64xf32> -> vector<8x16x64xf32>
    %75 = arith.addf %70, %74 : vector<8x16x64xf32>
    %c0_87 = arith.constant 0 : index
    %c0_88 = arith.constant 0 : index
    %c0_89 = arith.constant 0 : index
    %76 = vector.load %arg6[%c0_87, %c0_88, %c0_89] : memref<1x1x64xf32, #tpu.memory_space<vmem>>, vector<1x1x64xf32>
    %77 = vector.broadcast %76 : vector<1x1x64xf32> to vector<8x16x64xf32>
    %78 = arith.addf %75, %77 : vector<8x16x64xf32>
    %cst_90 = arith.constant 0.000000e+00 : f32
    %79 = vector.broadcast %cst_90 : f32 to vector<8x16x64xf32>
    %80 = arith.maximumf %78, %79 : vector<8x16x64xf32>
    %c0_91 = arith.constant 0 : index
    %c0_92 = arith.constant 0 : index
    %c0_93 = arith.constant 0 : index
    %c0_94 = arith.constant 0 : index
    %81 = vector.load %arg7[%c0_91, %c0_92, %c0_93, %c0_94] : memref<1x8x16x64xf32, #tpu.memory_space<vmem>>, vector<1x8x16x64xf32>
    %82 = vector.shape_cast %81 : vector<1x8x16x64xf32> to vector<8x16x64xf32>
    %83 = vector.shape_cast %80 : vector<8x16x64xf32> to vector<1x8x16x64xf32>
    tpu.vector_store %arg7[%c0_91, %c0_92, %c0_93, %c0_94], %83 {strides = array<i32>} : memref<1x8x16x64xf32, #tpu.memory_space<vmem>>, vector<1x8x16x64xf32>,
    return
  }
  func.func @transform_0(%arg0: i32, %arg1: i32) -> (i32, i32, i32, i32, i32) {
    %c0_i32 = arith.constant 0 : i32
    %c0_i32_0 = arith.constant 0 : i32
    %c0_i32_1 = arith.constant 0 : i32
    %c0_i32_2 = arith.constant 0 : i32
    return %arg0, %arg1, %c0_i32, %c0_i32_0, %c0_i32_1 : i32, i32, i32, i32, i32
  }
  func.func @transform_1(%arg0: i32, %arg1: i32) -> (i32, i32) {
    %c0_i32 = arith.constant 0 : i32
    %c0_i32_0 = arith.constant 0 : i32
    %c0_i32_1 = arith.constant 0 : i32
    return %c0_i32, %c0_i32_0 : i32, i32
  }
  func.func @transform_2(%arg0: i32, %arg1: i32) -> (i32, i32, i32) {
    %c0_i32 = arith.constant 0 : i32
    %c0_i32_0 = arith.constant 0 : i32
    %c0_i32_1 = arith.constant 0 : i32
    %c0_i32_2 = arith.constant 0 : i32
    return %c0_i32, %c0_i32_0, %c0_i32_1 : i32, i32, i32
  }
  func.func @transform_3(%arg0: i32, %arg1: i32) -> (i32, i32, i32, i32) {
    %c0_i32 = arith.constant 0 : i32
    %c0_i32_0 = arith.constant 0 : i32
    %c0_i32_1 = arith.constant 0 : i32
    %c0_i32_2 = arith.constant 0 : i32
    %c0_i32_3 = arith.constant 0 : i32
    return %c0_i32, %c0_i32_0, %c0_i32_1, %c0_i32_2 : i32, i32, i32, i32
  }
  func.func @transform_4(%arg0: i32, %arg1: i32) -> (i32, i32, i32) {
    %c0_i32 = arith.constant 0 : i32
    %c0_i32_0 = arith.constant 0 : i32
    %c0_i32_1 = arith.constant 0 : i32
    %c0_i32_2 = arith.constant 0 : i32
    return %c0_i32, %c0_i32_0, %c0_i32_1 : i32, i32, i32
  }
  func.func @transform_5(%arg0: i32, %arg1: i32) -> (i32, i32, i32, i32) {
    %c0_i32 = arith.constant 0 : i32
    %c0_i32_0 = arith.constant 0 : i32
    %c0_i32_1 = arith.constant 0 : i32
    return %arg0, %arg1, %c0_i32, %c0_i32_0 : i32, i32, i32, i32
  }
}

</mosaic_0001>

<llo_original>
// kernel: block1_forward.1
$region0: #{block1_forward.1}
  #allocation0 [shape = 'u32[]', space=smem, size = 0x4, offset = 0x4, fixed_abs, tag = 'smem constant byte address 0x4 - core index']
  #allocation1 [shape = 'u32[72,128]{1,0:T(1,128)}', space=vmem, size = 0x9000, scoped, tag = 'internal scratch']
  #allocation2 [shape = 'bf16[10,18,64]{2,1,0:T(8,128)(2,1)}', space=vmem, size = 0xf000, scoped, tag = 'scratch operand']
  %s0 = inlined_call_operand.vmem [shape: bf16[2,2,10,18,32], index: 0, kind: input, shape index: {}]
  %s1 = inlined_call_operand.vmem [shape: bf16[32,64], index: 1, kind: input, shape index: {}]
  %s2 = inlined_call_operand.vmem [shape: f32[1,1,64], index: 2, kind: input, shape index: {}]
  %s3 = inlined_call_operand.vmem [shape: bf16[3,3,64,64], index: 3, kind: input, shape index: {}]
  %s4 = inlined_call_operand.vmem [shape: f32[1,1,64], index: 4, kind: input, shape index: {}]
  %s5 = inlined_call_operand.hbm [shape: f32[2,16,16,64], index: 5, kind: output, shape index: {}]
  %s6 = sld [smem:[#allocation0]]
  $region53: #{block1_forward.1} parent=0
    _
  %s8 = ssub.s32 1, %s6
  %s9 = scalar_select 0, %s8, %s6
  $region1: #{block1_forward.1} parent=0
    #allocation3 [shape = 'u8[131072]{0}', space=vmem, size = 0x20000, scoped, tag = 'output window, operand 0']
    #allocation4 [shape = 's32[2]{0}', space=sflag, size = 0x8, scoped, tag = 'scoped memory for block1_forward.1']
    %10 = vsyncpa [#allocation4], 0
    %s11 = scalar_lea.sflag [#allocation4], 1
    %12 = vsyncpa %s11, 0
    loop: start=0, step=1, limit=6
    $region2: #{block1_forward.1} parent=1 // loop_pre_header
      _
    $region3: #{block1_forward.1} parent=1 // loop_header
      %s14 = sphi 0, %s18
      %p15 = scmp.ge.s32.totalorder %s14, 6
      %s21 = sphi 0, %s33
      %s22 = sphi 0, %s29
      %s23 = sphi 0, %s21
      %s24 = sphi 0, %s22
      %s25 = sphi 0, %s23
      %s26 = sphi 0, %s24
      %s38 = sphi 0, %s40
      %s41 = sphi 0, %s38
      %s42 = sphi 0, %s41
      %s58 = sphi 0, %s42
      %s62 = sphi 0, %s62
      %s64 = sphi 0, %s62
      %s65 = sphi 0, %s64
      %s79 = sphi 0, %s65
      %s83 = sphi 0, %s83
      %s85 = sphi 0, %s83
      %s86 = sphi 0, %s85
      %s100 = sphi 0, %s86
      %s104 = sphi 0, %s104
      %s106 = sphi 0, %s104
      %s107 = sphi 0, %s106
      %s121 = sphi 0, %s107
      %s125 = sphi 0, %s125
      %s127 = sphi 0, %s125
      %s128 = sphi 0, %s127
      %s142 = sphi 0, %s128
      %s150 = sphi 0, %s152
      %s153 = sphi 0, %s150
      %s154 = sphi 0, %s153
      %s170 = sphi 0, %s154
    $region4: #{block1_forward.1} parent=1 // loop_header_branch
      %17 = sbr.rel (%p15) target = $region8
    $region5: #{block1_forward.1} parent=1 // loop_body
      %s19 = ssub.s32 %s14, 1
      %s20 = ssub.s32 %s14, 2
      %s27 = sadd.s32 1, %s22
      %p28 = scmp.ge.s32.totalorder %s27, 2
      %s29 = scalar_select %p28, 0, %s27
      %s30 = sadd.s32 1, %s21
      %s31 = scalar_select %p28, %s30, %s21
      %p32 = scmp.ge.s32.totalorder %s31, 2
      %s33 = scalar_select %p32, 0, %s31
      %s34 = ssub.s32 %s21, %s33
      %s35 = ssub.s32 %s22, %s29
      %s36 = sor.u32 %s34, %s35
      %p37 = scmp.eq.s32.totalorder %s36, 0
      %s39 = sadd.s32 %s38, 1
      %s40 = scalar_select %p37, %s38, %s39
      %p43 = pneg %p37
      %p44 = scmp.eq.s32.totalorder %s14, 3
      %p45 = por %p43, %p44
      %p46 = scmp.ne.s32.totalorder %s38, %s41
      %p47 = scmp.eq.s32.totalorder %s14, 0
      %p48 = por %p46, %p47
      %p49 = scmp.ne.s32.totalorder %s38, %s41
      %p50 = scmp.eq.s32.totalorder %s19, 3
      %p51 = por %p49, %p50
      %p52 = scmp.ne.s32.totalorder %s41, %s42
      %p53 = scmp.eq.s32.totalorder %s19, 0
      %p54 = por %p52, %p53
      %p55 = scmp.ne.s32.totalorder %s41, %s42
      %p56 = scmp.eq.s32.totalorder %s20, 3
      %p57 = por %p55, %p56
      %p59 = scmp.ne.s32.totalorder %s42, %s58
      %p60 = scmp.eq.s32.totalorder %s20, 0
      %p61 = por %p59, %p60
      %s63 = sadd.s32 %s62, 1
      %p66 = scmp.eq.s32.totalorder %s14, 3
      %p67 = scmp.ne.s32.totalorder %s62, %s64
      %p68 = scmp.eq.s32.totalorder %s14, 0
      %p69 = por %p67, %p68
      %p70 = scmp.ne.s32.totalorder %s62, %s64
      %p71 = scmp.eq.s32.totalorder %s19, 3
      %p72 = por %p70, %p71
      %p73 = scmp.ne.s32.totalorder %s64, %s65
      %p74 = scmp.eq.s32.totalorder %s19, 0
      %p75 = por %p73, %p74
      %p76 = scmp.ne.s32.totalorder %s64, %s65
      %p77 = scmp.eq.s32.totalorder %s20, 3
      %p78 = por %p76, %p77
      %p80 = scmp.ne.s32.totalorder %s65, %s79
      %p81 = scmp.eq.s32.totalorder %s20, 0
      %p82 = por %p80, %p81
      %s84 = sadd.s32 %s83, 1
      %p87 = scmp.eq.s32.totalorder %s14, 3
      %p88 = scmp.ne.s32.totalorder %s83, %s85
      %p89 = scmp.eq.s32.totalorder %s14, 0
      %p90 = por %p88, %p89
      %p91 = scmp.ne.s32.totalorder %s83, %s85
      %p92 = scmp.eq.s32.totalorder %s19, 3
      %p93 = por %p91, %p92
      %p94 = scmp.ne.s32.totalorder %s85, %s86
      %p95 = scmp.eq.s32.totalorder %s19, 0
      %p96 = por %p94, %p95
      %p97 = scmp.ne.s32.totalorder %s85, %s86
      %p98 = scmp.eq.s32.totalorder %s20, 3
      %p99 = por %p97, %p98
      %p101 = scmp.ne.s32.totalorder %s86, %s100
      %p102 = scmp.eq.s32.totalorder %s20, 0
      %p103 = por %p101, %p102
      %s105 = sadd.s32 %s104, 1
      %p108 = scmp.eq.s32.totalorder %s14, 3
      %p109 = scmp.ne.s32.totalorder %s104, %s106
      %p110 = scmp.eq.s32.totalorder %s14, 0
      %p111 = por %p109, %p110
      %p112 = scmp.ne.s32.totalorder %s104, %s106
      %p113 = scmp.eq.s32.totalorder %s19, 3
      %p114 = por %p112, %p113
      %p115 = scmp.ne.s32.totalorder %s106, %s107
      %p116 = scmp.eq.s32.totalorder %s19, 0
      %p117 = por %p115, %p116
      %p118 = scmp.ne.s32.totalorder %s106, %s107
      %p119 = scmp.eq.s32.totalorder %s20, 3
      %p120 = por %p118, %p119
      %p122 = scmp.ne.s32.totalorder %s107, %s121
      %p123 = scmp.eq.s32.totalorder %s20, 0
      %p124 = por %p122, %p123
      %s126 = sadd.s32 %s125, 1
      %p129 = scmp.eq.s32.totalorder %s14, 3
      %p130 = scmp.ne.s32.totalorder %s125, %s127
      %p131 = scmp.eq.s32.totalorder %s14, 0
      %p132 = por %p130, %p131
      %p133 = scmp.ne.s32.totalorder %s125, %s127
      %p134 = scmp.eq.s32.totalorder %s19, 3
      %p135 = por %p133, %p134
      %p136 = scmp.ne.s32.totalorder %s127, %s128
      %p137 = scmp.eq.s32.totalorder %s19, 0
      %p138 = por %p136, %p137
      %p139 = scmp.ne.s32.totalorder %s127, %s128
      %p140 = scmp.eq.s32.totalorder %s20, 3
      %p141 = por %p139, %p140
      %p143 = scmp.ne.s32.totalorder %s128, %s142
      %p144 = scmp.eq.s32.totalorder %s20, 0
      %p145 = por %p143, %p144
      %s146 = ssub.s32 %s21, %s33
      %s147 = ssub.s32 %s22, %s29
      %s148 = sor.u32 %s146, %s147
      %p149 = scmp.eq.s32.totalorder %s148, 0
      %s151 = sadd.s32 %s150, 1
      %s152 = scalar_select %p149, %s150, %s151
      %p155 = pneg %p149
      %p156 = scmp.eq.s32.totalorder %s14, 3
      %p157 = por %p155, %p156
      %p158 = scmp.ne.s32.totalorder %s150, %s153
      %p159 = scmp.eq.s32.totalorder %s14, 0
      %p160 = por %p158, %p159
      %p161 = scmp.ne.s32.totalorder %s150, %s153
      %p162 = scmp.eq.s32.totalorder %s19, 3
      %p163 = por %p161, %p162
      %p164 = scmp.ne.s32.totalorder %s153, %s154
      %p165 = scmp.eq.s32.totalorder %s19, 0
      %p166 = por %p164, %p165
      %p167 = scmp.ne.s32.totalorder %s153, %s154
      %p168 = scmp.eq.s32.totalorder %s20, 3
      %p169 = por %p167, %p168
      %p171 = scmp.ne.s32.totalorder %s154, %s170
      %p172 = scmp.eq.s32.totalorder %s20, 0
      %p173 = por %p171, %p172
      %p174 = scmp.le.s32.totalorder 1, %s14
      %p175 = scmp.lt.s32.totalorder %s14, 5
      %p176 = pnand %p174, %p175
      %p177 = pneg %p176
      // Predicated region
      $region9: #{block1_forward.1} parent=5 // pred_check
        _
      $region10: #{block1_forward.1} parent=5 // pred_check_branch
        %179 = sbr.rel (%p176) target = $region12
      $region11: #{block1_forward.1} parent=5 // pred_region
        %s180 = ssub.s32 %s14, 1
        // Predicated region
        $region13: #{block1_forward.1} parent=11 // pred_check
          %p181 = pneg %p75
        $region14: #{block1_forward.1} parent=11 // pred_check_branch
          %183 = sbr.rel (%p181) target = $region16
        $region15: #{block1_forward.1} parent=11 // pred_region
          _
        $region16: #{block1_forward.1} parent=11 // pred_fallthru
          _
        // Predicated region
        $region17: #{block1_forward.1} parent=11 // pred_check
          %p184 = pneg %p96
        $region18: #{block1_forward.1} parent=11 // pred_check_branch
          %186 = sbr.rel (%p184) target = $region20
        $region19: #{block1_forward.1} parent=11 // pred_region
          _
        $region20: #{block1_forward.1} parent=11 // pred_fallthru
          _
        // Predicated region
        $region21: #{block1_forward.1} parent=11 // pred_check
          %p187 = pneg %p117
        $region22: #{block1_forward.1} parent=11 // pred_check_branch
          %189 = sbr.rel (%p187) target = $region24
        $region23: #{block1_forward.1} parent=11 // pred_region
          _
        $region24: #{block1_forward.1} parent=11 // pred_fallthru
          _
        // Predicated region
        $region25: #{block1_forward.1} parent=11 // pred_check
          %p190 = pneg %p138
        $region26: #{block1_forward.1} parent=11 // pred_check_branch
          %192 = sbr.rel (%p190) target = $region28
        $region27: #{block1_forward.1} parent=11 // pred_region
          _
        $region28: #{block1_forward.1} parent=11 // pred_fallthru
          _
      $region12: #{block1_forward.1} parent=5 // pred_fallthru
        _
      %p193 = scmp.lt.s32.totalorder %s14, 4
      // Predicated region
      $region29: #{block1_forward.1} parent=5 // pred_check
        %p194 = pneg %p193
      $region30: #{block1_forward.1} parent=5 // pred_check_branch
        %196 = sbr.rel (%p194) target = $region32
      $region31: #{block1_forward.1} parent=5 // pred_region
        // Predicated region
        $region33: #{block1_forward.1} parent=31 // pred_check
          %p197 = pneg %p48
        $region34: #{block1_forward.1} parent=31 // pred_check_branch
          %199 = sbr.rel (%p197) target = $region36
        $region35: #{block1_forward.1} parent=31 // pred_region
          %p200 = scmp.lt.s32.totalorder %s21, 1
          %s201 = scalar_select %p200, %s21, 1
          %p202 = scmp.lt.s32.totalorder %s22, 1
          %s203 = scalar_select %p202, %s22, 1
          %s204 = smul.addr %s203, 30
          %s205 = smul.addr %s201, 60
          %s206 = sadd.s32 %s204, %s205
          %s207 = smul.addr %s206, 4
          %s208 = scalar_lea.vmem %s0, %s207
        $region36: #{block1_forward.1} parent=31 // pred_fallthru
          _
      $region32: #{block1_forward.1} parent=5 // pred_fallthru
        _
      %p209 = scmp.le.s32.totalorder 1, %s14
      %p210 = scmp.lt.s32.totalorder %s14, 5
      %p211 = pnand %p209, %p210
      %p212 = pneg %p211
      // Predicated region
      $region37: #{block1_forward.1} parent=5 // pred_check
        _
      $region38: #{block1_forward.1} parent=5 // pred_check_branch
        %214 = sbr.rel (%p211) target = $region40
      $region39: #{block1_forward.1} parent=5 // pred_region
        %s215 = ssub.s32 %s14, 1
        %p216 = scmp.lt.s32.totalorder %s23, 1
        %s217 = scalar_select %p216, %s23, 1
        %p218 = scmp.lt.s32.totalorder %s24, 1
        %s219 = scalar_select %p218, %s24, 1
        %s220 = smul.addr %s219, 30
        %s221 = smul.addr %s217, 60
        %s222 = sadd.s32 %s220, %s221
        %s223 = smul.addr %s222, 4
        %s224 = scalar_lea.vmem %s0, %s223
        %p225 = pneg %p54
        %p226 = pneg %p51
        %p227 = pneg %p75
        %p228 = pneg %p72
        %p229 = pneg %p96
        %p230 = pneg %p93
        %p231 = pneg %p117
        %p232 = pneg %p114
        %p233 = pneg %p138
        %p234 = pneg %p135
        %p235 = pneg %p166
        %p236 = pneg %p163
        %s237 = sand.u32 %s153, 1
        %s238 = scalar_lea.sflag [#allocation4], %s237
        %s239 = sand.u32 %s153, 1
        %s240 = smul.addr %s239, 128
        %s241 = scalar_lea.vmem [#allocation3], %s240
        %p242 = scmp.lt.s32.totalorder %s23, 1
        %s243 = scalar_select %p242, %s23, 1
        %p244 = scmp.lt.s32.totalorder %s24, 1
        %s245 = scalar_select %p244, %s24, 1
        %s246 = smul.addr %s245, 30
        %s247 = smul.addr %s243, 60
        %s248 = sadd.s32 %s246, %s247
        %s249 = smul.addr %s248, 4
        %s250 = scalar_lea.vmem %s0, %s249
        %s251 = smul.u32 8, %s24
        %s253 = smul.u32 %s24, 8
        %v254 = vld [vmem:[%s250] sm:$0xf]
        %v255 = vld [vmem:[%s250 + $0x4] sm:$0xf]
        %v256 = vld [vmem:[%s250 + $0x8] sm:$0x1]
        %v257 = vld [vmem:[%s250 + $0xc] sm:$0xf]
        %v258 = vld [vmem:[%s250 + $0x10] sm:$0xf]
        %v259 = vld [vmem:[%s250 + $0x14] sm:$0x1]
        %v260 = vld [vmem:[%s250 + $0x18] sm:$0xf]
        %v261 = vld [vmem:[%s250 + $0x1c] sm:$0xf]
        %v262 = vld [vmem:[%s250 + $0x20] sm:$0x1]
        %v263 = vld [vmem:[%s250 + $0x24] sm:$0xf]
        %v264 = vld [vmem:[%s250 + $0x28] sm:$0xf]
        %v265 = vld [vmem:[%s250 + $0x2c] sm:$0x1]
        %v266 = vld [vmem:[%s250 + $0x30] sm:$0xf]
        %v267 = vld [vmem:[%s250 + $0x34] sm:$0xf]
        %v268 = vld [vmem:[%s250 + $0x38] sm:$0x1]
        %v269 = vld [vmem:[%s250 + $0x3c] sm:$0xf]
        %v270 = vld [vmem:[%s250 + $0x40] sm:$0xf]
        %v271 = vld [vmem:[%s250 + $0x44] sm:$0x1]
        %v272 = vld [vmem:[%s250 + $0x48] sm:$0xf]
        %v273 = vld [vmem:[%s250 + $0x4c] sm:$0xf]
        %v274 = vld [vmem:[%s250 + $0x50] sm:$0x1]
        %v275 = vld [vmem:[%s250 + $0x54] sm:$0xf]
        %v276 = vld [vmem:[%s250 + $0x58] sm:$0xf]
        %v277 = vld [vmem:[%s250 + $0x5c] sm:$0x1]
        %v278 = vld [vmem:[%s250 + $0x60] sm:$0xf]
        %v279 = vld [vmem:[%s250 + $0x64] sm:$0xf]
        %v280 = vld [vmem:[%s250 + $0x68] sm:$0x1]
        %v281 = vld [vmem:[%s250 + $0x6c] sm:$0xf]
        %v282 = vld [vmem:[%s250 + $0x70] sm:$0xf]
        %v283 = vld [vmem:[%s250 + $0x74] sm:$0x1]
        %v284 = vld [vmem:[%s1] sm:$0xf]
        %v285 = vld [vmem:[%s1 + $0x4] sm:$0xf]
        %v286 = vld [vmem:[%s1 + $0x8] sm:$0xf]
        %v287 = vld [vmem:[%s1 + $0xc] sm:$0xf]
        %v288 = vld [vmem:[%s2] sm:$0x1]
        %v290 = vperm.slane %v288, 0
        %v321 = vrot.slane %v254, 3
        %v322 = vrot.slane %v255, 3
        %v323 = vrot.slane %v256, 3
        %v324 = vrot.slane %v257, 3
        %v325 = vrot.slane %v258, 3
        %v326 = vrot.slane %v259, 3
        %v327 = vrot.slane %v260, 3
        %v328 = vrot.slane %v261, 3
        %v329 = vrot.slane %v262, 3
        %v330 = vrot.slane %v263, 3
        %v331 = vrot.slane %v264, 3
        %v332 = vrot.slane %v265, 3
        %v333 = vrot.slane %v266, 3
        %v334 = vrot.slane %v267, 3
        %v335 = vrot.slane %v268, 3
        %v336 = vrot.slane %v269, 3
        %v337 = vrot.slane %v270, 3
        %v338 = vrot.slane %v271, 3
        %v339 = vrot.slane %v272, 3
        %v340 = vrot.slane %v273, 3
        %v341 = vrot.slane %v274, 3
        %v342 = vrot.slane %v275, 3
        %v343 = vrot.slane %v276, 3
        %v344 = vrot.slane %v277, 3
        %v345 = vrot.slane %v278, 3
        %v346 = vrot.slane %v279, 3
        %v347 = vrot.slane %v280, 3
        %v348 = vrot.slane %v281, 3
        %v349 = vrot.slane %v282, 3
        %v350 = vrot.slane %v283, 3
        %vm351 = vcmask 1040384
        %v354 = vsel %vm351, %v254, %v321
        %vm355 = vcmask 1041409
        %v356 = vsel %vm355, %v254, %v321
        %v358 = vrot.slane %v356, 1
        %vm359 = vcmask 1042434
        %v360 = vsel %vm359, %v254, %v321
        %v362 = vrot.slane %v360, 2
        %vm363 = vcmask 1043459
        %v364 = vsel %vm363, %v254, %v321
        %v366 = vrot.slane %v364, 3
        %v369 = vsel %vm351, %v255, %v322
        %v370 = vsel %vm355, %v255, %v322
        %v372 = vrot.slane %v370, 1
        %v373 = vsel %vm359, %v255, %v322
        %v375 = vrot.slane %v373, 2
        %v376 = vsel %vm363, %v255, %v322
        %v378 = vrot.slane %v376, 3
        %v381 = vsel %vm351, %v256, %v323
        %v384 = vsel %vm351, %v257, %v324
        %v385 = vsel %vm355, %v257, %v324
        %v387 = vrot.slane %v385, 1
        %v388 = vsel %vm359, %v257, %v324
        %v390 = vrot.slane %v388, 2
        %v391 = vsel %vm363, %v257, %v324
        %v393 = vrot.slane %v391, 3
        %v396 = vsel %vm351, %v258, %v325
        %v397 = vsel %vm355, %v258, %v325
        %v399 = vrot.slane %v397, 1
        %v400 = vsel %vm359, %v258, %v325
        %v402 = vrot.slane %v400, 2
        %v403 = vsel %vm363, %v258, %v325
        %v405 = vrot.slane %v403, 3
        %v408 = vsel %vm351, %v259, %v326
        %v411 = vsel %vm351, %v260, %v327
        %v412 = vsel %vm355, %v260, %v327
        %v414 = vrot.slane %v412, 1
        %v415 = vsel %vm359, %v260, %v327
        %v417 = vrot.slane %v415, 2
        %v418 = vsel %vm363, %v260, %v327
        %v420 = vrot.slane %v418, 3
        %v423 = vsel %vm351, %v261, %v328
        %v424 = vsel %vm355, %v261, %v328
        %v426 = vrot.slane %v424, 1
        %v427 = vsel %vm359, %v261, %v328
        %v429 = vrot.slane %v427, 2
        %v430 = vsel %vm363, %v261, %v328
        %v432 = vrot.slane %v430, 3
        %v435 = vsel %vm351, %v262, %v329
        %v438 = vsel %vm351, %v263, %v330
        %v439 = vsel %vm355, %v263, %v330
        %v441 = vrot.slane %v439, 1
        %v442 = vsel %vm359, %v263, %v330
        %v444 = vrot.slane %v442, 2
        %v445 = vsel %vm363, %v263, %v330
        %v447 = vrot.slane %v445, 3
        %v450 = vsel %vm351, %v264, %v331
        %v451 = vsel %vm355, %v264, %v331
        %v453 = vrot.slane %v451, 1
        %v454 = vsel %vm359, %v264, %v331
        %v456 = vrot.slane %v454, 2
        %v457 = vsel %vm363, %v264, %v331
        %v459 = vrot.slane %v457, 3
        %v462 = vsel %vm351, %v265, %v332
        %v465 = vsel %vm351, %v266, %v333
        %v466 = vsel %vm355, %v266, %v333
        %v468 = vrot.slane %v466, 1
        %v469 = vsel %vm359, %v266, %v333
        %v471 = vrot.slane %v469, 2
        %v472 = vsel %vm363, %v266, %v333
        %v474 = vrot.slane %v472, 3
        %v477 = vsel %vm351, %v267, %v334
        %v478 = vsel %vm355, %v267, %v334
        %v480 = vrot.slane %v478, 1
        %v481 = vsel %vm359, %v267, %v334
        %v483 = vrot.slane %v481, 2
        %v484 = vsel %vm363, %v267, %v334
        %v486 = vrot.slane %v484, 3
        %v489 = vsel %vm351, %v268, %v335
        %v492 = vsel %vm351, %v269, %v336
        %v493 = vsel %vm355, %v269, %v336
        %v495 = vrot.slane %v493, 1
        %v496 = vsel %vm359, %v269, %v336
        %v498 = vrot.slane %v496, 2
        %v499 = vsel %vm363, %v269, %v336
        %v501 = vrot.slane %v499, 3
        %v504 = vsel %vm351, %v270, %v337
        %v505 = vsel %vm355, %v270, %v337
        %v507 = vrot.slane %v505, 1
        %v508 = vsel %vm359, %v270, %v337
        %v510 = vrot.slane %v508, 2
        %v511 = vsel %vm363, %v270, %v337
        %v513 = vrot.slane %v511, 3
        %v516 = vsel %vm351, %v271, %v338
        %v519 = vsel %vm351, %v272, %v339
        %v520 = vsel %vm355, %v272, %v339
        %v522 = vrot.slane %v520, 1
        %v523 = vsel %vm359, %v272, %v339
        %v525 = vrot.slane %v523, 2
        %v526 = vsel %vm363, %v272, %v339
        %v528 = vrot.slane %v526, 3
        %v531 = vsel %vm351, %v273, %v340
        %v532 = vsel %vm355, %v273, %v340
        %v534 = vrot.slane %v532, 1
        %v535 = vsel %vm359, %v273, %v340
        %v537 = vrot.slane %v535, 2
        %v538 = vsel %vm363, %v273, %v340
        %v540 = vrot.slane %v538, 3
        %v543 = vsel %vm351, %v274, %v341
        %v546 = vsel %vm351, %v275, %v342
        %v547 = vsel %vm355, %v275, %v342
        %v549 = vrot.slane %v547, 1
        %v550 = vsel %vm359, %v275, %v342
        %v552 = vrot.slane %v550, 2
        %v553 = vsel %vm363, %v275, %v342
        %v555 = vrot.slane %v553, 3
        %v558 = vsel %vm351, %v276, %v343
        %v559 = vsel %vm355, %v276, %v343
        %v561 = vrot.slane %v559, 1
        %v562 = vsel %vm359, %v276, %v343
        %v564 = vrot.slane %v562, 2
        %v565 = vsel %vm363, %v276, %v343
        %v567 = vrot.slane %v565, 3
        %v570 = vsel %vm351, %v277, %v344
        %v573 = vsel %vm351, %v278, %v345
        %v574 = vsel %vm355, %v278, %v345
        %v576 = vrot.slane %v574, 1
        %v577 = vsel %vm359, %v278, %v345
        %v579 = vrot.slane %v577, 2
        %v580 = vsel %vm363, %v278, %v345
        %v582 = vrot.slane %v580, 3
        %v585 = vsel %vm351, %v279, %v346
        %v586 = vsel %vm355, %v279, %v346
        %v588 = vrot.slane %v586, 1
        %v589 = vsel %vm359, %v279, %v346
        %v591 = vrot.slane %v589, 2
        %v592 = vsel %vm363, %v279, %v346
        %v594 = vrot.slane %v592, 3
        %v597 = vsel %vm351, %v280, %v347
        %v600 = vsel %vm351, %v281, %v348
        %v601 = vsel %vm355, %v281, %v348
        %v603 = vrot.slane %v601, 1
        %v604 = vsel %vm359, %v281, %v348
        %v606 = vrot.slane %v604, 2
        %v607 = vsel %vm363, %v281, %v348
        %v609 = vrot.slane %v607, 3
        %v612 = vsel %vm351, %v282, %v349
        %v613 = vsel %vm355, %v282, %v349
        %v615 = vrot.slane %v613, 1
        %v616 = vsel %vm359, %v282, %v349
        %v618 = vrot.slane %v616, 2
        %v619 = vsel %vm363, %v282, %v349
        %v621 = vrot.slane %v619, 3
        %v624 = vsel %vm351, %v283, %v350
        %v625 = vrot.slane %v290, 2
        %v626 = vrot.slane %v290, 4
        %v627 = vrot.slane %v290, 6
        %628 = vst [vmem:[#allocation1] ss:$9 sm:$0xff] %v354
        %s630 = scalar_lea.vmem [#allocation1], 1
        %631 = vst [vmem:[%s630] ss:$9 sm:$0xff] %v358
        %s633 = scalar_lea.vmem [#allocation1], 2
        %634 = vst [vmem:[%s633] ss:$9 sm:$0xff] %v362
        %s636 = scalar_lea.vmem [#allocation1], 3
        %637 = vst [vmem:[%s636] ss:$9 sm:$0xff] %v366
        %s638 = scalar_lea.vmem [#allocation1], 4
        %639 = vst [vmem:[%s638] ss:$9 sm:$0xff] %v369
        %s641 = scalar_lea.vmem [#allocation1], 5
        %642 = vst [vmem:[%s641] ss:$9 sm:$0xff] %v372
        %s644 = scalar_lea.vmem [#allocation1], 6
        %645 = vst [vmem:[%s644] ss:$9 sm:$0xff] %v375
        %s647 = scalar_lea.vmem [#allocation1], 7
        %648 = vst [vmem:[%s647] ss:$9 sm:$0xff] %v378
        %v649 = vld [vmem:[#allocation1] sm:$0xff]
        %650 = vst [vmem:[#allocation1] ss:$9 sm:$0xff] %v381
        %651 = vst [vmem:[%s630] ss:$9 sm:$0xff] %v384
        %653 = vst [vmem:[%s633] ss:$9 sm:$0xff] %v387
        %655 = vst [vmem:[%s636] ss:$9 sm:$0xff] %v390
        %657 = vst [vmem:[%s638] ss:$9 sm:$0xff] %v393
        %658 = vst [vmem:[%s641] ss:$9 sm:$0xff] %v396
        %660 = vst [vmem:[%s644] ss:$9 sm:$0xff] %v399
        %662 = vst [vmem:[%s647] ss:$9 sm:$0xff] %v402
        %v663 = vld [vmem:[#allocation1] sm:$0xff]
        %665 = vst [vmem:[#allocation1] ss:$9 sm:$0xff] %v405
        %666 = vst [vmem:[%s630] ss:$9 sm:$0xff] %v408
        %667 = vst [vmem:[%s633] ss:$9 sm:$0xff] %v411
        %669 = vst [vmem:[%s636] ss:$9 sm:$0xff] %v414
        %671 = vst [vmem:[%s638] ss:$9 sm:$0xff] %v417
        %673 = vst [vmem:[%s641] ss:$9 sm:$0xff] %v420
        %674 = vst [vmem:[%s644] ss:$9 sm:$0xff] %v423
        %676 = vst [vmem:[%s647] ss:$9 sm:$0xff] %v426
        %v677 = vld [vmem:[#allocation1] sm:$0xff]
        %679 = vst [vmem:[#allocation1] ss:$9 sm:$0xff] %v429
        %681 = vst [vmem:[%s630] ss:$9 sm:$0xff] %v432
        %682 = vst [vmem:[%s633] ss:$9 sm:$0xff] %v435
        %683 = vst [vmem:[%s636] ss:$9 sm:$0xff] %v438
        %685 = vst [vmem:[%s638] ss:$9 sm:$0xff] %v441
        %687 = vst [vmem:[%s641] ss:$9 sm:$0xff] %v444
        %689 = vst [vmem:[%s644] ss:$9 sm:$0xff] %v447
        %690 = vst [vmem:[%s647] ss:$9 sm:$0xff] %v450
        %v691 = vld [vmem:[#allocation1] sm:$0xff]
        %693 = vst [vmem:[#allocation1] ss:$9 sm:$0xff] %v453
        %695 = vst [vmem:[%s630] ss:$9 sm:$0xff] %v456
        %697 = vst [vmem:[%s633] ss:$9 sm:$0xff] %v459
        %698 = vst [vmem:[%s636] ss:$9 sm:$0xff] %v462
        %699 = vst [vmem:[%s638] ss:$9 sm:$0xff] %v465
        %701 = vst [vmem:[%s641] ss:$9 sm:$0xff] %v468
        %703 = vst [vmem:[%s644] ss:$9 sm:$0xff] %v471
        %705 = vst [vmem:[%s647] ss:$9 sm:$0xff] %v474
        %v706 = vld [vmem:[#allocation1] sm:$0xff]
        %707 = vst [vmem:[#allocation1] ss:$9 sm:$0xff] %v477
        %709 = vst [vmem:[%s630] ss:$9 sm:$0xff] %v480
        %711 = vst [vmem:[%s633] ss:$9 sm:$0xff] %v483
        %713 = vst [vmem:[%s636] ss:$9 sm:$0xff] %v486
        %714 = vst [vmem:[%s638] ss:$9 sm:$0xff] %v489
        %715 = vst [vmem:[%s641] ss:$9 sm:$0xff] %v492
        %717 = vst [vmem:[%s644] ss:$9 sm:$0xff] %v495
        %719 = vst [vmem:[%s647] ss:$9 sm:$0xff] %v498
        %v720 = vld [vmem:[#allocation1] sm:$0xff]
        %722 = vst [vmem:[#allocation1] ss:$9 sm:$0xff] %v501
        %723 = vst [vmem:[%s630] ss:$9 sm:$0xff] %v504
        %725 = vst [vmem:[%s633] ss:$9 sm:$0xff] %v507
        %727 = vst [vmem:[%s636] ss:$9 sm:$0xff] %v510
        %729 = vst [vmem:[%s638] ss:$9 sm:$0xff] %v513
        %730 = vst [vmem:[%s641] ss:$9 sm:$0xff] %v516
        %731 = vst [vmem:[%s644] ss:$9 sm:$0xff] %v519
        %733 = vst [vmem:[%s647] ss:$9 sm:$0xff] %v522
        %v734 = vld [vmem:[#allocation1] sm:$0xff]
        %736 = vst [vmem:[#allocation1] ss:$9 sm:$0xff] %v525
        %738 = vst [vmem:[%s630] ss:$9 sm:$0xff] %v528
        %739 = vst [vmem:[%s633] ss:$9 sm:$0xff] %v531
        %741 = vst [vmem:[%s636] ss:$9 sm:$0xff] %v534
        %743 = vst [vmem:[%s638] ss:$9 sm:$0xff] %v537
        %745 = vst [vmem:[%s641] ss:$9 sm:$0xff] %v540
        %746 = vst [vmem:[%s644] ss:$9 sm:$0xff] %v543
        %747 = vst [vmem:[%s647] ss:$9 sm:$0xff] %v546
        %v748 = vld [vmem:[#allocation1] sm:$0xff]
        %750 = vst [vmem:[#allocation1] ss:$9 sm:$0xff] %v549
        %752 = vst [vmem:[%s630] ss:$9 sm:$0xff] %v552
        %754 = vst [vmem:[%s633] ss:$9 sm:$0xff] %v555
        %755 = vst [vmem:[%s636] ss:$9 sm:$0xff] %v558
        %757 = vst [vmem:[%s638] ss:$9 sm:$0xff] %v561
        %759 = vst [vmem:[%s641] ss:$9 sm:$0xff] %v564
        %761 = vst [vmem:[%s644] ss:$9 sm:$0xff] %v567
        %762 = vst [vmem:[%s647] ss:$9 sm:$0xff] %v570
        %v763 = vld [vmem:[#allocation1] sm:$0xff]
        %764 = vst [vmem:[#allocation1] ss:$9 sm:$0xff] %v573
        %766 = vst [vmem:[%s630] ss:$9 sm:$0xff] %v576
        %768 = vst [vmem:[%s633] ss:$9 sm:$0xff] %v579
        %770 = vst [vmem:[%s636] ss:$9 sm:$0xff] %v582
        %771 = vst [vmem:[%s638] ss:$9 sm:$0xff] %v585
        %773 = vst [vmem:[%s641] ss:$9 sm:$0xff] %v588
        %775 = vst [vmem:[%s644] ss:$9 sm:$0xff] %v591
        %777 = vst [vmem:[%s647] ss:$9 sm:$0xff] %v594
        %v778 = vld [vmem:[#allocation1] sm:$0xff]
        %779 = vst [vmem:[#allocation1] ss:$9 sm:$0xff] %v597
        %780 = vst [vmem:[%s630] ss:$9 sm:$0xff] %v600
        %782 = vst [vmem:[%s633] ss:$9 sm:$0xff] %v603
        %784 = vst [vmem:[%s636] ss:$9 sm:$0xff] %v606
        %786 = vst [vmem:[%s638] ss:$9 sm:$0xff] %v609
        %787 = vst [vmem:[%s641] ss:$9 sm:$0xff] %v612
        %789 = vst [vmem:[%s644] ss:$9 sm:$0xff] %v615
        %791 = vst [vmem:[%s647] ss:$9 sm:$0xff] %v618
        %v792 = vld [vmem:[#allocation1] sm:$0xff]
        %794 = vst [vmem:[#allocation1] ss:$9 sm:$0xff] %v621
        %795 = vst [vmem:[%s630] ss:$9 sm:$0xff] %v624
        %v796 = vld [vmem:[#allocation1] sm:$0xff]
        %v801 = vunpack.c.l.b16 %v284
        %v802 = vunpack.c.l.b16 %v285
        %v803 = vunpack.c.l.b16 %v286
        %v804 = vunpack.c.l.b16 %v287
        %v805 = vpack.c.b16 %v802, %v801
        %v806 = vpack.c.b16 %v804, %v803
        %809 = vst [vmem:[#allocation1] ss:$4 sm:$0xff] %v290
        %s810 = scalar_lea.vmem [#allocation1], 1
        %811 = vst [vmem:[%s810] ss:$4 sm:$0xff] %v625
        %s812 = scalar_lea.vmem [#allocation1], 2
        %813 = vst [vmem:[%s812] ss:$4 sm:$0xff] %v626
        %s814 = scalar_lea.vmem [#allocation1], 3
        %815 = vst [vmem:[%s814] ss:$4 sm:$0xff] %v627
        %s816 = scalar_lea.vmem [#allocation1], 32
        %817 = vst [vmem:[%s816] ss:$4 sm:$0xff] %v290
        %s818 = scalar_lea.vmem [#allocation1], 33
        %819 = vst [vmem:[%s818] ss:$4 sm:$0xff] %v625
        %s820 = scalar_lea.vmem [#allocation1], 34
        %821 = vst [vmem:[%s820] ss:$4 sm:$0xff] %v626
        %s822 = scalar_lea.vmem [#allocation1], 35
        %823 = vst [vmem:[%s822] ss:$4 sm:$0xff] %v627
        %v824 = vld.sshfl [vmem:[#allocation1] sm:$0xff pattern:$0x73625140]
        %v825 = vld.sshfl [vmem:[#allocation1 + $0x20] sm:$0xff pattern:$0x73625140]
        %826 = vst [vmem:[#allocation1] ss:$4 sm:$0xff] %v290
        %827 = vst [vmem:[%s810] ss:$4 sm:$0xff] %v290
        %828 = vst [vmem:[%s812] ss:$4 sm:$0xff] %v625
        %829 = vst [vmem:[%s814] ss:$4 sm:$0xff] %v626
        %830 = vst [vmem:[%s816] ss:$4 sm:$0xff] %v627
        %831 = vst [vmem:[%s818] ss:$4 sm:$0xff] %v290
        %832 = vst [vmem:[%s820] ss:$4 sm:$0xff] %v625
        %833 = vst [vmem:[%s822] ss:$4 sm:$0xff] %v626
        %v834 = vld.sshfl [vmem:[#allocation1] sm:$0xff pattern:$0x73625140]
        %v835 = vld.sshfl [vmem:[#allocation1 + $0x20] sm:$0xff pattern:$0x73625140]
        %836 = vst [vmem:[#allocation1] ss:$4 sm:$0xff] %v627
        %837 = vst [vmem:[%s810] ss:$4 sm:$0xff] %v290
        %838 = vst [vmem:[%s812] ss:$4 sm:$0xff] %v290
        %839 = vst [vmem:[%s814] ss:$4 sm:$0xff] %v625
        %840 = vst [vmem:[%s816] ss:$4 sm:$0xff] %v626
        %841 = vst [vmem:[%s818] ss:$4 sm:$0xff] %v627
        %842 = vst [vmem:[%s820] ss:$4 sm:$0xff] %v290
        %843 = vst [vmem:[%s822] ss:$4 sm:$0xff] %v625
        %v844 = vld.sshfl [vmem:[#allocation1] sm:$0xff pattern:$0x73625140]
        %v845 = vld.sshfl [vmem:[#allocation1 + $0x20] sm:$0xff pattern:$0x73625140]
        %846 = vst [vmem:[#allocation1] ss:$4 sm:$0xff] %v626
        %847 = vst [vmem:[%s810] ss:$4 sm:$0xff] %v627
        %848 = vst [vmem:[%s812] ss:$4 sm:$0xff] %v290
        %849 = vst [vmem:[%s814] ss:$4 sm:$0xff] %v290
        %850 = vst [vmem:[%s816] ss:$4 sm:$0xff] %v625
        %851 = vst [vmem:[%s818] ss:$4 sm:$0xff] %v626
        %852 = vst [vmem:[%s820] ss:$4 sm:$0xff] %v627
        %853 = vst [vmem:[%s822] ss:$4 sm:$0xff] %v290
        %v854 = vld.sshfl [vmem:[#allocation1] sm:$0xff pattern:$0x73625140]
        %v855 = vld.sshfl [vmem:[#allocation1 + $0x20] sm:$0xff pattern:$0x73625140]
        %856 = vst [vmem:[#allocation1] ss:$4 sm:$0xff] %v625
        %857 = vst [vmem:[%s810] ss:$4 sm:$0xff] %v626
        %858 = vst [vmem:[%s812] ss:$4 sm:$0xff] %v627
        %859 = vst [vmem:[%s814] ss:$4 sm:$0xff] %v290
        %860 = vst [vmem:[%s816] ss:$4 sm:$0xff] %v290
        %861 = vst [vmem:[%s818] ss:$4 sm:$0xff] %v625
        %862 = vst [vmem:[%s820] ss:$4 sm:$0xff] %v626
        %863 = vst [vmem:[%s822] ss:$4 sm:$0xff] %v627
        %v864 = vld.sshfl [vmem:[#allocation1] sm:$0xff pattern:$0x73625140]
        %v865 = vld.sshfl [vmem:[#allocation1 + $0x20] sm:$0xff pattern:$0x73625140]
        %866 = vst [vmem:[#allocation1] ss:$4 sm:$0xff] %v290
        %867 = vst [vmem:[%s810] ss:$4 sm:$0xff] %v625
        %868 = vst [vmem:[%s812] ss:$4 sm:$0xff] %v626
        %869 = vst [vmem:[%s814] ss:$4 sm:$0xff] %v627
        %870 = vst [vmem:[%s816] ss:$4 sm:$0xff] %v290
        %871 = vst [vmem:[%s818] ss:$4 sm:$0xff] %v290
        %872 = vst [vmem:[%s820] ss:$4 sm:$0xff] %v625
        %873 = vst [vmem:[%s822] ss:$4 sm:$0xff] %v626
        %v874 = vld.sshfl [vmem:[#allocation1] sm:$0xff pattern:$0x73625140]
        %v875 = vld.sshfl [vmem:[#allocation1 + $0x20] sm:$0xff pattern:$0x73625140]
        %876 = vst [vmem:[#allocation1] ss:$4 sm:$0xff] %v627
        %877 = vst [vmem:[%s810] ss:$4 sm:$0xff] %v290
        %878 = vst [vmem:[%s812] ss:$4 sm:$0xff] %v625
        %879 = vst [vmem:[%s814] ss:$4 sm:$0xff] %v626
        %880 = vst [vmem:[%s816] ss:$4 sm:$0xff] %v627
        %881 = vst [vmem:[%s818] ss:$4 sm:$0xff] %v290
        %882 = vst [vmem:[%s820] ss:$4 sm:$0xff] %v290
        %883 = vst [vmem:[%s822] ss:$4 sm:$0xff] %v625
        %v884 = vld.sshfl [vmem:[#allocation1] sm:$0xff pattern:$0x73625140]
        %v885 = vld.sshfl [vmem:[#allocation1 + $0x20] sm:$0xff pattern:$0x73625140]
        %886 = vst [vmem:[#allocation1] ss:$4 sm:$0xff] %v626
        %887 = vst [vmem:[%s810] ss:$4 sm:$0xff] %v627
        %888 = vst [vmem:[%s812] ss:$4 sm:$0xff] %v290
        %889 = vst [vmem:[%s814] ss:$4 sm:$0xff] %v625
        %890 = vst [vmem:[%s816] ss:$4 sm:$0xff] %v626
        %891 = vst [vmem:[%s818] ss:$4 sm:$0xff] %v627
        %892 = vst [vmem:[%s820] ss:$4 sm:$0xff] %v290
        %893 = vst [vmem:[%s822] ss:$4 sm:$0xff] %v290
        %v894 = vld.sshfl [vmem:[#allocation1] sm:$0xff pattern:$0x73625140]
        %v895 = vld.sshfl [vmem:[#allocation1 + $0x20] sm:$0xff pattern:$0x73625140]
        %896 = vst [vmem:[#allocation1] ss:$4 sm:$0xff] %v625
        %897 = vst [vmem:[%s810] ss:$4 sm:$0xff] %v626
        %898 = vst [vmem:[%s812] ss:$4 sm:$0xff] %v627
        %899 = vst [vmem:[%s814] ss:$4 sm:$0xff] %v290
        %900 = vst [vmem:[%s816] ss:$4 sm:$0xff] %v625
        %901 = vst [vmem:[%s818] ss:$4 sm:$0xff] %v626
        %902 = vst [vmem:[%s820] ss:$4 sm:$0xff] %v627
        %903 = vst [vmem:[%s822] ss:$4 sm:$0xff] %v290
        %v904 = vld.sshfl [vmem:[#allocation1] sm:$0xff pattern:$0x73625140]
        %v905 = vld.sshfl [vmem:[#allocation1 + $0x20] sm:$0xff pattern:$0x73625140]
        %906 = vst [vmem:[#allocation1] ss:$4 sm:$0xff] %v290
        %907 = vst [vmem:[%s810] ss:$4 sm:$0xff] %v625
        %908 = vst [vmem:[%s812] ss:$4 sm:$0xff] %v626
        %909 = vst [vmem:[%s814] ss:$4 sm:$0xff] %v627
        %910 = vst [vmem:[%s816] ss:$4 sm:$0xff] %v290
        %911 = vst [vmem:[%s818] ss:$4 sm:$0xff] %v625
        %912 = vst [vmem:[%s820] ss:$4 sm:$0xff] %v626
        %913 = vst [vmem:[%s822] ss:$4 sm:$0xff] %v627
        %v914 = vld.sshfl [vmem:[#allocation1] sm:$0xff pattern:$0x73625140]
        %v915 = vld.sshfl [vmem:[#allocation1 + $0x20] sm:$0xff pattern:$0x73625140]
        %916 = vst [vmem:[#allocation1] ss:$4 sm:$0xff] %v290
        %917 = vst [vmem:[%s810] ss:$4 sm:$0xff] %v290
        %918 = vst [vmem:[%s812] ss:$4 sm:$0xff] %v625
        %919 = vst [vmem:[%s814] ss:$4 sm:$0xff] %v626
        %920 = vst [vmem:[%s816] ss:$4 sm:$0xff] %v627
        %921 = vst [vmem:[%s818] ss:$4 sm:$0xff] %v290
        %922 = vst [vmem:[%s820] ss:$4 sm:$0xff] %v625
        %923 = vst [vmem:[%s822] ss:$4 sm:$0xff] %v626
        %v924 = vld.sshfl [vmem:[#allocation1] sm:$0xff pattern:$0x73625140]
        %v925 = vld.sshfl [vmem:[#allocation1 + $0x20] sm:$0xff pattern:$0x73625140]
        %926 = vst [vmem:[#allocation1] ss:$4 sm:$0xff] %v627
        %927 = vst [vmem:[%s810] ss:$4 sm:$0xff] %v290
        %v928 = vld.sshfl [vmem:[#allocation1] sm:$0xff pattern:$0x73625140]
        %vm952 = vcmask 261120
        %v953 = vsel %vm952, %v649, 0
        %v955 = vsel %vm952, %v663, 0
        %v957 = vsel %vm952, %v677, 0
        %v959 = vsel %vm952, %v691, 0
        %v961 = vsel %vm952, %v706, 0
        %v963 = vsel %vm952, %v720, 0
        %v965 = vsel %vm952, %v734, 0
        %v967 = vsel %vm952, %v748, 0
        %v969 = vsel %vm952, %v763, 0
        %v971 = vsel %vm952, %v778, 0
        %v973 = vsel %vm952, %v792, 0
        %v975 = vsel %vm952, %v796, 0
        %977 = vmatpush.bf16.msra.mxu0 0
        %978 = vmatpush.bf16.msra.mxu0 0
        %979 = vmatpush.bf16.msra.mxu0 0
        %980 = vmatpush.bf16.msra.mxu0 0
        %981 = vmatpush.bf16.msra.mxu0 0
        %982 = vmatpush.bf16.msra.mxu0 0
        %983 = vmatpush.bf16.msra.mxu0 %v806
        %984 = vmatpush.bf16.msra.mxu0 %v805
        %985 = vmatmul.bf16.gmra.mxu0 %v953
        %v986 = vpop.f32.mrf.mxu0
        %v987 = vadd.f32 %v824, %v986
        %v988 = vpop.f32.mrf.mxu0
        %v989 = vadd.f32 %v825, %v988
        %990 = vmatmul.bf16.gmra.mxu0 %v955
        %v991 = vpop.f32.mrf.mxu0
        %v992 = vadd.f32 %v834, %v991
        %v993 = vpop.f32.mrf.mxu0
        %v994 = vadd.f32 %v835, %v993
        %995 = vmatmul.bf16.gmra.mxu0 %v957
        %v996 = vpop.f32.mrf.mxu0
        %v997 = vadd.f32 %v844, %v996
        %v998 = vpop.f32.mrf.mxu0
        %v999 = vadd.f32 %v845, %v998
        %1000 = vmatmul.bf16.gmra.mxu0 %v959
        %v1001 = vpop.f32.mrf.mxu0
        %v1002 = vadd.f32 %v854, %v1001
        %v1003 = vpop.f32.mrf.mxu0
        %v1004 = vadd.f32 %v855, %v1003
        %1005 = vmatmul.bf16.gmra.mxu0 %v961
        %v1006 = vpop.f32.mrf.mxu0
        %v1007 = vadd.f32 %v864, %v1006
        %v1008 = vpop.f32.mrf.mxu0
        %v1009 = vadd.f32 %v865, %v1008
        %1010 = vmatmul.bf16.gmra.mxu0 %v963
        %v1011 = vpop.f32.mrf.mxu0
        %v1012 = vadd.f32 %v874, %v1011
        %v1013 = vpop.f32.mrf.mxu0
        %v1014 = vadd.f32 %v875, %v1013
        %1015 = vmatmul.bf16.gmra.mxu0 %v965
        %v1016 = vpop.f32.mrf.mxu0
        %v1017 = vadd.f32 %v884, %v1016
        %v1018 = vpop.f32.mrf.mxu0
        %v1019 = vadd.f32 %v885, %v1018
        %1020 = vmatmul.bf16.gmra.mxu0 %v967
        %v1021 = vpop.f32.mrf.mxu0
        %v1022 = vadd.f32 %v894, %v1021
        %v1023 = vpop.f32.mrf.mxu0
        %v1024 = vadd.f32 %v895, %v1023
        %1025 = vmatmul.bf16.gmra.mxu0 %v969
        %v1026 = vpop.f32.mrf.mxu0
        %v1027 = vadd.f32 %v904, %v1026
        %v1028 = vpop.f32.mrf.mxu0
        %v1029 = vadd.f32 %v905, %v1028
        %1030 = vmatmul.bf16.gmra.mxu0 %v971
        %v1031 = vpop.f32.mrf.mxu0
        %v1032 = vadd.f32 %v914, %v1031
        %v1033 = vpop.f32.mrf.mxu0
        %v1034 = vadd.f32 %v915, %v1033
        %1035 = vmatmul.bf16.gmra.mxu0 %v973
        %v1036 = vpop.f32.mrf.mxu0
        %v1037 = vadd.f32 %v924, %v1036
        %v1038 = vpop.f32.mrf.mxu0
        %v1039 = vadd.f32 %v925, %v1038
        %1040 = vmatmul.bf16.gmra.mxu0 %v975
        %v1041 = vpop.f32.mrf.mxu0
        %v1042 = vadd.f32 %v928, %v1041
        %v1043 = vpop.f32.mrf.mxu0
        %1044 = vdwg.mxu0
        %v1068 = vrot.slane %v987, 2
        %v1069 = vrot.slane %v987, 4
        %v1070 = vrot.slane %v987, 6
        %v1071 = vrot.slane %v989, 2
        %v1072 = vrot.slane %v989, 4
        %v1073 = vrot.slane %v989, 6
        %v1074 = vrot.slane %v992, 2
        %v1075 = vrot.slane %v992, 4
        %v1076 = vrot.slane %v992, 6
        %v1077 = vrot.slane %v994, 2
        %v1078 = vrot.slane %v994, 4
        %v1079 = vrot.slane %v994, 6
        %v1080 = vrot.slane %v997, 2
        %v1081 = vrot.slane %v997, 4
        %v1082 = vrot.slane %v997, 6
        %v1083 = vrot.slane %v999, 2
        %v1084 = vrot.slane %v999, 4
        %v1085 = vrot.slane %v999, 6
        %v1086 = vrot.slane %v1002, 2
        %v1087 = vrot.slane %v1002, 4
        %v1088 = vrot.slane %v1002, 6
        %v1089 = vrot.slane %v1004, 2
        %v1090 = vrot.slane %v1004, 4
        %v1091 = vrot.slane %v1004, 6
        %v1092 = vrot.slane %v1007, 2
        %v1093 = vrot.slane %v1007, 4
        %v1094 = vrot.slane %v1007, 6
        %v1095 = vrot.slane %v1009, 2
        %v1096 = vrot.slane %v1009, 4
        %v1097 = vrot.slane %v1009, 6
        %v1098 = vrot.slane %v1012, 2
        %v1099 = vrot.slane %v1012, 4
        %v1100 = vrot.slane %v1012, 6
        %v1101 = vrot.slane %v1014, 2
        %v1102 = vrot.slane %v1014, 4
        %v1103 = vrot.slane %v1014, 6
        %v1104 = vrot.slane %v1017, 2
        %v1105 = vrot.slane %v1017, 4
        %v1106 = vrot.slane %v1017, 6
        %v1107 = vrot.slane %v1019, 2
        %v1108 = vrot.slane %v1019, 4
        %v1109 = vrot.slane %v1019, 6
        %v1110 = vrot.slane %v1022, 2
        %v1111 = vrot.slane %v1022, 4
        %v1112 = vrot.slane %v1022, 6
        %v1113 = vrot.slane %v1024, 2
        %v1114 = vrot.slane %v1024, 4
        %v1115 = vrot.slane %v1024, 6
        %v1116 = vrot.slane %v1027, 2
        %v1117 = vrot.slane %v1027, 4
        %v1118 = vrot.slane %v1027, 6
        %v1119 = vrot.slane %v1029, 2
        %v1120 = vrot.slane %v1029, 4
        %v1121 = vrot.slane %v1029, 6
        %v1122 = vrot.slane %v1032, 2
        %v1123 = vrot.slane %v1032, 4
        %v1124 = vrot.slane %v1032, 6
        %v1125 = vrot.slane %v1034, 2
        %v1126 = vrot.slane %v1034, 4
        %v1127 = vrot.slane %v1034, 6
        %v1128 = vrot.slane %v1037, 2
        %v1129 = vrot.slane %v1037, 4
        %v1130 = vrot.slane %v1037, 6
        %v1131 = vrot.slane %v1039, 2
        %v1132 = vrot.slane %v1039, 4
        %v1133 = vrot.slane %v1039, 6
        %v1134 = vrot.slane %v1042, 2
        %v1202 = vmax.f32 %v987, 0.0
        %v1203 = vmax.f32 %v1068, 0.0
        %v1204 = vmax.f32 %v1069, 0.0
        %v1205 = vmax.f32 %v1070, 0.0
        %v1206 = vmax.f32 %v989, 0.0
        %v1207 = vmax.f32 %v1071, 0.0
        %v1208 = vmax.f32 %v1072, 0.0
        %v1209 = vmax.f32 %v1073, 0.0
        %v1210 = vmax.f32 %v992, 0.0
        %v1211 = vmax.f32 %v1074, 0.0
        %v1212 = vmax.f32 %v1075, 0.0
        %v1213 = vmax.f32 %v1076, 0.0
        %v1214 = vmax.f32 %v994, 0.0
        %v1215 = vmax.f32 %v1077, 0.0
        %v1216 = vmax.f32 %v1078, 0.0
        %v1217 = vmax.f32 %v1079, 0.0
        %v1218 = vmax.f32 %v997, 0.0
        %v1219 = vmax.f32 %v1080, 0.0
        %v1220 = vmax.f32 %v1081, 0.0
        %v1221 = vmax.f32 %v1082, 0.0
        %v1222 = vmax.f32 %v999, 0.0
        %v1223 = vmax.f32 %v1083, 0.0
        %v1224 = vmax.f32 %v1084, 0.0
        %v1225 = vmax.f32 %v1085, 0.0
        %v1226 = vmax.f32 %v1002, 0.0
        %v1227 = vmax.f32 %v1086, 0.0
        %v1228 = vmax.f32 %v1087, 0.0
        %v1229 = vmax.f32 %v1088, 0.0
        %v1230 = vmax.f32 %v1004, 0.0
        %v1231 = vmax.f32 %v1089, 0.0
        %v1232 = vmax.f32 %v1090, 0.0
        %v1233 = vmax.f32 %v1091, 0.0
        %v1234 = vmax.f32 %v1007, 0.0
        %v1235 = vmax.f32 %v1092, 0.0
        %v1236 = vmax.f32 %v1093, 0.0
        %v1237 = vmax.f32 %v1094, 0.0
        %v1238 = vmax.f32 %v1009, 0.0
        %v1239 = vmax.f32 %v1095, 0.0
        %v1240 = vmax.f32 %v1096, 0.0
        %v1241 = vmax.f32 %v1097, 0.0
        %v1242 = vmax.f32 %v1012, 0.0
        %v1243 = vmax.f32 %v1098, 0.0
        %v1244 = vmax.f32 %v1099, 0.0
        %v1245 = vmax.f32 %v1100, 0.0
        %v1246 = vmax.f32 %v1014, 0.0
        %v1247 = vmax.f32 %v1101, 0.0
        %v1248 = vmax.f32 %v1102, 0.0
        %v1249 = vmax.f32 %v1103, 0.0
        %v1250 = vmax.f32 %v1017, 0.0
        %v1251 = vmax.f32 %v1104, 0.0
        %v1252 = vmax.f32 %v1105, 0.0
        %v1253 = vmax.f32 %v1106, 0.0
        %v1254 = vmax.f32 %v1019, 0.0
        %v1255 = vmax.f32 %v1107, 0.0
        %v1256 = vmax.f32 %v1108, 0.0
        %v1257 = vmax.f32 %v1109, 0.0
        %v1258 = vmax.f32 %v1022, 0.0
        %v1259 = vmax.f32 %v1110, 0.0
        %v1260 = vmax.f32 %v1111, 0.0
        %v1261 = vmax.f32 %v1112, 0.0
        %v1262 = vmax.f32 %v1024, 0.0
        %v1263 = vmax.f32 %v1113, 0.0
        %v1264 = vmax.f32 %v1114, 0.0
        %v1265 = vmax.f32 %v1115, 0.0
        %v1266 = vmax.f32 %v1027, 0.0
        %v1267 = vmax.f32 %v1116, 0.0
        %v1268 = vmax.f32 %v1117, 0.0
        %v1269 = vmax.f32 %v1118, 0.0
        %v1270 = vmax.f32 %v1029, 0.0
        %v1271 = vmax.f32 %v1119, 0.0
        %v1272 = vmax.f32 %v1120, 0.0
        %v1273 = vmax.f32 %v1121, 0.0
        %v1274 = vmax.f32 %v1032, 0.0
        %v1275 = vmax.f32 %v1122, 0.0
        %v1276 = vmax.f32 %v1123, 0.0
        %v1277 = vmax.f32 %v1124, 0.0
        %v1278 = vmax.f32 %v1034, 0.0
        %v1279 = vmax.f32 %v1125, 0.0
        %v1280 = vmax.f32 %v1126, 0.0
        %v1281 = vmax.f32 %v1127, 0.0
        %v1282 = vmax.f32 %v1037, 0.0
        %v1283 = vmax.f32 %v1128, 0.0
        %v1284 = vmax.f32 %v1129, 0.0
        %v1285 = vmax.f32 %v1130, 0.0
        %v1286 = vmax.f32 %v1039, 0.0
        %v1287 = vmax.f32 %v1131, 0.0
        %v1288 = vmax.f32 %v1132, 0.0
        %v1289 = vmax.f32 %v1133, 0.0
        %v1290 = vmax.f32 %v1042, 0.0
        %v1291 = vmax.f32 %v1134, 0.0
        %s1292 = ssub.s32 %s253, 1
        %v1293 = vstv %s1292
        %v1294 = vadd.s32 %v1293, 1
        %v1295 = vadd.s32 %v1293, 2
        %v1296 = vadd.s32 %v1293, 3
        %v1297 = vadd.s32 %v1293, 4
        %v1298 = vadd.s32 %v1293, 5
        %v1299 = vadd.s32 %v1293, 6
        %v1300 = vadd.s32 %v1293, 7
        %v1301 = vadd.s32 %v1293, 8
        %v1302 = vadd.s32 %v1293, 9
        %v1303 = vlaneseq
        %v1304 = vshrl.u32 %v1303, 7
        %v1305 = vadd.s32 %v1304, 8
        %v1306 = vadd.s32 %v1304, 16
        %vm1307 = vcmp.ge.s32.totalorder %v1293, 0
        %vm1308 = vcmp.ge.s32.totalorder %v1294, 0
        %vm1309 = vcmp.ge.s32.totalorder %v1295, 0
        %vm1310 = vcmp.ge.s32.totalorder %v1296, 0
        %vm1311 = vcmp.ge.s32.totalorder %v1297, 0
        %vm1312 = vcmp.ge.s32.totalorder %v1298, 0
        %vm1313 = vcmp.ge.s32.totalorder %v1299, 0
        %vm1314 = vcmp.ge.s32.totalorder %v1300, 0
        %vm1315 = vcmp.ge.s32.totalorder %v1301, 0
        %vm1316 = vcmp.ge.s32.totalorder %v1302, 0
        %vm1317 = vcmp.lt.s32.totalorder %v1293, 16
        %vm1318 = vcmp.lt.s32.totalorder %v1294, 16
        %vm1319 = vcmp.lt.s32.totalorder %v1295, 16
        %vm1320 = vcmp.lt.s32.totalorder %v1296, 16
        %vm1321 = vcmp.lt.s32.totalorder %v1297, 16
        %vm1322 = vcmp.lt.s32.totalorder %v1298, 16
        %vm1323 = vcmp.lt.s32.totalorder %v1299, 16
        %vm1324 = vcmp.lt.s32.totalorder %v1300, 16
        %vm1325 = vcmp.lt.s32.totalorder %v1301, 16
        %vm1326 = vcmp.lt.s32.totalorder %v1302, 16
        %vm1327 = vmand %vm1307, %vm1317
        %vm1328 = vmand %vm1308, %vm1318
        %vm1329 = vmand %vm1309, %vm1319
        %vm1330 = vmand %vm1310, %vm1320
        %vm1331 = vmand %vm1311, %vm1321
        %vm1332 = vmand %vm1312, %vm1322
        %vm1333 = vmand %vm1313, %vm1323
        %vm1334 = vmand %vm1314, %vm1324
        %vm1335 = vmand %vm1315, %vm1325
        %vm1336 = vmand %vm1316, %vm1326
        %vm1337 = vcmp.ge.s32.totalorder %v1304, 1
        %vm1338 = vcmp.ge.s32.totalorder %v1305, 1
        %vm1339 = vcmp.ge.s32.totalorder %v1306, 1
        %vm1340 = vmand %vm1327, %vm1337
        %vm1341 = vmand %vm1327, %vm1338
        %vm1342 = vmand %vm1327, %vm1339
        %vm1343 = vmand %vm1328, %vm1337
        %vm1344 = vmand %vm1328, %vm1338
        %vm1345 = vmand %vm1328, %vm1339
        %vm1346 = vmand %vm1329, %vm1337
        %vm1347 = vmand %vm1329, %vm1338
        %vm1348 = vmand %vm1329, %vm1339
        %vm1349 = vmand %vm1330, %vm1337
        %vm1350 = vmand %vm1330, %vm1338
        %vm1351 = vmand %vm1330, %vm1339
        %vm1352 = vmand %vm1331, %vm1337
        %vm1353 = vmand %vm1331, %vm1338
        %vm1354 = vmand %vm1331, %vm1339
        %vm1355 = vmand %vm1332, %vm1337
        %vm1356 = vmand %vm1332, %vm1338
        %vm1357 = vmand %vm1332, %vm1339
        %vm1358 = vmand %vm1333, %vm1337
        %vm1359 = vmand %vm1333, %vm1338
        %vm1360 = vmand %vm1333, %vm1339
        %vm1361 = vmand %vm1334, %vm1337
        %vm1362 = vmand %vm1334, %vm1338
        %vm1363 = vmand %vm1334, %vm1339
        %vm1364 = vmand %vm1335, %vm1337
        %vm1365 = vmand %vm1335, %vm1338
        %vm1366 = vmand %vm1335, %vm1339
        %vm1367 = vmand %vm1336, %vm1337
        %vm1368 = vmand %vm1336, %vm1338
        %vm1369 = vmand %vm1336, %vm1339
        %vm1370 = vcmp.le.s32.totalorder %v1304, 16
        %vm1371 = vcmp.le.s32.totalorder %v1305, 16
        %vm1372 = vcmp.le.s32.totalorder %v1306, 16
        %vm1373 = vmand %vm1340, %vm1370
        %vm1374 = vmand %vm1341, %vm1371
        %vm1375 = vmand %vm1342, %vm1372
        %vm1376 = vmand %vm1343, %vm1370
        %vm1377 = vmand %vm1344, %vm1371
        %vm1378 = vmand %vm1345, %vm1372
        %vm1379 = vmand %vm1346, %vm1370
        %vm1380 = vmand %vm1347, %vm1371
        %vm1381 = vmand %vm1348, %vm1372
        %vm1382 = vmand %vm1349, %vm1370
        %vm1383 = vmand %vm1350, %vm1371
        %vm1384 = vmand %vm1351, %vm1372
        %vm1385 = vmand %vm1352, %vm1370
        %vm1386 = vmand %vm1353, %vm1371
        %vm1387 = vmand %vm1354, %vm1372
        %vm1388 = vmand %vm1355, %vm1370
        %vm1389 = vmand %vm1356, %vm1371
        %vm1390 = vmand %vm1357, %vm1372
        %vm1391 = vmand %vm1358, %vm1370
        %vm1392 = vmand %vm1359, %vm1371
        %vm1393 = vmand %vm1360, %vm1372
        %vm1394 = vmand %vm1361, %vm1370
        %vm1395 = vmand %vm1362, %vm1371
        %vm1396 = vmand %vm1363, %vm1372
        %vm1397 = vmand %vm1364, %vm1370
        %vm1398 = vmand %vm1365, %vm1371
        %vm1399 = vmand %vm1366, %vm1372
        %vm1400 = vmand %vm1367, %vm1370
        %vm1401 = vmand %vm1368, %vm1371
        %vm1402 = vmand %vm1369, %vm1372
        %1493 = vst [vmem:[#allocation1] ss:$4 sm:$0xff] %v1202
        %s1494 = scalar_lea.vmem [#allocation1], 1
        %1495 = vst [vmem:[%s1494] ss:$4 sm:$0xff] %v1203
        %s1496 = scalar_lea.vmem [#allocation1], 2
        %1497 = vst [vmem:[%s1496] ss:$4 sm:$0xff] %v1204
        %s1498 = scalar_lea.vmem [#allocation1], 3
        %1499 = vst [vmem:[%s1498] ss:$4 sm:$0xff] %v1205
        %s1500 = scalar_lea.vmem [#allocation1], 32
        %1501 = vst [vmem:[%s1500] ss:$4 sm:$0xff] %v1206
        %s1502 = scalar_lea.vmem [#allocation1], 33
        %1503 = vst [vmem:[%s1502] ss:$4 sm:$0xff] %v1207
        %s1504 = scalar_lea.vmem [#allocation1], 34
        %1505 = vst [vmem:[%s1504] ss:$4 sm:$0xff] %v1208
        %s1506 = scalar_lea.vmem [#allocation1], 35
        %1507 = vst [vmem:[%s1506] ss:$4 sm:$0xff] %v1209
        %v1508 = vld.sshfl [vmem:[#allocation1] sm:$0xff pattern:$0x73625140]
        %v1509 = vld.sshfl [vmem:[#allocation1 + $0x20] sm:$0xff pattern:$0x73625140]
        %1510 = vst [vmem:[#allocation1] ss:$4 sm:$0xff] %v1210
        %v1511 = vld.sshfl [vmem:[#allocation1] sm:$0xff pattern:$0x73625140]
        %1512 = vst [vmem:[%s1500] ss:$4 sm:$0xff] %v1211
        %1513 = vst [vmem:[%s1502] ss:$4 sm:$0xff] %v1212
        %1514 = vst [vmem:[%s1504] ss:$4 sm:$0xff] %v1213
        %1515 = vst [vmem:[%s1506] ss:$4 sm:$0xff] %v1214
        %v1516 = vld.sshfl [vmem:[#allocation1 + $0x20] sm:$0xff pattern:$0x73625140]
        %1517 = vst [vmem:[#allocation1] ss:$4 sm:$0xff] %v1215
        %1518 = vst [vmem:[%s1494] ss:$4 sm:$0xff] %v1216
        %1519 = vst [vmem:[%s1496] ss:$4 sm:$0xff] %v1217
        %1520 = vst [vmem:[%s1498] ss:$4 sm:$0xff] %v1218
        %1521 = vst [vmem:[%s1500] ss:$4 sm:$0xff] %v1219
        %v1522 = vld.sshfl [vmem:[#allocation1] sm:$0xff pattern:$0x73625140]
        %v1523 = vld.sshfl [vmem:[#allocation1 + $0x20] sm:$0xff pattern:$0x73625140]
        %1524 = vst [vmem:[#allocation1] ss:$4 sm:$0xff] %v1220
        %1525 = vst [vmem:[%s1494] ss:$4 sm:$0xff] %v1221
        %1526 = vst [vmem:[%s1496] ss:$4 sm:$0xff] %v1222
        %1527 = vst [vmem:[%s1498] ss:$4 sm:$0xff] %v1223
        %1528 = vst [vmem:[%s1500] ss:$4 sm:$0xff] %v1224
        %1529 = vst [vmem:[%s1502] ss:$4 sm:$0xff] %v1225
        %1530 = vst [vmem:[%s1504] ss:$4 sm:$0xff] %v1226
        %1531 = vst [vmem:[%s1506] ss:$4 sm:$0xff] %v1227
        %v1532 = vld.sshfl [vmem:[#allocation1] sm:$0xff pattern:$0x73625140]
        %v1533 = vld.sshfl [vmem:[#allocation1 + $0x20] sm:$0xff pattern:$0x73625140]
        %1534 = vst [vmem:[#allocation1] ss:$4 sm:$0xff] %v1228
        %v1535 = vld.sshfl [vmem:[#allocation1] sm:$0xff pattern:$0x73625140]
        %1536 = vst [vmem:[%s1500] ss:$4 sm:$0xff] %v1229
        %1537 = vst [vmem:[%s1502] ss:$4 sm:$0xff] %v1230
        %1538 = vst [vmem:[%s1504] ss:$4 sm:$0xff] %v1231
        %1539 = vst [vmem:[%s1506] ss:$4 sm:$0xff] %v1232
        %v1540 = vld.sshfl [vmem:[#allocation1 + $0x20] sm:$0xff pattern:$0x73625140]
        %1541 = vst [vmem:[#allocation1] ss:$4 sm:$0xff] %v1233
        %1542 = vst [vmem:[%s1494] ss:$4 sm:$0xff] %v1234
        %1543 = vst [vmem:[%s1496] ss:$4 sm:$0xff] %v1235
        %1544 = vst [vmem:[%s1498] ss:$4 sm:$0xff] %v1236
        %1545 = vst [vmem:[%s1500] ss:$4 sm:$0xff] %v1237
        %v1546 = vld.sshfl [vmem:[#allocation1] sm:$0xff pattern:$0x73625140]
        %v1547 = vld.sshfl [vmem:[#allocation1 + $0x20] sm:$0xff pattern:$0x73625140]
        %1548 = vst [vmem:[#allocation1] ss:$4 sm:$0xff] %v1238
        %1549 = vst [vmem:[%s1494] ss:$4 sm:$0xff] %v1239
        %1550 = vst [vmem:[%s1496] ss:$4 sm:$0xff] %v1240
        %1551 = vst [vmem:[%s1498] ss:$4 sm:$0xff] %v1241
        %1552 = vst [vmem:[%s1500] ss:$4 sm:$0xff] %v1242
        %1553 = vst [vmem:[%s1502] ss:$4 sm:$0xff] %v1243
        %1554 = vst [vmem:[%s1504] ss:$4 sm:$0xff] %v1244
        %1555 = vst [vmem:[%s1506] ss:$4 sm:$0xff] %v1245
        %v1556 = vld.sshfl [vmem:[#allocation1] sm:$0xff pattern:$0x73625140]
        %v1557 = vld.sshfl [vmem:[#allocation1 + $0x20] sm:$0xff pattern:$0x73625140]
        %1558 = vst [vmem:[#allocation1] ss:$4 sm:$0xff] %v1246
        %v1559 = vld.sshfl [vmem:[#allocation1] sm:$0xff pattern:$0x73625140]
        %1560 = vst [vmem:[%s1500] ss:$4 sm:$0xff] %v1247
        %1561 = vst [vmem:[%s1502] ss:$4 sm:$0xff] %v1248
        %1562 = vst [vmem:[%s1504] ss:$4 sm:$0xff] %v1249
        %1563 = vst [vmem:[%s1506] ss:$4 sm:$0xff] %v1250
        %v1564 = vld.sshfl [vmem:[#allocation1 + $0x20] sm:$0xff pattern:$0x73625140]
        %1565 = vst [vmem:[#allocation1] ss:$4 sm:$0xff] %v1251
        %1566 = vst [vmem:[%s1494] ss:$4 sm:$0xff] %v1252
        %1567 = vst [vmem:[%s1496] ss:$4 sm:$0xff] %v1253
        %1568 = vst [vmem:[%s1498] ss:$4 sm:$0xff] %v1254
        %1569 = vst [vmem:[%s1500] ss:$4 sm:$0xff] %v1255
        %v1570 = vld.sshfl [vmem:[#allocation1] sm:$0xff pattern:$0x73625140]
        %v1571 = vld.sshfl [vmem:[#allocation1 + $0x20] sm:$0xff pattern:$0x73625140]
        %1572 = vst [vmem:[#allocation1] ss:$4 sm:$0xff] %v1256
        %1573 = vst [vmem:[%s1494] ss:$4 sm:$0xff] %v1257
        %1574 = vst [vmem:[%s1496] ss:$4 sm:$0xff] %v1258
        %1575 = vst [vmem:[%s1498] ss:$4 sm:$0xff] %v1259
        %1576 = vst [vmem:[%s1500] ss:$4 sm:$0xff] %v1260
        %1577 = vst [vmem:[%s1502] ss:$4 sm:$0xff] %v1261
        %1578 = vst [vmem:[%s1504] ss:$4 sm:$0xff] %v1262
        %1579 = vst [vmem:[%s1506] ss:$4 sm:$0xff] %v1263
        %v1580 = vld.sshfl [vmem:[#allocation1] sm:$0xff pattern:$0x73625140]
        %v1581 = vld.sshfl [vmem:[#allocation1 + $0x20] sm:$0xff pattern:$0x73625140]
        %1582 = vst [vmem:[#allocation1] ss:$4 sm:$0xff] %v1264
        %v1583 = vld.sshfl [vmem:[#allocation1] sm:$0xff pattern:$0x73625140]
        %1584 = vst [vmem:[%s1500] ss:$4 sm:$0xff] %v1265
        %1585 = vst [vmem:[%s1502] ss:$4 sm:$0xff] %v1266
        %1586 = vst [vmem:[%s1504] ss:$4 sm:$0xff] %v1267
        %1587 = vst [vmem:[%s1506] ss:$4 sm:$0xff] %v1268
        %v1588 = vld.sshfl [vmem:[#allocation1 + $0x20] sm:$0xff pattern:$0x73625140]
        %1589 = vst [vmem:[#allocation1] ss:$4 sm:$0xff] %v1269
        %1590 = vst [vmem:[%s1494] ss:$4 sm:$0xff] %v1270
        %1591 = vst [vmem:[%s1496] ss:$4 sm:$0xff] %v1271
        %1592 = vst [vmem:[%s1498] ss:$4 sm:$0xff] %v1272
        %1593 = vst [vmem:[%s1500] ss:$4 sm:$0xff] %v1273
        %v1594 = vld.sshfl [vmem:[#allocation1] sm:$0xff pattern:$0x73625140]
        %v1595 = vld.sshfl [vmem:[#allocation1 + $0x20] sm:$0xff pattern:$0x73625140]
        %1596 = vst [vmem:[#allocation1] ss:$4 sm:$0xff] %v1274
        %1597 = vst [vmem:[%s1494] ss:$4 sm:$0xff] %v1275
        %1598 = vst [vmem:[%s1496] ss:$4 sm:$0xff] %v1276
        %1599 = vst [vmem:[%s1498] ss:$4 sm:$0xff] %v1277
        %1600 = vst [vmem:[%s1500] ss:$4 sm:$0xff] %v1278
        %1601 = vst [vmem:[%s1502] ss:$4 sm:$0xff] %v1279
        %1602 = vst [vmem:[%s1504] ss:$4 sm:$0xff] %v1280
        %1603 = vst [vmem:[%s1506] ss:$4 sm:$0xff] %v1281
        %v1604 = vld.sshfl [vmem:[#allocation1] sm:$0xff pattern:$0x73625140]
        %v1605 = vld.sshfl [vmem:[#allocation1 + $0x20] sm:$0xff pattern:$0x73625140]
        %1606 = vst [vmem:[#allocation1] ss:$4 sm:$0xff] %v1282
        %v1607 = vld.sshfl [vmem:[#allocation1] sm:$0xff pattern:$0x73625140]
        %1608 = vst [vmem:[%s1500] ss:$4 sm:$0xff] %v1283
        %1609 = vst [vmem:[%s1502] ss:$4 sm:$0xff] %v1284
        %1610 = vst [vmem:[%s1504] ss:$4 sm:$0xff] %v1285
        %1611 = vst [vmem:[%s1506] ss:$4 sm:$0xff] %v1286
        %v1612 = vld.sshfl [vmem:[#allocation1 + $0x20] sm:$0xff pattern:$0x73625140]
        %1613 = vst [vmem:[#allocation1] ss:$4 sm:$0xff] %v1287
        %1614 = vst [vmem:[%s1494] ss:$4 sm:$0xff] %v1288
        %1615 = vst [vmem:[%s1496] ss:$4 sm:$0xff] %v1289
        %1616 = vst [vmem:[%s1498] ss:$4 sm:$0xff] %v1290
        %1617 = vst [vmem:[%s1500] ss:$4 sm:$0xff] %v1291
        %v1618 = vld.sshfl [vmem:[#allocation1] sm:$0xff pattern:$0x73625140]
        %v1619 = vld.sshfl [vmem:[#allocation1 + $0x20] sm:$0xff pattern:$0x73625140]
        %v1650 = vsel %vm1373, %v1508, 0.0
        %v1651 = vsel %vm1374, %v1509, 0.0
        %v1652 = vsel %vm1375, %v1511, 0.0
        %v1653 = vsel %vm1376, %v1516, 0.0
        %v1654 = vsel %vm1377, %v1522, 0.0
        %v1655 = vsel %vm1378, %v1523, 0.0
        %v1656 = vsel %vm1379, %v1532, 0.0
        %v1657 = vsel %vm1380, %v1533, 0.0
        %v1658 = vsel %vm1381, %v1535, 0.0
        %v1659 = vsel %vm1382, %v1540, 0.0
        %v1660 = vsel %vm1383, %v1546, 0.0
        %v1661 = vsel %vm1384, %v1547, 0.0
        %v1662 = vsel %vm1385, %v1556, 0.0
        %v1663 = vsel %vm1386, %v1557, 0.0
        %v1664 = vsel %vm1387, %v1559, 0.0
        %v1665 = vsel %vm1388, %v1564, 0.0
        %v1666 = vsel %vm1389, %v1570, 0.0
        %v1667 = vsel %vm1390, %v1571, 0.0
        %v1668 = vsel %vm1391, %v1580, 0.0
        %v1669 = vsel %vm1392, %v1581, 0.0
        %v1670 = vsel %vm1393, %v1583, 0.0
        %v1671 = vsel %vm1394, %v1588, 0.0
        %v1672 = vsel %vm1395, %v1594, 0.0
        %v1673 = vsel %vm1396, %v1595, 0.0
        %v1674 = vsel %vm1397, %v1604, 0.0
        %v1675 = vsel %vm1398, %v1605, 0.0
        %v1676 = vsel %vm1399, %v1607, 0.0
        %v1677 = vsel %vm1400, %v1612, 0.0
        %v1678 = vsel %vm1401, %v1618, 0.0
        %v1679 = vsel %vm1402, %v1619, 0.0
        %v1680 = vpack.c.bf16 %v1650, %v1650
        %v1681 = vpack.c.bf16 %v1651, %v1651
        %v1682 = vpack.c.bf16 %v1652, %v1652
        %v1683 = vpack.c.bf16 %v1653, %v1653
        %v1684 = vpack.c.bf16 %v1654, %v1654
        %v1685 = vpack.c.bf16 %v1655, %v1655
        %v1686 = vpack.c.bf16 %v1656, %v1656
        %v1687 = vpack.c.bf16 %v1657, %v1657
        %v1688 = vpack.c.bf16 %v1658, %v1658
        %v1689 = vpack.c.bf16 %v1659, %v1659
        %v1690 = vpack.c.bf16 %v1660, %v1660
        %v1691 = vpack.c.bf16 %v1661, %v1661
        %v1692 = vpack.c.bf16 %v1662, %v1662
        %v1693 = vpack.c.bf16 %v1663, %v1663
        %v1694 = vpack.c.bf16 %v1664, %v1664
        %v1695 = vpack.c.bf16 %v1665, %v1665
        %v1696 = vpack.c.bf16 %v1666, %v1666
        %v1697 = vpack.c.bf16 %v1667, %v1667
        %v1698 = vpack.c.bf16 %v1668, %v1668
        %v1699 = vpack.c.bf16 %v1669, %v1669
        %v1700 = vpack.c.bf16 %v1670, %v1670
        %v1701 = vpack.c.bf16 %v1671, %v1671
        %v1702 = vpack.c.bf16 %v1672, %v1672
        %v1703 = vpack.c.bf16 %v1673, %v1673
        %v1704 = vpack.c.bf16 %v1674, %v1674
        %v1705 = vpack.c.bf16 %v1675, %v1675
        %v1706 = vpack.c.bf16 %v1676, %v1676
        %v1707 = vpack.c.bf16 %v1677, %v1677
        %v1708 = vpack.c.bf16 %v1678, %v1678
        %v1709 = vpack.c.bf16 %v1679, %v1679
        %vm1710 = vcmask 519168
        %1711 = vst.msk [vmem:[#allocation2] sm:$0xf] %vm1710, %v1680
        %1712 = vst.msk [vmem:[#allocation2 + $0x4] sm:$0xf] %vm1710, %v1681
        %vm1713 = vcmask 516096
        %1714 = vst.msk [vmem:[#allocation2 + $0x8] sm:$0x1] %vm1713, %v1682
        %1715 = vst.msk [vmem:[#allocation2 + $0xc] sm:$0xf] %vm1710, %v1683
        %1716 = vst.msk [vmem:[#allocation2 + $0x10] sm:$0xf] %vm1710, %v1684
        %1717 = vst.msk [vmem:[#allocation2 + $0x14] sm:$0x1] %vm1713, %v1685
        %1718 = vst.msk [vmem:[#allocation2 + $0x18] sm:$0xf] %vm1710, %v1686
        %1719 = vst.msk [vmem:[#allocation2 + $0x1c] sm:$0xf] %vm1710, %v1687
        %1720 = vst.msk [vmem:[#allocation2 + $0x20] sm:$0x1] %vm1713, %v1688
        %1721 = vst.msk [vmem:[#allocation2 + $0x24] sm:$0xf] %vm1710, %v1689
        %1722 = vst.msk [vmem:[#allocation2 + $0x28] sm:$0xf] %vm1710, %v1690
        %1723 = vst.msk [vmem:[#allocation2 + $0x2c] sm:$0x1] %vm1713, %v1691
        %1724 = vst.msk [vmem:[#allocation2 + $0x30] sm:$0xf] %vm1710, %v1692
        %1725 = vst.msk [vmem:[#allocation2 + $0x34] sm:$0xf] %vm1710, %v1693
        %1726 = vst.msk [vmem:[#allocation2 + $0x38] sm:$0x1] %vm1713, %v1694
        %1727 = vst.msk [vmem:[#allocation2 + $0x3c] sm:$0xf] %vm1710, %v1695
        %1728 = vst.msk [vmem:[#allocation2 + $0x40] sm:$0xf] %vm1710, %v1696
        %1729 = vst.msk [vmem:[#allocation2 + $0x44] sm:$0x1] %vm1713, %v1697
        %1730 = vst.msk [vmem:[#allocation2 + $0x48] sm:$0xf] %vm1710, %v1698
        %1731 = vst.msk [vmem:[#allocation2 + $0x4c] sm:$0xf] %vm1710, %v1699
        %1732 = vst.msk [vmem:[#allocation2 + $0x50] sm:$0x1] %vm1713, %v1700
        %1733 = vst.msk [vmem:[#allocation2 + $0x54] sm:$0xf] %vm1710, %v1701
        %1734 = vst.msk [vmem:[#allocation2 + $0x58] sm:$0xf] %vm1710, %v1702
        %1735 = vst.msk [vmem:[#allocation2 + $0x5c] sm:$0x1] %vm1713, %v1703
        %1736 = vst.msk [vmem:[#allocation2 + $0x60] sm:$0xf] %vm1710, %v1704
        %1737 = vst.msk [vmem:[#allocation2 + $0x64] sm:$0xf] %vm1710, %v1705
        %1738 = vst.msk [vmem:[#allocation2 + $0x68] sm:$0x1] %vm1713, %v1706
        %1739 = vst.msk [vmem:[#allocation2 + $0x6c] sm:$0xf] %vm1710, %v1707
        %1740 = vst.msk [vmem:[#allocation2 + $0x70] sm:$0xf] %vm1710, %v1708
        %1741 = vst.msk [vmem:[#allocation2 + $0x74] sm:$0x1] %vm1713, %v1709
        %v1742 = vld [vmem:[#allocation2] sm:$0xf]
        %v1743 = vld [vmem:[#allocation2 + $0x4] sm:$0xf]
        %v1744 = vld [vmem:[#allocation2 + $0xc] sm:$0xf]
        %v1745 = vld [vmem:[#allocation2 + $0x10] sm:$0xf]
        %v1746 = vld [vmem:[#allocation2 + $0x18] sm:$0xf]
        %v1747 = vld [vmem:[#allocation2 + $0x1c] sm:$0xf]
        %v1748 = vld [vmem:[#allocation2 + $0x24] sm:$0xf]
        %v1749 = vld [vmem:[#allocation2 + $0x28] sm:$0xf]
        %v1750 = vld [vmem:[#allocation2 + $0x30] sm:$0xf]
        %v1751 = vld [vmem:[#allocation2 + $0x34] sm:$0xf]
        %v1752 = vld [vmem:[#allocation2 + $0x3c] sm:$0xf]
        %v1753 = vld [vmem:[#allocation2 + $0x40] sm:$0xf]
        %v1754 = vld [vmem:[#allocation2 + $0x48] sm:$0xf]
        %v1755 = vld [vmem:[#allocation2 + $0x4c] sm:$0xf]
        %v1756 = vld [vmem:[#allocation2 + $0x54] sm:$0xf]
        %v1757 = vld [vmem:[#allocation2 + $0x58] sm:$0xf]
        %v1758 = vld [vmem:[%s3] sm:$0xf]
        %v1759 = vld [vmem:[%s3 + $0x4] sm:$0xf]
        %v1760 = vld [vmem:[%s3 + $0x8] sm:$0xf]
        %v1761 = vld [vmem:[%s3 + $0xc] sm:$0xf]
        %v1762 = vld [vmem:[%s3 + $0x10] sm:$0xf]
        %v1763 = vld [vmem:[%s3 + $0x14] sm:$0xf]
        %v1764 = vld [vmem:[%s3 + $0x18] sm:$0xf]
        %v1765 = vld [vmem:[%s3 + $0x1c] sm:$0xf]
        %v1766 = vld [vmem:[#allocation2 + $0x8] sm:$0x1]
        %v1767 = vld [vmem:[#allocation2 + $0x14] sm:$0x1]
        %v1768 = vld [vmem:[#allocation2 + $0x20] sm:$0x1]
        %v1769 = vld [vmem:[#allocation2 + $0x2c] sm:$0x1]
        %v1770 = vld [vmem:[#allocation2 + $0x38] sm:$0x1]
        %v1771 = vld [vmem:[#allocation2 + $0x44] sm:$0x1]
        %v1772 = vld [vmem:[#allocation2 + $0x50] sm:$0x1]
        %v1773 = vld [vmem:[#allocation2 + $0x5c] sm:$0x1]
        %s1774 = scalar_lea.vmem %s3, 32
        %v1775 = vld [vmem:[%s1774] sm:$0xf]
        %v1776 = vld [vmem:[%s1774 + $0x4] sm:$0xf]
        %v1777 = vld [vmem:[%s1774 + $0x8] sm:$0xf]
        %v1778 = vld [vmem:[%s1774 + $0xc] sm:$0xf]
        %v1779 = vld [vmem:[%s1774 + $0x10] sm:$0xf]
        %v1780 = vld [vmem:[%s1774 + $0x14] sm:$0xf]
        %v1781 = vld [vmem:[%s1774 + $0x18] sm:$0xf]
        %v1782 = vld [vmem:[%s1774 + $0x1c] sm:$0xf]
        %vm1783 = vsmask.f32 3328
        %vm1784 = vsmask.f32 7440
        %vm1785 = vmor %vm1783, %vm1784
        %v1787 = vshrl.u32 %v1742, 16
        %v1789 = vrot.slane %v1787, 4
        %v1790 = vshll.u32 %v1742, 16
        %v1792 = vrot.slane %v1790, 5
        %v1793 = vor.u32 %v1789, %v1792
        %v1794 = vrot.slane %v1793, 4
        %v1796 = vshll.u32 %v1743, 16
        %v1798 = vrot.slane %v1796, 5
        %v1799 = vsel %vm1785, %v1794, %v1798
        %v1800 = vshrl.u32 %v1743, 16
        %v1802 = vrot.slane %v1800, 4
        %v1803 = vor.u32 %v1802, %v1798
        %v1804 = vrot.slane %v1803, 4
        %v1806 = vshll.u32 %v1766, 16
        %v1808 = vrot.slane %v1806, 5
        %v1809 = vsel %vm1785, %v1804, %v1808
        %v1811 = vshrl.u32 %v1744, 16
        %v1813 = vrot.slane %v1811, 4
        %v1814 = vshll.u32 %v1744, 16
        %v1816 = vrot.slane %v1814, 5
        %v1817 = vor.u32 %v1813, %v1816
        %v1818 = vrot.slane %v1817, 4
        %v1820 = vshll.u32 %v1745, 16
        %v1822 = vrot.slane %v1820, 5
        %v1823 = vsel %vm1785, %v1818, %v1822
        %v1824 = vshrl.u32 %v1745, 16
        %v1826 = vrot.slane %v1824, 4
        %v1827 = vor.u32 %v1826, %v1822
        %v1828 = vrot.slane %v1827, 4
        %v1830 = vshll.u32 %v1767, 16
        %v1832 = vrot.slane %v1830, 5
        %v1833 = vsel %vm1785, %v1828, %v1832
        %v1835 = vshrl.u32 %v1746, 16
        %v1837 = vrot.slane %v1835, 4
        %v1838 = vshll.u32 %v1746, 16
        %v1840 = vrot.slane %v1838, 5
        %v1841 = vor.u32 %v1837, %v1840
        %v1842 = vrot.slane %v1841, 4
        %v1844 = vshll.u32 %v1747, 16
        %v1846 = vrot.slane %v1844, 5
        %v1847 = vsel %vm1785, %v1842, %v1846
        %v1848 = vshrl.u32 %v1747, 16
        %v1850 = vrot.slane %v1848, 4
        %v1851 = vor.u32 %v1850, %v1846
        %v1852 = vrot.slane %v1851, 4
        %v1854 = vshll.u32 %v1768, 16
        %v1856 = vrot.slane %v1854, 5
        %v1857 = vsel %vm1785, %v1852, %v1856
        %v1859 = vshrl.u32 %v1748, 16
        %v1861 = vrot.slane %v1859, 4
        %v1862 = vshll.u32 %v1748, 16
        %v1864 = vrot.slane %v1862, 5
        %v1865 = vor.u32 %v1861, %v1864
        %v1866 = vrot.slane %v1865, 4
        %v1868 = vshll.u32 %v1749, 16
        %v1870 = vrot.slane %v1868, 5
        %v1871 = vsel %vm1785, %v1866, %v1870
        %v1872 = vshrl.u32 %v1749, 16
        %v1874 = vrot.slane %v1872, 4
        %v1875 = vor.u32 %v1874, %v1870
        %v1876 = vrot.slane %v1875, 4
        %v1878 = vshll.u32 %v1769, 16
        %v1880 = vrot.slane %v1878, 5
        %v1881 = vsel %vm1785, %v1876, %v1880
        %v1883 = vshrl.u32 %v1750, 16
        %v1885 = vrot.slane %v1883, 4
        %v1886 = vshll.u32 %v1750, 16
        %v1888 = vrot.slane %v1886, 5
        %v1889 = vor.u32 %v1885, %v1888
        %v1890 = vrot.slane %v1889, 4
        %v1892 = vshll.u32 %v1751, 16
        %v1894 = vrot.slane %v1892, 5
        %v1895 = vsel %vm1785, %v1890, %v1894
        %v1896 = vshrl.u32 %v1751, 16
        %v1898 = vrot.slane %v1896, 4
        %v1899 = vor.u32 %v1898, %v1894
        %v1900 = vrot.slane %v1899, 4
        %v1902 = vshll.u32 %v1770, 16
        %v1904 = vrot.slane %v1902, 5
        %v1905 = vsel %vm1785, %v1900, %v1904
        %v1907 = vshrl.u32 %v1752, 16
        %v1909 = vrot.slane %v1907, 4
        %v1910 = vshll.u32 %v1752, 16
        %v1912 = vrot.slane %v1910, 5
        %v1913 = vor.u32 %v1909, %v1912
        %v1914 = vrot.slane %v1913, 4
        %v1916 = vshll.u32 %v1753, 16
        %v1918 = vrot.slane %v1916, 5
        %v1919 = vsel %vm1785, %v1914, %v1918
        %v1920 = vshrl.u32 %v1753, 16
        %v1922 = vrot.slane %v1920, 4
        %v1923 = vor.u32 %v1922, %v1918
        %v1924 = vrot.slane %v1923, 4
        %v1926 = vshll.u32 %v1771, 16
        %v1928 = vrot.slane %v1926, 5
        %v1929 = vsel %vm1785, %v1924, %v1928
        %v1931 = vshrl.u32 %v1754, 16
        %v1933 = vrot.slane %v1931, 4
        %v1934 = vshll.u32 %v1754, 16
        %v1936 = vrot.slane %v1934, 5
        %v1937 = vor.u32 %v1933, %v1936
        %v1938 = vrot.slane %v1937, 4
        %v1940 = vshll.u32 %v1755, 16
        %v1942 = vrot.slane %v1940, 5
        %v1943 = vsel %vm1785, %v1938, %v1942
        %v1944 = vshrl.u32 %v1755, 16
        %v1946 = vrot.slane %v1944, 4
        %v1947 = vor.u32 %v1946, %v1942
        %v1948 = vrot.slane %v1947, 4
        %v1950 = vshll.u32 %v1772, 16
        %v1952 = vrot.slane %v1950, 5
        %v1953 = vsel %vm1785, %v1948, %v1952
        %v1955 = vshrl.u32 %v1756, 16
        %v1957 = vrot.slane %v1955, 4
        %v1958 = vshll.u32 %v1756, 16
        %v1960 = vrot.slane %v1958, 5
        %v1961 = vor.u32 %v1957, %v1960
        %v1962 = vrot.slane %v1961, 4
        %v1964 = vshll.u32 %v1757, 16
        %v1966 = vrot.slane %v1964, 5
        %v1967 = vsel %vm1785, %v1962, %v1966
        %v1968 = vshrl.u32 %v1757, 16
        %v1970 = vrot.slane %v1968, 4
        %v1971 = vor.u32 %v1970, %v1966
        %v1972 = vrot.slane %v1971, 4
        %v1974 = vshll.u32 %v1773, 16
        %v1976 = vrot.slane %v1974, 5
        %v1977 = vsel %vm1785, %v1972, %v1976
        %v1978 = vunpack.c.l.b16 %v1799
        %v1979 = vunpack.c.l.b16 %v1809
        %v1980 = vunpack.c.l.b16 %v1823
        %v1981 = vunpack.c.l.b16 %v1833
        %v1982 = vunpack.c.l.b16 %v1847
        %v1983 = vunpack.c.l.b16 %v1857
        %v1984 = vunpack.c.l.b16 %v1871
        %v1985 = vunpack.c.l.b16 %v1881
        %v1986 = vunpack.c.l.b16 %v1895
        %v1987 = vunpack.c.l.b16 %v1905
        %v1988 = vunpack.c.l.b16 %v1919
        %v1989 = vunpack.c.l.b16 %v1929
        %v1990 = vunpack.c.l.b16 %v1943
        %v1991 = vunpack.c.l.b16 %v1953
        %v1992 = vunpack.c.l.b16 %v1967
        %v1993 = vunpack.c.l.b16 %v1977
        %v1994 = vpack.c.b16 %v1979, %v1978
        %v1995 = vpack.c.b16 %v1981, %v1980
        %v1996 = vpack.c.b16 %v1983, %v1982
        %v1997 = vpack.c.b16 %v1985, %v1984
        %v1998 = vpack.c.b16 %v1987, %v1986
        %v1999 = vpack.c.b16 %v1989, %v1988
        %v2000 = vpack.c.b16 %v1991, %v1990
        %v2001 = vpack.c.b16 %v1993, %v1992
        %v2010 = vunpack.c.l.b16 %v1775
        %v2011 = vunpack.c.l.b16 %v1776
        %v2012 = vunpack.c.l.b16 %v1777
        %v2013 = vunpack.c.l.b16 %v1778
        %v2014 = vunpack.c.l.b16 %v1779
        %v2015 = vunpack.c.l.b16 %v1780
        %v2016 = vunpack.c.l.b16 %v1781
        %v2017 = vunpack.c.l.b16 %v1782
        %v2018 = vpack.c.b16 %v2011, %v2010
        %v2019 = vpack.c.b16 %v2013, %v2012
        %v2020 = vpack.c.b16 %v2015, %v2014
        %v2021 = vpack.c.b16 %v2017, %v2016
        %vm2026 = vcmask 523264
        %v2028 = vsel %vm2026, %v1994, 0
        %v2031 = vsel %vm2026, %v1995, 0
        %v2034 = vsel %vm2026, %v1996, 0
        %v2037 = vsel %vm2026, %v1997, 0
        %v2040 = vsel %vm2026, %v1998, 0
        %v2043 = vsel %vm2026, %v1999, 0
        %v2046 = vsel %vm2026, %v2000, 0
        %v2049 = vsel %vm2026, %v2001, 0
        %2051 = vmatpush.bf16.msra.mxu0 0
        %2052 = vmatpush.bf16.msra.mxu0 0
        %2053 = vmatpush.bf16.msra.mxu0 0
        %2054 = vmatpush.bf16.msra.mxu0 0
        %2055 = vmatpush.bf16.msra.mxu0 %v2021
        %2056 = vmatpush.bf16.msra.mxu0 %v2020
        %2057 = vmatpush.bf16.msra.mxu0 %v2019
        %2058 = vmatpush.bf16.msra.mxu0 %v2018
        %2059 = vmatmul.bf16.gmra.mxu0 %v2028
        %v2060 = vpop.f32.mrf.mxu0
        %v2061 = vadd.f32 0.0, %v2060
        %v2062 = vpop.f32.mrf.mxu0
        %v2063 = vadd.f32 0.0, %v2062
        %2064 = vmatmul.bf16.gmra.mxu0 %v2031
        %v2065 = vpop.f32.mrf.mxu0
        %v2066 = vadd.f32 0.0, %v2065
        %v2067 = vpop.f32.mrf.mxu0
        %v2068 = vadd.f32 0.0, %v2067
        %2069 = vmatmul.bf16.gmra.mxu0 %v2034
        %v2070 = vpop.f32.mrf.mxu0
        %v2071 = vadd.f32 0.0, %v2070
        %v2072 = vpop.f32.mrf.mxu0
        %v2073 = vadd.f32 0.0, %v2072
        %2074 = vmatmul.bf16.gmra.mxu0 %v2037
        %v2075 = vpop.f32.mrf.mxu0
        %v2076 = vadd.f32 0.0, %v2075
        %v2077 = vpop.f32.mrf.mxu0
        %v2078 = vadd.f32 0.0, %v2077
        %2079 = vmatmul.bf16.gmra.mxu0 %v2040
        %v2080 = vpop.f32.mrf.mxu0
        %v2081 = vadd.f32 0.0, %v2080
        %v2082 = vpop.f32.mrf.mxu0
        %v2083 = vadd.f32 0.0, %v2082
        %2084 = vmatmul.bf16.gmra.mxu0 %v2043
        %v2085 = vpop.f32.mrf.mxu0
        %v2086 = vadd.f32 0.0, %v2085
        %v2087 = vpop.f32.mrf.mxu0
        %v2088 = vadd.f32 0.0, %v2087
        %2089 = vmatmul.bf16.gmra.mxu0 %v2046
        %v2090 = vpop.f32.mrf.mxu0
        %v2091 = vadd.f32 0.0, %v2090
        %v2092 = vpop.f32.mrf.mxu0
        %v2093 = vadd.f32 0.0, %v2092
        %2094 = vmatmul.bf16.gmra.mxu0 %v2049
        %v2095 = vpop.f32.mrf.mxu0
        %v2096 = vadd.f32 0.0, %v2095
        %v2097 = vpop.f32.mrf.mxu0
        %v2098 = vadd.f32 0.0, %v2097
        %2099 = vdwg.mxu0
        %v2116 = vunpack.c.l.b16 %v1742
        %v2117 = vunpack.c.l.b16 %v1743
        %v2118 = vunpack.c.l.b16 %v1744
        %v2119 = vunpack.c.l.b16 %v1745
        %v2120 = vunpack.c.l.b16 %v1746
        %v2121 = vunpack.c.l.b16 %v1747
        %v2122 = vunpack.c.l.b16 %v1748
        %v2123 = vunpack.c.l.b16 %v1749
        %v2124 = vunpack.c.l.b16 %v1750
        %v2125 = vunpack.c.l.b16 %v1751
        %v2126 = vunpack.c.l.b16 %v1752
        %v2127 = vunpack.c.l.b16 %v1753
        %v2128 = vunpack.c.l.b16 %v1754
        %v2129 = vunpack.c.l.b16 %v1755
        %v2130 = vunpack.c.l.b16 %v1756
        %v2131 = vunpack.c.l.b16 %v1757
        %v2132 = vpack.c.b16 %v2117, %v2116
        %v2133 = vpack.c.b16 %v2119, %v2118
        %v2134 = vpack.c.b16 %v2121, %v2120
        %v2135 = vpack.c.b16 %v2123, %v2122
        %v2136 = vpack.c.b16 %v2125, %v2124
        %v2137 = vpack.c.b16 %v2127, %v2126
        %v2138 = vpack.c.b16 %v2129, %v2128
        %v2139 = vpack.c.b16 %v2131, %v2130
        %v2148 = vunpack.c.l.b16 %v1758
        %v2149 = vunpack.c.l.b16 %v1759
        %v2150 = vunpack.c.l.b16 %v1760
        %v2151 = vunpack.c.l.b16 %v1761
        %v2152 = vunpack.c.l.b16 %v1762
        %v2153 = vunpack.c.l.b16 %v1763
        %v2154 = vunpack.c.l.b16 %v1764
        %v2155 = vunpack.c.l.b16 %v1765
        %v2156 = vpack.c.b16 %v2149, %v2148
        %v2157 = vpack.c.b16 %v2151, %v2150
        %v2158 = vpack.c.b16 %v2153, %v2152
        %v2159 = vpack.c.b16 %v2155, %v2154
        %v2165 = vsel %vm2026, %v2132, 0
        %v2168 = vsel %vm2026, %v2133, 0
        %v2171 = vsel %vm2026, %v2134, 0
        %v2174 = vsel %vm2026, %v2135, 0
        %v2177 = vsel %vm2026, %v2136, 0
        %v2180 = vsel %vm2026, %v2137, 0
        %v2183 = vsel %vm2026, %v2138, 0
        %v2186 = vsel %vm2026, %v2139, 0
        %2188 = vmatpush.bf16.msra.mxu0 0
        %2189 = vmatpush.bf16.msra.mxu0 0
        %2190 = vmatpush.bf16.msra.mxu0 0
        %2191 = vmatpush.bf16.msra.mxu0 0
        %2192 = vmatpush.bf16.msra.mxu0 %v2159
        %2193 = vmatpush.bf16.msra.mxu0 %v2158
        %2194 = vmatpush.bf16.msra.mxu0 %v2157
        %2195 = vmatpush.bf16.msra.mxu0 %v2156
        %2196 = vmatmul.bf16.gmra.mxu0 %v2165
        %v2197 = vpop.f32.mrf.mxu0
        %v2198 = vadd.f32 %v2061, %v2197
        %v2199 = vpop.f32.mrf.mxu0
        %v2200 = vadd.f32 %v2063, %v2199
        %2201 = vmatmul.bf16.gmra.mxu0 %v2168
        %v2202 = vpop.f32.mrf.mxu0
        %v2203 = vadd.f32 %v2066, %v2202
        %v2204 = vpop.f32.mrf.mxu0
        %v2205 = vadd.f32 %v2068, %v2204
        %2206 = vmatmul.bf16.gmra.mxu0 %v2171
        %v2207 = vpop.f32.mrf.mxu0
        %v2208 = vadd.f32 %v2071, %v2207
        %v2209 = vpop.f32.mrf.mxu0
        %v2210 = vadd.f32 %v2073, %v2209
        %2211 = vmatmul.bf16.gmra.mxu0 %v2174
        %v2212 = vpop.f32.mrf.mxu0
        %v2213 = vadd.f32 %v2076, %v2212
        %v2214 = vpop.f32.mrf.mxu0
        %v2215 = vadd.f32 %v2078, %v2214
        %2216 = vmatmul.bf16.gmra.mxu0 %v2177
        %v2217 = vpop.f32.mrf.mxu0
        %v2218 = vadd.f32 %v2081, %v2217
        %v2219 = vpop.f32.mrf.mxu0
        %v2220 = vadd.f32 %v2083, %v2219
        %2221 = vmatmul.bf16.gmra.mxu0 %v2180
        %v2222 = vpop.f32.mrf.mxu0
        %v2223 = vadd.f32 %v2086, %v2222
        %v2224 = vpop.f32.mrf.mxu0
        %v2225 = vadd.f32 %v2088, %v2224
        %2226 = vmatmul.bf16.gmra.mxu0 %v2183
        %v2227 = vpop.f32.mrf.mxu0
        %v2228 = vadd.f32 %v2091, %v2227
        %v2229 = vpop.f32.mrf.mxu0
        %v2230 = vadd.f32 %v2093, %v2229
        %2231 = vmatmul.bf16.gmra.mxu0 %v2186
        %v2232 = vpop.f32.mrf.mxu0
        %v2233 = vadd.f32 %v2096, %v2232
        %v2234 = vpop.f32.mrf.mxu0
        %v2235 = vadd.f32 %v2098, %v2234
        %2236 = vdwg.mxu0
        %v2237 = vld [vmem:[#allocation2] sm:$0xe]
        %v2238 = vld [vmem:[#allocation2 + $0xc] sm:$0xe]
        %v2239 = vld [vmem:[#allocation2 + $0x18] sm:$0xe]
        %v2240 = vld [vmem:[#allocation2 + $0x24] sm:$0xe]
        %v2241 = vld [vmem:[#allocation2 + $0x30] sm:$0xe]
        %v2242 = vld [vmem:[#allocation2 + $0x3c] sm:$0xe]
        %v2243 = vld [vmem:[#allocation2 + $0x48] sm:$0xe]
        %v2244 = vld [vmem:[#allocation2 + $0x54] sm:$0xe]
        %s2245 = scalar_lea.vmem %s3, 64
        %v2246 = vld [vmem:[%s2245] sm:$0xf]
        %v2247 = vld [vmem:[%s2245 + $0x4] sm:$0xf]
        %v2248 = vld [vmem:[%s2245 + $0x8] sm:$0xf]
        %v2249 = vld [vmem:[%s2245 + $0xc] sm:$0xf]
        %v2250 = vld [vmem:[%s2245 + $0x10] sm:$0xf]
        %v2251 = vld [vmem:[%s2245 + $0x14] sm:$0xf]
        %v2252 = vld [vmem:[%s2245 + $0x18] sm:$0xf]
        %v2253 = vld [vmem:[%s2245 + $0x1c] sm:$0xf]
        %vm2270 = vcmask 1042432
        %vm2271 = vcmask 1046532
        %vm2272 = vmor %vm2270, %vm2271
        %v2273 = vrot.slane %v2237, 5
        %v2274 = vrot.slane %v2273, 4
        %v2275 = vrot.slane %v1743, 5
        %v2276 = vsel %vm2272, %v2274, %v2275
        %v2277 = vrot.slane %v2275, 4
        %v2278 = vrot.slane %v1766, 5
        %v2279 = vsel %vm2272, %v2277, %v2278
        %v2280 = vrot.slane %v2238, 5
        %v2281 = vrot.slane %v2280, 4
        %v2282 = vrot.slane %v1745, 5
        %v2283 = vsel %vm2272, %v2281, %v2282
        %v2284 = vrot.slane %v2282, 4
        %v2285 = vrot.slane %v1767, 5
        %v2286 = vsel %vm2272, %v2284, %v2285
        %v2287 = vrot.slane %v2239, 5
        %v2288 = vrot.slane %v2287, 4
        %v2289 = vrot.slane %v1747, 5
        %v2290 = vsel %vm2272, %v2288, %v2289
        %v2291 = vrot.slane %v2289, 4
        %v2292 = vrot.slane %v1768, 5
        %v2293 = vsel %vm2272, %v2291, %v2292
        %v2294 = vrot.slane %v2240, 5
        %v2295 = vrot.slane %v2294, 4
        %v2296 = vrot.slane %v1749, 5
        %v2297 = vsel %vm2272, %v2295, %v2296
        %v2298 = vrot.slane %v2296, 4
        %v2299 = vrot.slane %v1769, 5
        %v2300 = vsel %vm2272, %v2298, %v2299
        %v2301 = vrot.slane %v2241, 5
        %v2302 = vrot.slane %v2301, 4
        %v2303 = vrot.slane %v1751, 5
        %v2304 = vsel %vm2272, %v2302, %v2303
        %v2305 = vrot.slane %v2303, 4
        %v2306 = vrot.slane %v1770, 5
        %v2307 = vsel %vm2272, %v2305, %v2306
        %v2308 = vrot.slane %v2242, 5
        %v2309 = vrot.slane %v2308, 4
        %v2310 = vrot.slane %v1753, 5
        %v2311 = vsel %vm2272, %v2309, %v2310
        %v2312 = vrot.slane %v2310, 4
        %v2313 = vrot.slane %v1771, 5
        %v2314 = vsel %vm2272, %v2312, %v2313
        %v2315 = vrot.slane %v2243, 5
        %v2316 = vrot.slane %v2315, 4
        %v2317 = vrot.slane %v1755, 5
        %v2318 = vsel %vm2272, %v2316, %v2317
        %v2319 = vrot.slane %v2317, 4
        %v2320 = vrot.slane %v1772, 5
        %v2321 = vsel %vm2272, %v2319, %v2320
        %v2322 = vrot.slane %v2244, 5
        %v2323 = vrot.slane %v2322, 4
        %v2324 = vrot.slane %v1757, 5
        %v2325 = vsel %vm2272, %v2323, %v2324
        %v2326 = vrot.slane %v2324, 4
        %v2327 = vrot.slane %v1773, 5
        %v2328 = vsel %vm2272, %v2326, %v2327
        %v2329 = vunpack.c.l.b16 %v2276
        %v2330 = vunpack.c.l.b16 %v2279
        %v2331 = vunpack.c.l.b16 %v2283
        %v2332 = vunpack.c.l.b16 %v2286
        %v2333 = vunpack.c.l.b16 %v2290
        %v2334 = vunpack.c.l.b16 %v2293
        %v2335 = vunpack.c.l.b16 %v2297
        %v2336 = vunpack.c.l.b16 %v2300
        %v2337 = vunpack.c.l.b16 %v2304
        %v2338 = vunpack.c.l.b16 %v2307
        %v2339 = vunpack.c.l.b16 %v2311
        %v2340 = vunpack.c.l.b16 %v2314
        %v2341 = vunpack.c.l.b16 %v2318
        %v2342 = vunpack.c.l.b16 %v2321
        %v2343 = vunpack.c.l.b16 %v2325
        %v2344 = vunpack.c.l.b16 %v2328
        %v2345 = vpack.c.b16 %v2330, %v2329
        %v2346 = vpack.c.b16 %v2332, %v2331
        %v2347 = vpack.c.b16 %v2334, %v2333
        %v2348 = vpack.c.b16 %v2336, %v2335
        %v2349 = vpack.c.b16 %v2338, %v2337
        %v2350 = vpack.c.b16 %v2340, %v2339
        %v2351 = vpack.c.b16 %v2342, %v2341
        %v2352 = vpack.c.b16 %v2344, %v2343
        %v2361 = vunpack.c.l.b16 %v2246
        %v2362 = vunpack.c.l.b16 %v2247
        %v2363 = vunpack.c.l.b16 %v2248
        %v2364 = vunpack.c.l.b16 %v2249
        %v2365 = vunpack.c.l.b16 %v2250
        %v2366 = vunpack.c.l.b16 %v2251
        %v2367 = vunpack.c.l.b16 %v2252
        %v2368 = vunpack.c.l.b16 %v2253
        %v2369 = vpack.c.b16 %v2362, %v2361
        %v2370 = vpack.c.b16 %v2364, %v2363
        %v2371 = vpack.c.b16 %v2366, %v2365
        %v2372 = vpack.c.b16 %v2368, %v2367
        %v2378 = vsel %vm2026, %v2345, 0
        %v2381 = vsel %vm2026, %v2346, 0
        %v2384 = vsel %vm2026, %v2347, 0
        %v2387 = vsel %vm2026, %v2348, 0
        %v2390 = vsel %vm2026, %v2349, 0
        %v2393 = vsel %vm2026, %v2350, 0
        %v2396 = vsel %vm2026, %v2351, 0
        %v2399 = vsel %vm2026, %v2352, 0
        %2401 = vmatpush.bf16.msra.mxu0 0
        %2402 = vmatpush.bf16.msra.mxu0 0
        %2403 = vmatpush.bf16.msra.mxu0 0
        %2404 = vmatpush.bf16.msra.mxu0 0
        %2405 = vmatpush.bf16.msra.mxu0 %v2372
        %2406 = vmatpush.bf16.msra.mxu0 %v2371
        %2407 = vmatpush.bf16.msra.mxu0 %v2370
        %2408 = vmatpush.bf16.msra.mxu0 %v2369
        %2409 = vmatmul.bf16.gmra.mxu0 %v2378
        %v2410 = vpop.f32.mrf.mxu0
        %v2411 = vadd.f32 0.0, %v2410
        %v2412 = vpop.f32.mrf.mxu0
        %v2413 = vadd.f32 0.0, %v2412
        %2414 = vmatmul.bf16.gmra.mxu0 %v2381
        %v2415 = vpop.f32.mrf.mxu0
        %v2416 = vadd.f32 0.0, %v2415
        %v2417 = vpop.f32.mrf.mxu0
        %v2418 = vadd.f32 0.0, %v2417
        %2419 = vmatmul.bf16.gmra.mxu0 %v2384
        %v2420 = vpop.f32.mrf.mxu0
        %v2421 = vadd.f32 0.0, %v2420
        %v2422 = vpop.f32.mrf.mxu0
        %v2423 = vadd.f32 0.0, %v2422
        %2424 = vmatmul.bf16.gmra.mxu0 %v2387
        %v2425 = vpop.f32.mrf.mxu0
        %v2426 = vadd.f32 0.0, %v2425
        %v2427 = vpop.f32.mrf.mxu0
        %v2428 = vadd.f32 0.0, %v2427
        %2429 = vmatmul.bf16.gmra.mxu0 %v2390
        %v2430 = vpop.f32.mrf.mxu0
        %v2431 = vadd.f32 0.0, %v2430
        %v2432 = vpop.f32.mrf.mxu0
        %v2433 = vadd.f32 0.0, %v2432
        %2434 = vmatmul.bf16.gmra.mxu0 %v2393
        %v2435 = vpop.f32.mrf.mxu0
        %v2436 = vadd.f32 0.0, %v2435
        %v2437 = vpop.f32.mrf.mxu0
        %v2438 = vadd.f32 0.0, %v2437
        %2439 = vmatmul.bf16.gmra.mxu0 %v2396
        %v2440 = vpop.f32.mrf.mxu0
        %v2441 = vadd.f32 0.0, %v2440
        %v2442 = vpop.f32.mrf.mxu0
        %v2443 = vadd.f32 0.0, %v2442
        %2444 = vmatmul.bf16.gmra.mxu0 %v2399
        %v2445 = vpop.f32.mrf.mxu0
        %v2446 = vadd.f32 0.0, %v2445
        %v2447 = vpop.f32.mrf.mxu0
        %v2448 = vadd.f32 0.0, %v2447
        %2449 = vdwg.mxu0
        %v2450 = vadd.f32 %v2198, %v2411
        %v2451 = vadd.f32 %v2200, %v2413
        %v2452 = vadd.f32 %v2203, %v2416
        %v2453 = vadd.f32 %v2205, %v2418
        %v2454 = vadd.f32 %v2208, %v2421
        %v2455 = vadd.f32 %v2210, %v2423
        %v2456 = vadd.f32 %v2213, %v2426
        %v2457 = vadd.f32 %v2215, %v2428
        %v2458 = vadd.f32 %v2218, %v2431
        %v2459 = vadd.f32 %v2220, %v2433
        %v2460 = vadd.f32 %v2223, %v2436
        %v2461 = vadd.f32 %v2225, %v2438
        %v2462 = vadd.f32 %v2228, %v2441
        %v2463 = vadd.f32 %v2230, %v2443
        %v2464 = vadd.f32 %v2233, %v2446
        %v2465 = vadd.f32 %v2235, %v2448
        %s2466 = scalar_lea.vmem [#allocation2], 12
        %v2467 = vld [vmem:[%s2466] sm:$0xf]
        %v2468 = vld [vmem:[%s2466 + $0x4] sm:$0xf]
        %v2469 = vld [vmem:[%s2466 + $0xc] sm:$0xf]
        %v2470 = vld [vmem:[%s2466 + $0x10] sm:$0xf]
        %v2471 = vld [vmem:[%s2466 + $0x18] sm:$0xf]
        %v2472 = vld [vmem:[%s2466 + $0x1c] sm:$0xf]
        %v2473 = vld [vmem:[%s2466 + $0x24] sm:$0xf]
        %v2474 = vld [vmem:[%s2466 + $0x28] sm:$0xf]
        %v2475 = vld [vmem:[%s2466 + $0x30] sm:$0xf]
        %v2476 = vld [vmem:[%s2466 + $0x34] sm:$0xf]
        %v2477 = vld [vmem:[%s2466 + $0x3c] sm:$0xf]
        %v2478 = vld [vmem:[%s2466 + $0x40] sm:$0xf]
        %v2479 = vld [vmem:[%s2466 + $0x48] sm:$0xf]
        %v2480 = vld [vmem:[%s2466 + $0x4c] sm:$0xf]
        %v2481 = vld [vmem:[%s2466 + $0x54] sm:$0xf]
        %v2482 = vld [vmem:[%s2466 + $0x58] sm:$0xf]
        %s2483 = scalar_lea.vmem %s3, 96
        %v2484 = vld [vmem:[%s2483] sm:$0xf]
        %v2485 = vld [vmem:[%s2483 + $0x4] sm:$0xf]
        %v2486 = vld [vmem:[%s2483 + $0x8] sm:$0xf]
        %v2487 = vld [vmem:[%s2483 + $0xc] sm:$0xf]
        %v2488 = vld [vmem:[%s2483 + $0x10] sm:$0xf]
        %v2489 = vld [vmem:[%s2483 + $0x14] sm:$0xf]
        %v2490 = vld [vmem:[%s2483 + $0x18] sm:$0xf]
        %v2491 = vld [vmem:[%s2483 + $0x1c] sm:$0xf]
        %v2508 = vunpack.c.l.b16 %v2467
        %v2509 = vunpack.c.l.b16 %v2468
        %v2510 = vunpack.c.l.b16 %v2469
        %v2511 = vunpack.c.l.b16 %v2470
        %v2512 = vunpack.c.l.b16 %v2471
        %v2513 = vunpack.c.l.b16 %v2472
        %v2514 = vunpack.c.l.b16 %v2473
        %v2515 = vunpack.c.l.b16 %v2474
        %v2516 = vunpack.c.l.b16 %v2475
        %v2517 = vunpack.c.l.b16 %v2476
        %v2518 = vunpack.c.l.b16 %v2477
        %v2519 = vunpack.c.l.b16 %v2478
        %v2520 = vunpack.c.l.b16 %v2479
        %v2521 = vunpack.c.l.b16 %v2480
        %v2522 = vunpack.c.l.b16 %v2481
        %v2523 = vunpack.c.l.b16 %v2482
        %v2524 = vpack.c.b16 %v2509, %v2508
        %v2525 = vpack.c.b16 %v2511, %v2510
        %v2526 = vpack.c.b16 %v2513, %v2512
        %v2527 = vpack.c.b16 %v2515, %v2514
        %v2528 = vpack.c.b16 %v2517, %v2516
        %v2529 = vpack.c.b16 %v2519, %v2518
        %v2530 = vpack.c.b16 %v2521, %v2520
        %v2531 = vpack.c.b16 %v2523, %v2522
        %v2540 = vunpack.c.l.b16 %v2484
        %v2541 = vunpack.c.l.b16 %v2485
        %v2542 = vunpack.c.l.b16 %v2486
        %v2543 = vunpack.c.l.b16 %v2487
        %v2544 = vunpack.c.l.b16 %v2488
        %v2545 = vunpack.c.l.b16 %v2489
        %v2546 = vunpack.c.l.b16 %v2490
        %v2547 = vunpack.c.l.b16 %v2491
        %v2548 = vpack.c.b16 %v2541, %v2540
        %v2549 = vpack.c.b16 %v2543, %v2542
        %v2550 = vpack.c.b16 %v2545, %v2544
        %v2551 = vpack.c.b16 %v2547, %v2546
        %v2557 = vsel %vm2026, %v2524, 0
        %v2560 = vsel %vm2026, %v2525, 0
        %v2563 = vsel %vm2026, %v2526, 0
        %v2566 = vsel %vm2026, %v2527, 0
        %v2569 = vsel %vm2026, %v2528, 0
        %v2572 = vsel %vm2026, %v2529, 0
        %v2575 = vsel %vm2026, %v2530, 0
        %v2578 = vsel %vm2026, %v2531, 0
        %2580 = vmatpush.bf16.msra.mxu0 0
        %2581 = vmatpush.bf16.msra.mxu0 0
        %2582 = vmatpush.bf16.msra.mxu0 0
        %2583 = vmatpush.bf16.msra.mxu0 0
        %2584 = vmatpush.bf16.msra.mxu0 %v2551
        %2585 = vmatpush.bf16.msra.mxu0 %v2550
        %2586 = vmatpush.bf16.msra.mxu0 %v2549
        %2587 = vmatpush.bf16.msra.mxu0 %v2548
        %2588 = vmatmul.bf16.gmra.mxu0 %v2557
        %v2589 = vpop.f32.mrf.mxu0
        %v2590 = vadd.f32 0.0, %v2589
        %v2591 = vpop.f32.mrf.mxu0
        %v2592 = vadd.f32 0.0, %v2591
        %2593 = vmatmul.bf16.gmra.mxu0 %v2560
        %v2594 = vpop.f32.mrf.mxu0
        %v2595 = vadd.f32 0.0, %v2594
        %v2596 = vpop.f32.mrf.mxu0
        %v2597 = vadd.f32 0.0, %v2596
        %2598 = vmatmul.bf16.gmra.mxu0 %v2563
        %v2599 = vpop.f32.mrf.mxu0
        %v2600 = vadd.f32 0.0, %v2599
        %v2601 = vpop.f32.mrf.mxu0
        %v2602 = vadd.f32 0.0, %v2601
        %2603 = vmatmul.bf16.gmra.mxu0 %v2566
        %v2604 = vpop.f32.mrf.mxu0
        %v2605 = vadd.f32 0.0, %v2604
        %v2606 = vpop.f32.mrf.mxu0
        %v2607 = vadd.f32 0.0, %v2606
        %2608 = vmatmul.bf16.gmra.mxu0 %v2569
        %v2609 = vpop.f32.mrf.mxu0
        %v2610 = vadd.f32 0.0, %v2609
        %v2611 = vpop.f32.mrf.mxu0
        %v2612 = vadd.f32 0.0, %v2611
        %2613 = vmatmul.bf16.gmra.mxu0 %v2572
        %v2614 = vpop.f32.mrf.mxu0
        %v2615 = vadd.f32 0.0, %v2614
        %v2616 = vpop.f32.mrf.mxu0
        %v2617 = vadd.f32 0.0, %v2616
        %2618 = vmatmul.bf16.gmra.mxu0 %v2575
        %v2619 = vpop.f32.mrf.mxu0
        %v2620 = vadd.f32 0.0, %v2619
        %v2621 = vpop.f32.mrf.mxu0
        %v2622 = vadd.f32 0.0, %v2621
        %2623 = vmatmul.bf16.gmra.mxu0 %v2578
        %v2624 = vpop.f32.mrf.mxu0
        %v2625 = vadd.f32 0.0, %v2624
        %v2626 = vpop.f32.mrf.mxu0
        %v2627 = vadd.f32 0.0, %v2626
        %2628 = vdwg.mxu0
        %v2629 = vadd.f32 %v2450, %v2590
        %v2630 = vadd.f32 %v2451, %v2592
        %v2631 = vadd.f32 %v2452, %v2595
        %v2632 = vadd.f32 %v2453, %v2597
        %v2633 = vadd.f32 %v2454, %v2600
        %v2634 = vadd.f32 %v2455, %v2602
        %v2635 = vadd.f32 %v2456, %v2605
        %v2636 = vadd.f32 %v2457, %v2607
        %v2637 = vadd.f32 %v2458, %v2610
        %v2638 = vadd.f32 %v2459, %v2612
        %v2639 = vadd.f32 %v2460, %v2615
        %v2640 = vadd.f32 %v2461, %v2617
        %v2641 = vadd.f32 %v2462, %v2620
        %v2642 = vadd.f32 %v2463, %v2622
        %v2643 = vadd.f32 %v2464, %v2625
        %v2644 = vadd.f32 %v2465, %v2627
        %v2645 = vld [vmem:[%s2466] sm:$0xf]
        %v2646 = vld [vmem:[%s2466 + $0x4] sm:$0xf]
        %v2647 = vld [vmem:[%s2466 + $0x8] sm:$0x1]
        %v2648 = vld [vmem:[%s2466 + $0xc] sm:$0xf]
        %v2649 = vld [vmem:[%s2466 + $0x10] sm:$0xf]
        %v2650 = vld [vmem:[%s2466 + $0x14] sm:$0x1]
        %v2651 = vld [vmem:[%s2466 + $0x18] sm:$0xf]
        %v2652 = vld [vmem:[%s2466 + $0x1c] sm:$0xf]
        %v2653 = vld [vmem:[%s2466 + $0x20] sm:$0x1]
        %v2654 = vld [vmem:[%s2466 + $0x24] sm:$0xf]
        %v2655 = vld [vmem:[%s2466 + $0x28] sm:$0xf]
        %v2656 = vld [vmem:[%s2466 + $0x2c] sm:$0x1]
        %v2657 = vld [vmem:[%s2466 + $0x30] sm:$0xf]
        %v2658 = vld [vmem:[%s2466 + $0x34] sm:$0xf]
        %v2659 = vld [vmem:[%s2466 + $0x38] sm:$0x1]
        %v2660 = vld [vmem:[%s2466 + $0x3c] sm:$0xf]
        %v2661 = vld [vmem:[%s2466 + $0x40] sm:$0xf]
        %v2662 = vld [vmem:[%s2466 + $0x44] sm:$0x1]
        %v2663 = vld [vmem:[%s2466 + $0x48] sm:$0xf]
        %v2664 = vld [vmem:[%s2466 + $0x4c] sm:$0xf]
        %v2665 = vld [vmem:[%s2466 + $0x50] sm:$0x1]
        %v2666 = vld [vmem:[%s2466 + $0x54] sm:$0xf]
        %v2667 = vld [vmem:[%s2466 + $0x58] sm:$0xf]
        %v2668 = vld [vmem:[%s2466 + $0x5c] sm:$0x1]
        %s2669 = scalar_lea.vmem %s3, 128
        %v2670 = vld [vmem:[%s2669] sm:$0xf]
        %v2671 = vld [vmem:[%s2669 + $0x4] sm:$0xf]
        %v2672 = vld [vmem:[%s2669 + $0x8] sm:$0xf]
        %v2673 = vld [vmem:[%s2669 + $0xc] sm:$0xf]
        %v2674 = vld [vmem:[%s2669 + $0x10] sm:$0xf]
        %v2675 = vld [vmem:[%s2669 + $0x14] sm:$0xf]
        %v2676 = vld [vmem:[%s2669 + $0x18] sm:$0xf]
        %v2677 = vld [vmem:[%s2669 + $0x1c] sm:$0xf]
        %v2679 = vshrl.u32 %v2645, 16
        %v2681 = vrot.slane %v2679, 4
        %v2682 = vshll.u32 %v2645, 16
        %v2684 = vrot.slane %v2682, 5
        %v2685 = vor.u32 %v2681, %v2684
        %v2686 = vrot.slane %v2685, 4
        %v2688 = vshll.u32 %v2646, 16
        %v2690 = vrot.slane %v2688, 5
        %v2691 = vsel %vm1785, %v2686, %v2690
        %v2692 = vshrl.u32 %v2646, 16
        %v2694 = vrot.slane %v2692, 4
        %v2695 = vor.u32 %v2694, %v2690
        %v2696 = vrot.slane %v2695, 4
        %v2698 = vshll.u32 %v2647, 16
        %v2700 = vrot.slane %v2698, 5
        %v2701 = vsel %vm1785, %v2696, %v2700
        %v2703 = vshrl.u32 %v2648, 16
        %v2705 = vrot.slane %v2703, 4
        %v2706 = vshll.u32 %v2648, 16
        %v2708 = vrot.slane %v2706, 5
        %v2709 = vor.u32 %v2705, %v2708
        %v2710 = vrot.slane %v2709, 4
        %v2712 = vshll.u32 %v2649, 16
        %v2714 = vrot.slane %v2712, 5
        %v2715 = vsel %vm1785, %v2710, %v2714
        %v2716 = vshrl.u32 %v2649, 16
        %v2718 = vrot.slane %v2716, 4
        %v2719 = vor.u32 %v2718, %v2714
        %v2720 = vrot.slane %v2719, 4
        %v2722 = vshll.u32 %v2650, 16
        %v2724 = vrot.slane %v2722, 5
        %v2725 = vsel %vm1785, %v2720, %v2724
        %v2727 = vshrl.u32 %v2651, 16
        %v2729 = vrot.slane %v2727, 4
        %v2730 = vshll.u32 %v2651, 16
        %v2732 = vrot.slane %v2730, 5
        %v2733 = vor.u32 %v2729, %v2732
        %v2734 = vrot.slane %v2733, 4
        %v2736 = vshll.u32 %v2652, 16
        %v2738 = vrot.slane %v2736, 5
        %v2739 = vsel %vm1785, %v2734, %v2738
        %v2740 = vshrl.u32 %v2652, 16
        %v2742 = vrot.slane %v2740, 4
        %v2743 = vor.u32 %v2742, %v2738
        %v2744 = vrot.slane %v2743, 4
        %v2746 = vshll.u32 %v2653, 16
        %v2748 = vrot.slane %v2746, 5
        %v2749 = vsel %vm1785, %v2744, %v2748
        %v2751 = vshrl.u32 %v2654, 16
        %v2753 = vrot.slane %v2751, 4
        %v2754 = vshll.u32 %v2654, 16
        %v2756 = vrot.slane %v2754, 5
        %v2757 = vor.u32 %v2753, %v2756
        %v2758 = vrot.slane %v2757, 4
        %v2760 = vshll.u32 %v2655, 16
        %v2762 = vrot.slane %v2760, 5
        %v2763 = vsel %vm1785, %v2758, %v2762
        %v2764 = vshrl.u32 %v2655, 16
        %v2766 = vrot.slane %v2764, 4
        %v2767 = vor.u32 %v2766, %v2762
        %v2768 = vrot.slane %v2767, 4
        %v2770 = vshll.u32 %v2656, 16
        %v2772 = vrot.slane %v2770, 5
        %v2773 = vsel %vm1785, %v2768, %v2772
        %v2775 = vshrl.u32 %v2657, 16
        %v2777 = vrot.slane %v2775, 4
        %v2778 = vshll.u32 %v2657, 16
        %v2780 = vrot.slane %v2778, 5
        %v2781 = vor.u32 %v2777, %v2780
        %v2782 = vrot.slane %v2781, 4
        %v2784 = vshll.u32 %v2658, 16
        %v2786 = vrot.slane %v2784, 5
        %v2787 = vsel %vm1785, %v2782, %v2786
        %v2788 = vshrl.u32 %v2658, 16
        %v2790 = vrot.slane %v2788, 4
        %v2791 = vor.u32 %v2790, %v2786
        %v2792 = vrot.slane %v2791, 4
        %v2794 = vshll.u32 %v2659, 16
        %v2796 = vrot.slane %v2794, 5
        %v2797 = vsel %vm1785, %v2792, %v2796
        %v2799 = vshrl.u32 %v2660, 16
        %v2801 = vrot.slane %v2799, 4
        %v2802 = vshll.u32 %v2660, 16
        %v2804 = vrot.slane %v2802, 5
        %v2805 = vor.u32 %v2801, %v2804
        %v2806 = vrot.slane %v2805, 4
        %v2808 = vshll.u32 %v2661, 16
        %v2810 = vrot.slane %v2808, 5
        %v2811 = vsel %vm1785, %v2806, %v2810
        %v2812 = vshrl.u32 %v2661, 16
        %v2814 = vrot.slane %v2812, 4
        %v2815 = vor.u32 %v2814, %v2810
        %v2816 = vrot.slane %v2815, 4
        %v2818 = vshll.u32 %v2662, 16
        %v2820 = vrot.slane %v2818, 5
        %v2821 = vsel %vm1785, %v2816, %v2820
        %v2823 = vshrl.u32 %v2663, 16
        %v2825 = vrot.slane %v2823, 4
        %v2826 = vshll.u32 %v2663, 16
        %v2828 = vrot.slane %v2826, 5
        %v2829 = vor.u32 %v2825, %v2828
        %v2830 = vrot.slane %v2829, 4
        %v2832 = vshll.u32 %v2664, 16
        %v2834 = vrot.slane %v2832, 5
        %v2835 = vsel %vm1785, %v2830, %v2834
        %v2836 = vshrl.u32 %v2664, 16
        %v2838 = vrot.slane %v2836, 4
        %v2839 = vor.u32 %v2838, %v2834
        %v2840 = vrot.slane %v2839, 4
        %v2842 = vshll.u32 %v2665, 16
        %v2844 = vrot.slane %v2842, 5
        %v2845 = vsel %vm1785, %v2840, %v2844
        %v2847 = vshrl.u32 %v2666, 16
        %v2849 = vrot.slane %v2847, 4
        %v2850 = vshll.u32 %v2666, 16
        %v2852 = vrot.slane %v2850, 5
        %v2853 = vor.u32 %v2849, %v2852
        %v2854 = vrot.slane %v2853, 4
        %v2856 = vshll.u32 %v2667, 16
        %v2858 = vrot.slane %v2856, 5
        %v2859 = vsel %vm1785, %v2854, %v2858
        %v2860 = vshrl.u32 %v2667, 16
        %v2862 = vrot.slane %v2860, 4
        %v2863 = vor.u32 %v2862, %v2858
        %v2864 = vrot.slane %v2863, 4
        %v2866 = vshll.u32 %v2668, 16
        %v2868 = vrot.slane %v2866, 5
        %v2869 = vsel %vm1785, %v2864, %v2868
        %v2870 = vunpack.c.l.b16 %v2691
        %v2871 = vunpack.c.l.b16 %v2701
        %v2872 = vunpack.c.l.b16 %v2715
        %v2873 = vunpack.c.l.b16 %v2725
        %v2874 = vunpack.c.l.b16 %v2739
        %v2875 = vunpack.c.l.b16 %v2749
        %v2876 = vunpack.c.l.b16 %v2763
        %v2877 = vunpack.c.l.b16 %v2773
        %v2878 = vunpack.c.l.b16 %v2787
        %v2879 = vunpack.c.l.b16 %v2797
        %v2880 = vunpack.c.l.b16 %v2811
        %v2881 = vunpack.c.l.b16 %v2821
        %v2882 = vunpack.c.l.b16 %v2835
        %v2883 = vunpack.c.l.b16 %v2845
        %v2884 = vunpack.c.l.b16 %v2859
        %v2885 = vunpack.c.l.b16 %v2869
        %v2886 = vpack.c.b16 %v2871, %v2870
        %v2887 = vpack.c.b16 %v2873, %v2872
        %v2888 = vpack.c.b16 %v2875, %v2874
        %v2889 = vpack.c.b16 %v2877, %v2876
        %v2890 = vpack.c.b16 %v2879, %v2878
        %v2891 = vpack.c.b16 %v2881, %v2880
        %v2892 = vpack.c.b16 %v2883, %v2882
        %v2893 = vpack.c.b16 %v2885, %v2884
        %v2902 = vunpack.c.l.b16 %v2670
        %v2903 = vunpack.c.l.b16 %v2671
        %v2904 = vunpack.c.l.b16 %v2672
        %v2905 = vunpack.c.l.b16 %v2673
        %v2906 = vunpack.c.l.b16 %v2674
        %v2907 = vunpack.c.l.b16 %v2675
        %v2908 = vunpack.c.l.b16 %v2676
        %v2909 = vunpack.c.l.b16 %v2677
        %v2910 = vpack.c.b16 %v2903, %v2902
        %v2911 = vpack.c.b16 %v2905, %v2904
        %v2912 = vpack.c.b16 %v2907, %v2906
        %v2913 = vpack.c.b16 %v2909, %v2908
        %v2919 = vsel %vm2026, %v2886, 0
        %v2922 = vsel %vm2026, %v2887, 0
        %v2925 = vsel %vm2026, %v2888, 0
        %v2928 = vsel %vm2026, %v2889, 0
        %v2931 = vsel %vm2026, %v2890, 0
        %v2934 = vsel %vm2026, %v2891, 0
        %v2937 = vsel %vm2026, %v2892, 0
        %v2940 = vsel %vm2026, %v2893, 0
        %2942 = vmatpush.bf16.msra.mxu0 0
        %2943 = vmatpush.bf16.msra.mxu0 0
        %2944 = vmatpush.bf16.msra.mxu0 0
        %2945 = vmatpush.bf16.msra.mxu0 0
        %2946 = vmatpush.bf16.msra.mxu0 %v2913
        %2947 = vmatpush.bf16.msra.mxu0 %v2912
        %2948 = vmatpush.bf16.msra.mxu0 %v2911
        %2949 = vmatpush.bf16.msra.mxu0 %v2910
        %2950 = vmatmul.bf16.gmra.mxu0 %v2919
        %v2951 = vpop.f32.mrf.mxu0
        %v2952 = vadd.f32 0.0, %v2951
        %v2953 = vpop.f32.mrf.mxu0
        %v2954 = vadd.f32 0.0, %v2953
        %2955 = vmatmul.bf16.gmra.mxu0 %v2922
        %v2956 = vpop.f32.mrf.mxu0
        %v2957 = vadd.f32 0.0, %v2956
        %v2958 = vpop.f32.mrf.mxu0
        %v2959 = vadd.f32 0.0, %v2958
        %2960 = vmatmul.bf16.gmra.mxu0 %v2925
        %v2961 = vpop.f32.mrf.mxu0
        %v2962 = vadd.f32 0.0, %v2961
        %v2963 = vpop.f32.mrf.mxu0
        %v2964 = vadd.f32 0.0, %v2963
        %2965 = vmatmul.bf16.gmra.mxu0 %v2928
        %v2966 = vpop.f32.mrf.mxu0
        %v2967 = vadd.f32 0.0, %v2966
        %v2968 = vpop.f32.mrf.mxu0
        %v2969 = vadd.f32 0.0, %v2968
        %2970 = vmatmul.bf16.gmra.mxu0 %v2931
        %v2971 = vpop.f32.mrf.mxu0
        %v2972 = vadd.f32 0.0, %v2971
        %v2973 = vpop.f32.mrf.mxu0
        %v2974 = vadd.f32 0.0, %v2973
        %2975 = vmatmul.bf16.gmra.mxu0 %v2934
        %v2976 = vpop.f32.mrf.mxu0
        %v2977 = vadd.f32 0.0, %v2976
        %v2978 = vpop.f32.mrf.mxu0
        %v2979 = vadd.f32 0.0, %v2978
        %2980 = vmatmul.bf16.gmra.mxu0 %v2937
        %v2981 = vpop.f32.mrf.mxu0
        %v2982 = vadd.f32 0.0, %v2981
        %v2983 = vpop.f32.mrf.mxu0
        %v2984 = vadd.f32 0.0, %v2983
        %2985 = vmatmul.bf16.gmra.mxu0 %v2940
        %v2986 = vpop.f32.mrf.mxu0
        %v2987 = vadd.f32 0.0, %v2986
        %v2988 = vpop.f32.mrf.mxu0
        %v2989 = vadd.f32 0.0, %v2988
        %2990 = vdwg.mxu0
        %v2991 = vadd.f32 %v2629, %v2952
        %v2992 = vadd.f32 %v2630, %v2954
        %v2993 = vadd.f32 %v2631, %v2957
        %v2994 = vadd.f32 %v2632, %v2959
        %v2995 = vadd.f32 %v2633, %v2962
        %v2996 = vadd.f32 %v2634, %v2964
        %v2997 = vadd.f32 %v2635, %v2967
        %v2998 = vadd.f32 %v2636, %v2969
        %v2999 = vadd.f32 %v2637, %v2972
        %v3000 = vadd.f32 %v2638, %v2974
        %v3001 = vadd.f32 %v2639, %v2977
        %v3002 = vadd.f32 %v2640, %v2979
        %v3003 = vadd.f32 %v2641, %v2982
        %v3004 = vadd.f32 %v2642, %v2984
        %v3005 = vadd.f32 %v2643, %v2987
        %v3006 = vadd.f32 %v2644, %v2989
        %v3007 = vld [vmem:[%s2466] sm:$0xe]
        %v3008 = vld [vmem:[%s2466 + $0xc] sm:$0xe]
        %v3009 = vld [vmem:[%s2466 + $0x18] sm:$0xe]
        %v3010 = vld [vmem:[%s2466 + $0x24] sm:$0xe]
        %v3011 = vld [vmem:[%s2466 + $0x30] sm:$0xe]
        %v3012 = vld [vmem:[%s2466 + $0x3c] sm:$0xe]
        %v3013 = vld [vmem:[%s2466 + $0x48] sm:$0xe]
        %v3014 = vld [vmem:[%s2466 + $0x54] sm:$0xe]
        %s3015 = scalar_lea.vmem %s3, 160
        %v3016 = vld [vmem:[%s3015] sm:$0xf]
        %v3017 = vld [vmem:[%s3015 + $0x4] sm:$0xf]
        %v3018 = vld [vmem:[%s3015 + $0x8] sm:$0xf]
        %v3019 = vld [vmem:[%s3015 + $0xc] sm:$0xf]
        %v3020 = vld [vmem:[%s3015 + $0x10] sm:$0xf]
        %v3021 = vld [vmem:[%s3015 + $0x14] sm:$0xf]
        %v3022 = vld [vmem:[%s3015 + $0x18] sm:$0xf]
        %v3023 = vld [vmem:[%s3015 + $0x1c] sm:$0xf]
        %v3048 = vrot.slane %v3007, 5
        %v3049 = vrot.slane %v3048, 4
        %v3050 = vrot.slane %v2646, 5
        %v3051 = vsel %vm2272, %v3049, %v3050
        %v3052 = vrot.slane %v3050, 4
        %v3053 = vrot.slane %v2647, 5
        %v3054 = vsel %vm2272, %v3052, %v3053
        %v3055 = vrot.slane %v3008, 5
        %v3056 = vrot.slane %v3055, 4
        %v3057 = vrot.slane %v2649, 5
        %v3058 = vsel %vm2272, %v3056, %v3057
        %v3059 = vrot.slane %v3057, 4
        %v3060 = vrot.slane %v2650, 5
        %v3061 = vsel %vm2272, %v3059, %v3060
        %v3062 = vrot.slane %v3009, 5
        %v3063 = vrot.slane %v3062, 4
        %v3064 = vrot.slane %v2652, 5
        %v3065 = vsel %vm2272, %v3063, %v3064
        %v3066 = vrot.slane %v3064, 4
        %v3067 = vrot.slane %v2653, 5
        %v3068 = vsel %vm2272, %v3066, %v3067
        %v3069 = vrot.slane %v3010, 5
        %v3070 = vrot.slane %v3069, 4
        %v3071 = vrot.slane %v2655, 5
        %v3072 = vsel %vm2272, %v3070, %v3071
        %v3073 = vrot.slane %v3071, 4
        %v3074 = vrot.slane %v2656, 5
        %v3075 = vsel %vm2272, %v3073, %v3074
        %v3076 = vrot.slane %v3011, 5
        %v3077 = vrot.slane %v3076, 4
        %v3078 = vrot.slane %v2658, 5
        %v3079 = vsel %vm2272, %v3077, %v3078
        %v3080 = vrot.slane %v3078, 4
        %v3081 = vrot.slane %v2659, 5
        %v3082 = vsel %vm2272, %v3080, %v3081
        %v3083 = vrot.slane %v3012, 5
        %v3084 = vrot.slane %v3083, 4
        %v3085 = vrot.slane %v2661, 5
        %v3086 = vsel %vm2272, %v3084, %v3085
        %v3087 = vrot.slane %v3085, 4
        %v3088 = vrot.slane %v2662, 5
        %v3089 = vsel %vm2272, %v3087, %v3088
        %v3090 = vrot.slane %v3013, 5
        %v3091 = vrot.slane %v3090, 4
        %v3092 = vrot.slane %v2664, 5
        %v3093 = vsel %vm2272, %v3091, %v3092
        %v3094 = vrot.slane %v3092, 4
        %v3095 = vrot.slane %v2665, 5
        %v3096 = vsel %vm2272, %v3094, %v3095
        %v3097 = vrot.slane %v3014, 5
        %v3098 = vrot.slane %v3097, 4
        %v3099 = vrot.slane %v2667, 5
        %v3100 = vsel %vm2272, %v3098, %v3099
        %v3101 = vrot.slane %v3099, 4
        %v3102 = vrot.slane %v2668, 5
        %v3103 = vsel %vm2272, %v3101, %v3102
        %v3104 = vunpack.c.l.b16 %v3051
        %v3105 = vunpack.c.l.b16 %v3054
        %v3106 = vunpack.c.l.b16 %v3058
        %v3107 = vunpack.c.l.b16 %v3061
        %v3108 = vunpack.c.l.b16 %v3065
        %v3109 = vunpack.c.l.b16 %v3068
        %v3110 = vunpack.c.l.b16 %v3072
        %v3111 = vunpack.c.l.b16 %v3075
        %v3112 = vunpack.c.l.b16 %v3079
        %v3113 = vunpack.c.l.b16 %v3082
        %v3114 = vunpack.c.l.b16 %v3086
        %v3115 = vunpack.c.l.b16 %v3089
        %v3116 = vunpack.c.l.b16 %v3093
        %v3117 = vunpack.c.l.b16 %v3096
        %v3118 = vunpack.c.l.b16 %v3100
        %v3119 = vunpack.c.l.b16 %v3103
        %v3120 = vpack.c.b16 %v3105, %v3104
        %v3121 = vpack.c.b16 %v3107, %v3106
        %v3122 = vpack.c.b16 %v3109, %v3108
        %v3123 = vpack.c.b16 %v3111, %v3110
        %v3124 = vpack.c.b16 %v3113, %v3112
        %v3125 = vpack.c.b16 %v3115, %v3114
        %v3126 = vpack.c.b16 %v3117, %v3116
        %v3127 = vpack.c.b16 %v3119, %v3118
        %v3136 = vunpack.c.l.b16 %v3016
        %v3137 = vunpack.c.l.b16 %v3017
        %v3138 = vunpack.c.l.b16 %v3018
        %v3139 = vunpack.c.l.b16 %v3019
        %v3140 = vunpack.c.l.b16 %v3020
        %v3141 = vunpack.c.l.b16 %v3021
        %v3142 = vunpack.c.l.b16 %v3022
        %v3143 = vunpack.c.l.b16 %v3023
        %v3144 = vpack.c.b16 %v3137, %v3136
        %v3145 = vpack.c.b16 %v3139, %v3138
        %v3146 = vpack.c.b16 %v3141, %v3140
        %v3147 = vpack.c.b16 %v3143, %v3142
        %v3153 = vsel %vm2026, %v3120, 0
        %v3156 = vsel %vm2026, %v3121, 0
        %v3159 = vsel %vm2026, %v3122, 0
        %v3162 = vsel %vm2026, %v3123, 0
        %v3165 = vsel %vm2026, %v3124, 0
        %v3168 = vsel %vm2026, %v3125, 0
        %v3171 = vsel %vm2026, %v3126, 0
        %v3174 = vsel %vm2026, %v3127, 0
        %3176 = vmatpush.bf16.msra.mxu0 0
        %3177 = vmatpush.bf16.msra.mxu0 0
        %3178 = vmatpush.bf16.msra.mxu0 0
        %3179 = vmatpush.bf16.msra.mxu0 0
        %3180 = vmatpush.bf16.msra.mxu0 %v3147
        %3181 = vmatpush.bf16.msra.mxu0 %v3146
        %3182 = vmatpush.bf16.msra.mxu0 %v3145
        %3183 = vmatpush.bf16.msra.mxu0 %v3144
        %3184 = vmatmul.bf16.gmra.mxu0 %v3153
        %v3185 = vpop.f32.mrf.mxu0
        %v3186 = vadd.f32 0.0, %v3185
        %v3187 = vpop.f32.mrf.mxu0
        %v3188 = vadd.f32 0.0, %v3187
        %3189 = vmatmul.bf16.gmra.mxu0 %v3156
        %v3190 = vpop.f32.mrf.mxu0
        %v3191 = vadd.f32 0.0, %v3190
        %v3192 = vpop.f32.mrf.mxu0
        %v3193 = vadd.f32 0.0, %v3192
        %3194 = vmatmul.bf16.gmra.mxu0 %v3159
        %v3195 = vpop.f32.mrf.mxu0
        %v3196 = vadd.f32 0.0, %v3195
        %v3197 = vpop.f32.mrf.mxu0
        %v3198 = vadd.f32 0.0, %v3197
        %3199 = vmatmul.bf16.gmra.mxu0 %v3162
        %v3200 = vpop.f32.mrf.mxu0
        %v3201 = vadd.f32 0.0, %v3200
        %v3202 = vpop.f32.mrf.mxu0
        %v3203 = vadd.f32 0.0, %v3202
        %3204 = vmatmul.bf16.gmra.mxu0 %v3165
        %v3205 = vpop.f32.mrf.mxu0
        %v3206 = vadd.f32 0.0, %v3205
        %v3207 = vpop.f32.mrf.mxu0
        %v3208 = vadd.f32 0.0, %v3207
        %3209 = vmatmul.bf16.gmra.mxu0 %v3168
        %v3210 = vpop.f32.mrf.mxu0
        %v3211 = vadd.f32 0.0, %v3210
        %v3212 = vpop.f32.mrf.mxu0
        %v3213 = vadd.f32 0.0, %v3212
        %3214 = vmatmul.bf16.gmra.mxu0 %v3171
        %v3215 = vpop.f32.mrf.mxu0
        %v3216 = vadd.f32 0.0, %v3215
        %v3217 = vpop.f32.mrf.mxu0
        %v3218 = vadd.f32 0.0, %v3217
        %3219 = vmatmul.bf16.gmra.mxu0 %v3174
        %v3220 = vpop.f32.mrf.mxu0
        %v3221 = vadd.f32 0.0, %v3220
        %v3222 = vpop.f32.mrf.mxu0
        %v3223 = vadd.f32 0.0, %v3222
        %3224 = vdwg.mxu0
        %v3225 = vadd.f32 %v2991, %v3186
        %v3226 = vadd.f32 %v2992, %v3188
        %v3227 = vadd.f32 %v2993, %v3191
        %v3228 = vadd.f32 %v2994, %v3193
        %v3229 = vadd.f32 %v2995, %v3196
        %v3230 = vadd.f32 %v2996, %v3198
        %v3231 = vadd.f32 %v2997, %v3201
        %v3232 = vadd.f32 %v2998, %v3203
        %v3233 = vadd.f32 %v2999, %v3206
        %v3234 = vadd.f32 %v3000, %v3208
        %v3235 = vadd.f32 %v3001, %v3211
        %v3236 = vadd.f32 %v3002, %v3213
        %v3237 = vadd.f32 %v3003, %v3216
        %v3238 = vadd.f32 %v3004, %v3218
        %v3239 = vadd.f32 %v3005, %v3221
        %v3240 = vadd.f32 %v3006, %v3223
        %s3241 = scalar_lea.vmem [#allocation2], 24
        %v3242 = vld [vmem:[%s3241] sm:$0xf]
        %v3243 = vld [vmem:[%s3241 + $0x4] sm:$0xf]
        %v3244 = vld [vmem:[%s3241 + $0xc] sm:$0xf]
        %v3245 = vld [vmem:[%s3241 + $0x10] sm:$0xf]
        %v3246 = vld [vmem:[%s3241 + $0x18] sm:$0xf]
        %v3247 = vld [vmem:[%s3241 + $0x1c] sm:$0xf]
        %v3248 = vld [vmem:[%s3241 + $0x24] sm:$0xf]
        %v3249 = vld [vmem:[%s3241 + $0x28] sm:$0xf]
        %v3250 = vld [vmem:[%s3241 + $0x30] sm:$0xf]
        %v3251 = vld [vmem:[%s3241 + $0x34] sm:$0xf]
        %v3252 = vld [vmem:[%s3241 + $0x3c] sm:$0xf]
        %v3253 = vld [vmem:[%s3241 + $0x40] sm:$0xf]
        %v3254 = vld [vmem:[%s3241 + $0x48] sm:$0xf]
        %v3255 = vld [vmem:[%s3241 + $0x4c] sm:$0xf]
        %v3256 = vld [vmem:[%s3241 + $0x54] sm:$0xf]
        %v3257 = vld [vmem:[%s3241 + $0x58] sm:$0xf]
        %s3258 = scalar_lea.vmem %s3, 192
        %v3259 = vld [vmem:[%s3258] sm:$0xf]
        %v3260 = vld [vmem:[%s3258 + $0x4] sm:$0xf]
        %v3261 = vld [vmem:[%s3258 + $0x8] sm:$0xf]
        %v3262 = vld [vmem:[%s3258 + $0xc] sm:$0xf]
        %v3263 = vld [vmem:[%s3258 + $0x10] sm:$0xf]
        %v3264 = vld [vmem:[%s3258 + $0x14] sm:$0xf]
        %v3265 = vld [vmem:[%s3258 + $0x18] sm:$0xf]
        %v3266 = vld [vmem:[%s3258 + $0x1c] sm:$0xf]
        %v3283 = vunpack.c.l.b16 %v3242
        %v3284 = vunpack.c.l.b16 %v3243
        %v3285 = vunpack.c.l.b16 %v3244
        %v3286 = vunpack.c.l.b16 %v3245
        %v3287 = vunpack.c.l.b16 %v3246
        %v3288 = vunpack.c.l.b16 %v3247
        %v3289 = vunpack.c.l.b16 %v3248
        %v3290 = vunpack.c.l.b16 %v3249
        %v3291 = vunpack.c.l.b16 %v3250
        %v3292 = vunpack.c.l.b16 %v3251
        %v3293 = vunpack.c.l.b16 %v3252
        %v3294 = vunpack.c.l.b16 %v3253
        %v3295 = vunpack.c.l.b16 %v3254
        %v3296 = vunpack.c.l.b16 %v3255
        %v3297 = vunpack.c.l.b16 %v3256
        %v3298 = vunpack.c.l.b16 %v3257
        %v3299 = vpack.c.b16 %v3284, %v3283
        %v3300 = vpack.c.b16 %v3286, %v3285
        %v3301 = vpack.c.b16 %v3288, %v3287
        %v3302 = vpack.c.b16 %v3290, %v3289
        %v3303 = vpack.c.b16 %v3292, %v3291
        %v3304 = vpack.c.b16 %v3294, %v3293
        %v3305 = vpack.c.b16 %v3296, %v3295
        %v3306 = vpack.c.b16 %v3298, %v3297
        %v3315 = vunpack.c.l.b16 %v3259
        %v3316 = vunpack.c.l.b16 %v3260
        %v3317 = vunpack.c.l.b16 %v3261
        %v3318 = vunpack.c.l.b16 %v3262
        %v3319 = vunpack.c.l.b16 %v3263
        %v3320 = vunpack.c.l.b16 %v3264
        %v3321 = vunpack.c.l.b16 %v3265
        %v3322 = vunpack.c.l.b16 %v3266
        %v3323 = vpack.c.b16 %v3316, %v3315
        %v3324 = vpack.c.b16 %v3318, %v3317
        %v3325 = vpack.c.b16 %v3320, %v3319
        %v3326 = vpack.c.b16 %v3322, %v3321
        %v3332 = vsel %vm2026, %v3299, 0
        %v3335 = vsel %vm2026, %v3300, 0
        %v3338 = vsel %vm2026, %v3301, 0
        %v3341 = vsel %vm2026, %v3302, 0
        %v3344 = vsel %vm2026, %v3303, 0
        %v3347 = vsel %vm2026, %v3304, 0
        %v3350 = vsel %vm2026, %v3305, 0
        %v3353 = vsel %vm2026, %v3306, 0
        %3355 = vmatpush.bf16.msra.mxu0 0
        %3356 = vmatpush.bf16.msra.mxu0 0
        %3357 = vmatpush.bf16.msra.mxu0 0
        %3358 = vmatpush.bf16.msra.mxu0 0
        %3359 = vmatpush.bf16.msra.mxu0 %v3326
        %3360 = vmatpush.bf16.msra.mxu0 %v3325
        %3361 = vmatpush.bf16.msra.mxu0 %v3324
        %3362 = vmatpush.bf16.msra.mxu0 %v3323
        %3363 = vmatmul.bf16.gmra.mxu0 %v3332
        %v3364 = vpop.f32.mrf.mxu0
        %v3365 = vadd.f32 0.0, %v3364
        %v3366 = vpop.f32.mrf.mxu0
        %v3367 = vadd.f32 0.0, %v3366
        %3368 = vmatmul.bf16.gmra.mxu0 %v3335
        %v3369 = vpop.f32.mrf.mxu0
        %v3370 = vadd.f32 0.0, %v3369
        %v3371 = vpop.f32.mrf.mxu0
        %v3372 = vadd.f32 0.0, %v3371
        %3373 = vmatmul.bf16.gmra.mxu0 %v3338
        %v3374 = vpop.f32.mrf.mxu0
        %v3375 = vadd.f32 0.0, %v3374
        %v3376 = vpop.f32.mrf.mxu0
        %v3377 = vadd.f32 0.0, %v3376
        %3378 = vmatmul.bf16.gmra.mxu0 %v3341
        %v3379 = vpop.f32.mrf.mxu0
        %v3380 = vadd.f32 0.0, %v3379
        %v3381 = vpop.f32.mrf.mxu0
        %v3382 = vadd.f32 0.0, %v3381
        %3383 = vmatmul.bf16.gmra.mxu0 %v3344
        %v3384 = vpop.f32.mrf.mxu0
        %v3385 = vadd.f32 0.0, %v3384
        %v3386 = vpop.f32.mrf.mxu0
        %v3387 = vadd.f32 0.0, %v3386
        %3388 = vmatmul.bf16.gmra.mxu0 %v3347
        %v3389 = vpop.f32.mrf.mxu0
        %v3390 = vadd.f32 0.0, %v3389
        %v3391 = vpop.f32.mrf.mxu0
        %v3392 = vadd.f32 0.0, %v3391
        %3393 = vmatmul.bf16.gmra.mxu0 %v3350
        %v3394 = vpop.f32.mrf.mxu0
        %v3395 = vadd.f32 0.0, %v3394
        %v3396 = vpop.f32.mrf.mxu0
        %v3397 = vadd.f32 0.0, %v3396
        %3398 = vmatmul.bf16.gmra.mxu0 %v3353
        %v3399 = vpop.f32.mrf.mxu0
        %v3400 = vadd.f32 0.0, %v3399
        %v3401 = vpop.f32.mrf.mxu0
        %v3402 = vadd.f32 0.0, %v3401
        %3403 = vdwg.mxu0
        %v3404 = vadd.f32 %v3225, %v3365
        %v3405 = vadd.f32 %v3226, %v3367
        %v3406 = vadd.f32 %v3227, %v3370
        %v3407 = vadd.f32 %v3228, %v3372
        %v3408 = vadd.f32 %v3229, %v3375
        %v3409 = vadd.f32 %v3230, %v3377
        %v3410 = vadd.f32 %v3231, %v3380
        %v3411 = vadd.f32 %v3232, %v3382
        %v3412 = vadd.f32 %v3233, %v3385
        %v3413 = vadd.f32 %v3234, %v3387
        %v3414 = vadd.f32 %v3235, %v3390
        %v3415 = vadd.f32 %v3236, %v3392
        %v3416 = vadd.f32 %v3237, %v3395
        %v3417 = vadd.f32 %v3238, %v3397
        %v3418 = vadd.f32 %v3239, %v3400
        %v3419 = vadd.f32 %v3240, %v3402
        %v3420 = vld [vmem:[%s3241] sm:$0xf]
        %v3421 = vld [vmem:[%s3241 + $0x4] sm:$0xf]
        %v3422 = vld [vmem:[%s3241 + $0x8] sm:$0x1]
        %v3423 = vld [vmem:[%s3241 + $0xc] sm:$0xf]
        %v3424 = vld [vmem:[%s3241 + $0x10] sm:$0xf]
        %v3425 = vld [vmem:[%s3241 + $0x14] sm:$0x1]
        %v3426 = vld [vmem:[%s3241 + $0x18] sm:$0xf]
        %v3427 = vld [vmem:[%s3241 + $0x1c] sm:$0xf]
        %v3428 = vld [vmem:[%s3241 + $0x20] sm:$0x1]
        %v3429 = vld [vmem:[%s3241 + $0x24] sm:$0xf]
        %v3430 = vld [vmem:[%s3241 + $0x28] sm:$0xf]
        %v3431 = vld [vmem:[%s3241 + $0x2c] sm:$0x1]
        %v3432 = vld [vmem:[%s3241 + $0x30] sm:$0xf]
        %v3433 = vld [vmem:[%s3241 + $0x34] sm:$0xf]
        %v3434 = vld [vmem:[%s3241 + $0x38] sm:$0x1]
        %v3435 = vld [vmem:[%s3241 + $0x3c] sm:$0xf]
        %v3436 = vld [vmem:[%s3241 + $0x40] sm:$0xf]
        %v3437 = vld [vmem:[%s3241 + $0x44] sm:$0x1]
        %v3438 = vld [vmem:[%s3241 + $0x48] sm:$0xf]
        %v3439 = vld [vmem:[%s3241 + $0x4c] sm:$0xf]
        %v3440 = vld [vmem:[%s3241 + $0x50] sm:$0x1]
        %v3441 = vld [vmem:[%s3241 + $0x54] sm:$0xf]
        %v3442 = vld [vmem:[%s3241 + $0x58] sm:$0xf]
        %v3443 = vld [vmem:[%s3241 + $0x5c] sm:$0x1]
        %s3444 = scalar_lea.vmem %s3, 224
        %v3445 = vld [vmem:[%s3444] sm:$0xf]
        %v3446 = vld [vmem:[%s3444 + $0x4] sm:$0xf]
        %v3447 = vld [vmem:[%s3444 + $0x8] sm:$0xf]
        %v3448 = vld [vmem:[%s3444 + $0xc] sm:$0xf]
        %v3449 = vld [vmem:[%s3444 + $0x10] sm:$0xf]
        %v3450 = vld [vmem:[%s3444 + $0x14] sm:$0xf]
        %v3451 = vld [vmem:[%s3444 + $0x18] sm:$0xf]
        %v3452 = vld [vmem:[%s3444 + $0x1c] sm:$0xf]
        %v3454 = vshrl.u32 %v3420, 16
        %v3456 = vrot.slane %v3454, 4
        %v3457 = vshll.u32 %v3420, 16
        %v3459 = vrot.slane %v3457, 5
        %v3460 = vor.u32 %v3456, %v3459
        %v3461 = vrot.slane %v3460, 4
        %v3463 = vshll.u32 %v3421, 16
        %v3465 = vrot.slane %v3463, 5
        %v3466 = vsel %vm1785, %v3461, %v3465
        %v3467 = vshrl.u32 %v3421, 16
        %v3469 = vrot.slane %v3467, 4
        %v3470 = vor.u32 %v3469, %v3465
        %v3471 = vrot.slane %v3470, 4
        %v3473 = vshll.u32 %v3422, 16
        %v3475 = vrot.slane %v3473, 5
        %v3476 = vsel %vm1785, %v3471, %v3475
        %v3478 = vshrl.u32 %v3423, 16
        %v3480 = vrot.slane %v3478, 4
        %v3481 = vshll.u32 %v3423, 16
        %v3483 = vrot.slane %v3481, 5
        %v3484 = vor.u32 %v3480, %v3483
        %v3485 = vrot.slane %v3484, 4
        %v3487 = vshll.u32 %v3424, 16
        %v3489 = vrot.slane %v3487, 5
        %v3490 = vsel %vm1785, %v3485, %v3489
        %v3491 = vshrl.u32 %v3424, 16
        %v3493 = vrot.slane %v3491, 4
        %v3494 = vor.u32 %v3493, %v3489
        %v3495 = vrot.slane %v3494, 4
        %v3497 = vshll.u32 %v3425, 16
        %v3499 = vrot.slane %v3497, 5
        %v3500 = vsel %vm1785, %v3495, %v3499
        %v3502 = vshrl.u32 %v3426, 16
        %v3504 = vrot.slane %v3502, 4
        %v3505 = vshll.u32 %v3426, 16
        %v3507 = vrot.slane %v3505, 5
        %v3508 = vor.u32 %v3504, %v3507
        %v3509 = vrot.slane %v3508, 4
        %v3511 = vshll.u32 %v3427, 16
        %v3513 = vrot.slane %v3511, 5
        %v3514 = vsel %vm1785, %v3509, %v3513
        %v3515 = vshrl.u32 %v3427, 16
        %v3517 = vrot.slane %v3515, 4
        %v3518 = vor.u32 %v3517, %v3513
        %v3519 = vrot.slane %v3518, 4
        %v3521 = vshll.u32 %v3428, 16
        %v3523 = vrot.slane %v3521, 5
        %v3524 = vsel %vm1785, %v3519, %v3523
        %v3526 = vshrl.u32 %v3429, 16
        %v3528 = vrot.slane %v3526, 4
        %v3529 = vshll.u32 %v3429, 16
        %v3531 = vrot.slane %v3529, 5
        %v3532 = vor.u32 %v3528, %v3531
        %v3533 = vrot.slane %v3532, 4
        %v3535 = vshll.u32 %v3430, 16
        %v3537 = vrot.slane %v3535, 5
        %v3538 = vsel %vm1785, %v3533, %v3537
        %v3539 = vshrl.u32 %v3430, 16
        %v3541 = vrot.slane %v3539, 4
        %v3542 = vor.u32 %v3541, %v3537
        %v3543 = vrot.slane %v3542, 4
        %v3545 = vshll.u32 %v3431, 16
        %v3547 = vrot.slane %v3545, 5
        %v3548 = vsel %vm1785, %v3543, %v3547
        %v3550 = vshrl.u32 %v3432, 16
        %v3552 = vrot.slane %v3550, 4
        %v3553 = vshll.u32 %v3432, 16
        %v3555 = vrot.slane %v3553, 5
        %v3556 = vor.u32 %v3552, %v3555
        %v3557 = vrot.slane %v3556, 4
        %v3559 = vshll.u32 %v3433, 16
        %v3561 = vrot.slane %v3559, 5
        %v3562 = vsel %vm1785, %v3557, %v3561
        %v3563 = vshrl.u32 %v3433, 16
        %v3565 = vrot.slane %v3563, 4
        %v3566 = vor.u32 %v3565, %v3561
        %v3567 = vrot.slane %v3566, 4
        %v3569 = vshll.u32 %v3434, 16
        %v3571 = vrot.slane %v3569, 5
        %v3572 = vsel %vm1785, %v3567, %v3571
        %v3574 = vshrl.u32 %v3435, 16
        %v3576 = vrot.slane %v3574, 4
        %v3577 = vshll.u32 %v3435, 16
        %v3579 = vrot.slane %v3577, 5
        %v3580 = vor.u32 %v3576, %v3579
        %v3581 = vrot.slane %v3580, 4
        %v3583 = vshll.u32 %v3436, 16
        %v3585 = vrot.slane %v3583, 5
        %v3586 = vsel %vm1785, %v3581, %v3585
        %v3587 = vshrl.u32 %v3436, 16
        %v3589 = vrot.slane %v3587, 4
        %v3590 = vor.u32 %v3589, %v3585
        %v3591 = vrot.slane %v3590, 4
        %v3593 = vshll.u32 %v3437, 16
        %v3595 = vrot.slane %v3593, 5
        %v3596 = vsel %vm1785, %v3591, %v3595
        %v3598 = vshrl.u32 %v3438, 16
        %v3600 = vrot.slane %v3598, 4
        %v3601 = vshll.u32 %v3438, 16
        %v3603 = vrot.slane %v3601, 5
        %v3604 = vor.u32 %v3600, %v3603
        %v3605 = vrot.slane %v3604, 4
        %v3607 = vshll.u32 %v3439, 16
        %v3609 = vrot.slane %v3607, 5
        %v3610 = vsel %vm1785, %v3605, %v3609
        %v3611 = vshrl.u32 %v3439, 16
        %v3613 = vrot.slane %v3611, 4
        %v3614 = vor.u32 %v3613, %v3609
        %v3615 = vrot.slane %v3614, 4
        %v3617 = vshll.u32 %v3440, 16
        %v3619 = vrot.slane %v3617, 5
        %v3620 = vsel %vm1785, %v3615, %v3619
        %v3622 = vshrl.u32 %v3441, 16
        %v3624 = vrot.slane %v3622, 4
        %v3625 = vshll.u32 %v3441, 16
        %v3627 = vrot.slane %v3625, 5
        %v3628 = vor.u32 %v3624, %v3627
        %v3629 = vrot.slane %v3628, 4
        %v3631 = vshll.u32 %v3442, 16
        %v3633 = vrot.slane %v3631, 5
        %v3634 = vsel %vm1785, %v3629, %v3633
        %v3635 = vshrl.u32 %v3442, 16
        %v3637 = vrot.slane %v3635, 4
        %v3638 = vor.u32 %v3637, %v3633
        %v3639 = vrot.slane %v3638, 4
        %v3641 = vshll.u32 %v3443, 16
        %v3643 = vrot.slane %v3641, 5
        %v3644 = vsel %vm1785, %v3639, %v3643
        %v3645 = vunpack.c.l.b16 %v3466
        %v3646 = vunpack.c.l.b16 %v3476
        %v3647 = vunpack.c.l.b16 %v3490
        %v3648 = vunpack.c.l.b16 %v3500
        %v3649 = vunpack.c.l.b16 %v3514
        %v3650 = vunpack.c.l.b16 %v3524
        %v3651 = vunpack.c.l.b16 %v3538
        %v3652 = vunpack.c.l.b16 %v3548
        %v3653 = vunpack.c.l.b16 %v3562
        %v3654 = vunpack.c.l.b16 %v3572
        %v3655 = vunpack.c.l.b16 %v3586
        %v3656 = vunpack.c.l.b16 %v3596
        %v3657 = vunpack.c.l.b16 %v3610
        %v3658 = vunpack.c.l.b16 %v3620
        %v3659 = vunpack.c.l.b16 %v3634
        %v3660 = vunpack.c.l.b16 %v3644
        %v3661 = vpack.c.b16 %v3646, %v3645
        %v3662 = vpack.c.b16 %v3648, %v3647
        %v3663 = vpack.c.b16 %v3650, %v3649
        %v3664 = vpack.c.b16 %v3652, %v3651
        %v3665 = vpack.c.b16 %v3654, %v3653
        %v3666 = vpack.c.b16 %v3656, %v3655
        %v3667 = vpack.c.b16 %v3658, %v3657
        %v3668 = vpack.c.b16 %v3660, %v3659
        %v3677 = vunpack.c.l.b16 %v3445
        %v3678 = vunpack.c.l.b16 %v3446
        %v3679 = vunpack.c.l.b16 %v3447
        %v3680 = vunpack.c.l.b16 %v3448
        %v3681 = vunpack.c.l.b16 %v3449
        %v3682 = vunpack.c.l.b16 %v3450
        %v3683 = vunpack.c.l.b16 %v3451
        %v3684 = vunpack.c.l.b16 %v3452
        %v3685 = vpack.c.b16 %v3678, %v3677
        %v3686 = vpack.c.b16 %v3680, %v3679
        %v3687 = vpack.c.b16 %v3682, %v3681
        %v3688 = vpack.c.b16 %v3684, %v3683
        %v3694 = vsel %vm2026, %v3661, 0
        %v3697 = vsel %vm2026, %v3662, 0
        %v3700 = vsel %vm2026, %v3663, 0
        %v3703 = vsel %vm2026, %v3664, 0
        %v3706 = vsel %vm2026, %v3665, 0
        %v3709 = vsel %vm2026, %v3666, 0
        %v3712 = vsel %vm2026, %v3667, 0
        %v3715 = vsel %vm2026, %v3668, 0
        %3717 = vmatpush.bf16.msra.mxu0 0
        %3718 = vmatpush.bf16.msra.mxu0 0
        %3719 = vmatpush.bf16.msra.mxu0 0
        %3720 = vmatpush.bf16.msra.mxu0 0
        %3721 = vmatpush.bf16.msra.mxu0 %v3688
        %3722 = vmatpush.bf16.msra.mxu0 %v3687
        %3723 = vmatpush.bf16.msra.mxu0 %v3686
        %3724 = vmatpush.bf16.msra.mxu0 %v3685
        %3725 = vmatmul.bf16.gmra.mxu0 %v3694
        %v3726 = vpop.f32.mrf.mxu0
        %v3727 = vadd.f32 0.0, %v3726
        %v3728 = vpop.f32.mrf.mxu0
        %v3729 = vadd.f32 0.0, %v3728
        %3730 = vmatmul.bf16.gmra.mxu0 %v3697
        %v3731 = vpop.f32.mrf.mxu0
        %v3732 = vadd.f32 0.0, %v3731
        %v3733 = vpop.f32.mrf.mxu0
        %v3734 = vadd.f32 0.0, %v3733
        %3735 = vmatmul.bf16.gmra.mxu0 %v3700
        %v3736 = vpop.f32.mrf.mxu0
        %v3737 = vadd.f32 0.0, %v3736
        %v3738 = vpop.f32.mrf.mxu0
        %v3739 = vadd.f32 0.0, %v3738
        %3740 = vmatmul.bf16.gmra.mxu0 %v3703
        %v3741 = vpop.f32.mrf.mxu0
        %v3742 = vadd.f32 0.0, %v3741
        %v3743 = vpop.f32.mrf.mxu0
        %v3744 = vadd.f32 0.0, %v3743
        %3745 = vmatmul.bf16.gmra.mxu0 %v3706
        %v3746 = vpop.f32.mrf.mxu0
        %v3747 = vadd.f32 0.0, %v3746
        %v3748 = vpop.f32.mrf.mxu0
        %v3749 = vadd.f32 0.0, %v3748
        %3750 = vmatmul.bf16.gmra.mxu0 %v3709
        %v3751 = vpop.f32.mrf.mxu0
        %v3752 = vadd.f32 0.0, %v3751
        %v3753 = vpop.f32.mrf.mxu0
        %v3754 = vadd.f32 0.0, %v3753
        %3755 = vmatmul.bf16.gmra.mxu0 %v3712
        %v3756 = vpop.f32.mrf.mxu0
        %v3757 = vadd.f32 0.0, %v3756
        %v3758 = vpop.f32.mrf.mxu0
        %v3759 = vadd.f32 0.0, %v3758
        %3760 = vmatmul.bf16.gmra.mxu0 %v3715
        %v3761 = vpop.f32.mrf.mxu0
        %v3762 = vadd.f32 0.0, %v3761
        %v3763 = vpop.f32.mrf.mxu0
        %v3764 = vadd.f32 0.0, %v3763
        %3765 = vdwg.mxu0
        %v3766 = vadd.f32 %v3404, %v3727
        %v3767 = vadd.f32 %v3405, %v3729
        %v3768 = vadd.f32 %v3406, %v3732
        %v3769 = vadd.f32 %v3407, %v3734
        %v3770 = vadd.f32 %v3408, %v3737
        %v3771 = vadd.f32 %v3409, %v3739
        %v3772 = vadd.f32 %v3410, %v3742
        %v3773 = vadd.f32 %v3411, %v3744
        %v3774 = vadd.f32 %v3412, %v3747
        %v3775 = vadd.f32 %v3413, %v3749
        %v3776 = vadd.f32 %v3414, %v3752
        %v3777 = vadd.f32 %v3415, %v3754
        %v3778 = vadd.f32 %v3416, %v3757
        %v3779 = vadd.f32 %v3417, %v3759
        %v3780 = vadd.f32 %v3418, %v3762
        %v3781 = vadd.f32 %v3419, %v3764
        %v3782 = vld [vmem:[%s3241] sm:$0xe]
        %v3783 = vld [vmem:[%s3241 + $0xc] sm:$0xe]
        %v3784 = vld [vmem:[%s3241 + $0x18] sm:$0xe]
        %v3785 = vld [vmem:[%s3241 + $0x24] sm:$0xe]
        %v3786 = vld [vmem:[%s3241 + $0x30] sm:$0xe]
        %v3787 = vld [vmem:[%s3241 + $0x3c] sm:$0xe]
        %v3788 = vld [vmem:[%s3241 + $0x48] sm:$0xe]
        %v3789 = vld [vmem:[%s3241 + $0x54] sm:$0xe]
        %s3790 = scalar_lea.vmem %s3, 256
        %v3791 = vld [vmem:[%s3790] sm:$0xf]
        %v3792 = vld [vmem:[%s3790 + $0x4] sm:$0xf]
        %v3793 = vld [vmem:[%s3790 + $0x8] sm:$0xf]
        %v3794 = vld [vmem:[%s3790 + $0xc] sm:$0xf]
        %v3795 = vld [vmem:[%s3790 + $0x10] sm:$0xf]
        %v3796 = vld [vmem:[%s3790 + $0x14] sm:$0xf]
        %v3797 = vld [vmem:[%s3790 + $0x18] sm:$0xf]
        %v3798 = vld [vmem:[%s3790 + $0x1c] sm:$0xf]
        %v3823 = vrot.slane %v3782, 5
        %v3824 = vrot.slane %v3823, 4
        %v3825 = vrot.slane %v3421, 5
        %v3826 = vsel %vm2272, %v3824, %v3825
        %v3827 = vrot.slane %v3825, 4
        %v3828 = vrot.slane %v3422, 5
        %v3829 = vsel %vm2272, %v3827, %v3828
        %v3830 = vrot.slane %v3783, 5
        %v3831 = vrot.slane %v3830, 4
        %v3832 = vrot.slane %v3424, 5
        %v3833 = vsel %vm2272, %v3831, %v3832
        %v3834 = vrot.slane %v3832, 4
        %v3835 = vrot.slane %v3425, 5
        %v3836 = vsel %vm2272, %v3834, %v3835
        %v3837 = vrot.slane %v3784, 5
        %v3838 = vrot.slane %v3837, 4
        %v3839 = vrot.slane %v3427, 5
        %v3840 = vsel %vm2272, %v3838, %v3839
        %v3841 = vrot.slane %v3839, 4
        %v3842 = vrot.slane %v3428, 5
        %v3843 = vsel %vm2272, %v3841, %v3842
        %v3844 = vrot.slane %v3785, 5
        %v3845 = vrot.slane %v3844, 4
        %v3846 = vrot.slane %v3430, 5
        %v3847 = vsel %vm2272, %v3845, %v3846
        %v3848 = vrot.slane %v3846, 4
        %v3849 = vrot.slane %v3431, 5
        %v3850 = vsel %vm2272, %v3848, %v3849
        %v3851 = vrot.slane %v3786, 5
        %v3852 = vrot.slane %v3851, 4
        %v3853 = vrot.slane %v3433, 5
        %v3854 = vsel %vm2272, %v3852, %v3853
        %v3855 = vrot.slane %v3853, 4
        %v3856 = vrot.slane %v3434, 5
        %v3857 = vsel %vm2272, %v3855, %v3856
        %v3858 = vrot.slane %v3787, 5
        %v3859 = vrot.slane %v3858, 4
        %v3860 = vrot.slane %v3436, 5
        %v3861 = vsel %vm2272, %v3859, %v3860
        %v3862 = vrot.slane %v3860, 4
        %v3863 = vrot.slane %v3437, 5
        %v3864 = vsel %vm2272, %v3862, %v3863
        %v3865 = vrot.slane %v3788, 5
        %v3866 = vrot.slane %v3865, 4
        %v3867 = vrot.slane %v3439, 5
        %v3868 = vsel %vm2272, %v3866, %v3867
        %v3869 = vrot.slane %v3867, 4
        %v3870 = vrot.slane %v3440, 5
        %v3871 = vsel %vm2272, %v3869, %v3870
        %v3872 = vrot.slane %v3789, 5
        %v3873 = vrot.slane %v3872, 4
        %v3874 = vrot.slane %v3442, 5
        %v3875 = vsel %vm2272, %v3873, %v3874
        %v3876 = vrot.slane %v3874, 4
        %v3877 = vrot.slane %v3443, 5
        %v3878 = vsel %vm2272, %v3876, %v3877
        %v3879 = vunpack.c.l.b16 %v3826
        %v3880 = vunpack.c.l.b16 %v3829
        %v3881 = vunpack.c.l.b16 %v3833
        %v3882 = vunpack.c.l.b16 %v3836
        %v3883 = vunpack.c.l.b16 %v3840
        %v3884 = vunpack.c.l.b16 %v3843
        %v3885 = vunpack.c.l.b16 %v3847
        %v3886 = vunpack.c.l.b16 %v3850
        %v3887 = vunpack.c.l.b16 %v3854
        %v3888 = vunpack.c.l.b16 %v3857
        %v3889 = vunpack.c.l.b16 %v3861
        %v3890 = vunpack.c.l.b16 %v3864
        %v3891 = vunpack.c.l.b16 %v3868
        %v3892 = vunpack.c.l.b16 %v3871
        %v3893 = vunpack.c.l.b16 %v3875
        %v3894 = vunpack.c.l.b16 %v3878
        %v3895 = vpack.c.b16 %v3880, %v3879
        %v3896 = vpack.c.b16 %v3882, %v3881
        %v3897 = vpack.c.b16 %v3884, %v3883
        %v3898 = vpack.c.b16 %v3886, %v3885
        %v3899 = vpack.c.b16 %v3888, %v3887
        %v3900 = vpack.c.b16 %v3890, %v3889
        %v3901 = vpack.c.b16 %v3892, %v3891
        %v3902 = vpack.c.b16 %v3894, %v3893
        %v3911 = vunpack.c.l.b16 %v3791
        %v3912 = vunpack.c.l.b16 %v3792
        %v3913 = vunpack.c.l.b16 %v3793
        %v3914 = vunpack.c.l.b16 %v3794
        %v3915 = vunpack.c.l.b16 %v3795
        %v3916 = vunpack.c.l.b16 %v3796
        %v3917 = vunpack.c.l.b16 %v3797
        %v3918 = vunpack.c.l.b16 %v3798
        %v3919 = vpack.c.b16 %v3912, %v3911
        %v3920 = vpack.c.b16 %v3914, %v3913
        %v3921 = vpack.c.b16 %v3916, %v3915
        %v3922 = vpack.c.b16 %v3918, %v3917
        %v3928 = vsel %vm2026, %v3895, 0
        %v3931 = vsel %vm2026, %v3896, 0
        %v3934 = vsel %vm2026, %v3897, 0
        %v3937 = vsel %vm2026, %v3898, 0
        %v3940 = vsel %vm2026, %v3899, 0
        %v3943 = vsel %vm2026, %v3900, 0
        %v3946 = vsel %vm2026, %v3901, 0
        %v3949 = vsel %vm2026, %v3902, 0
        %3951 = vmatpush.bf16.msra.mxu0 0
        %3952 = vmatpush.bf16.msra.mxu0 0
        %3953 = vmatpush.bf16.msra.mxu0 0
        %3954 = vmatpush.bf16.msra.mxu0 0
        %3955 = vmatpush.bf16.msra.mxu0 %v3922
        %3956 = vmatpush.bf16.msra.mxu0 %v3921
        %3957 = vmatpush.bf16.msra.mxu0 %v3920
        %3958 = vmatpush.bf16.msra.mxu0 %v3919
        %3959 = vmatmul.bf16.gmra.mxu0 %v3928
        %v3960 = vpop.f32.mrf.mxu0
        %v3961 = vadd.f32 0.0, %v3960
        %v3962 = vpop.f32.mrf.mxu0
        %v3963 = vadd.f32 0.0, %v3962
        %3964 = vmatmul.bf16.gmra.mxu0 %v3931
        %v3965 = vpop.f32.mrf.mxu0
        %v3966 = vadd.f32 0.0, %v3965
        %v3967 = vpop.f32.mrf.mxu0
        %v3968 = vadd.f32 0.0, %v3967
        %3969 = vmatmul.bf16.gmra.mxu0 %v3934
        %v3970 = vpop.f32.mrf.mxu0
        %v3971 = vadd.f32 0.0, %v3970
        %v3972 = vpop.f32.mrf.mxu0
        %v3973 = vadd.f32 0.0, %v3972
        %3974 = vmatmul.bf16.gmra.mxu0 %v3937
        %v3975 = vpop.f32.mrf.mxu0
        %v3976 = vadd.f32 0.0, %v3975
        %v3977 = vpop.f32.mrf.mxu0
        %v3978 = vadd.f32 0.0, %v3977
        %3979 = vmatmul.bf16.gmra.mxu0 %v3940
        %v3980 = vpop.f32.mrf.mxu0
        %v3981 = vadd.f32 0.0, %v3980
        %v3982 = vpop.f32.mrf.mxu0
        %v3983 = vadd.f32 0.0, %v3982
        %3984 = vmatmul.bf16.gmra.mxu0 %v3943
        %v3985 = vpop.f32.mrf.mxu0
        %v3986 = vadd.f32 0.0, %v3985
        %v3987 = vpop.f32.mrf.mxu0
        %v3988 = vadd.f32 0.0, %v3987
        %3989 = vmatmul.bf16.gmra.mxu0 %v3946
        %v3990 = vpop.f32.mrf.mxu0
        %v3991 = vadd.f32 0.0, %v3990
        %v3992 = vpop.f32.mrf.mxu0
        %v3993 = vadd.f32 0.0, %v3992
        %3994 = vmatmul.bf16.gmra.mxu0 %v3949
        %v3995 = vpop.f32.mrf.mxu0
        %v3996 = vadd.f32 0.0, %v3995
        %v3997 = vpop.f32.mrf.mxu0
        %v3998 = vadd.f32 0.0, %v3997
        %3999 = vdwg.mxu0
        %v4000 = vadd.f32 %v3766, %v3961
        %v4001 = vadd.f32 %v3767, %v3963
        %v4002 = vadd.f32 %v3768, %v3966
        %v4003 = vadd.f32 %v3769, %v3968
        %v4004 = vadd.f32 %v3770, %v3971
        %v4005 = vadd.f32 %v3771, %v3973
        %v4006 = vadd.f32 %v3772, %v3976
        %v4007 = vadd.f32 %v3773, %v3978
        %v4008 = vadd.f32 %v3774, %v3981
        %v4009 = vadd.f32 %v3775, %v3983
        %v4010 = vadd.f32 %v3776, %v3986
        %v4011 = vadd.f32 %v3777, %v3988
        %v4012 = vadd.f32 %v3778, %v3991
        %v4013 = vadd.f32 %v3779, %v3993
        %v4014 = vadd.f32 %v3780, %v3996
        %v4015 = vadd.f32 %v3781, %v3998
        %v4016 = vld [vmem:[%s4] sm:$0x1]
        %v4018 = vperm.slane %v4016, 0
        %v4020 = vadd.f32 %v4000, %v4018
        %v4021 = vadd.f32 %v4001, %v4018
        %v4022 = vadd.f32 %v4002, %v4018
        %v4023 = vadd.f32 %v4003, %v4018
        %v4024 = vadd.f32 %v4004, %v4018
        %v4025 = vadd.f32 %v4005, %v4018
        %v4026 = vadd.f32 %v4006, %v4018
        %v4027 = vadd.f32 %v4007, %v4018
        %v4028 = vadd.f32 %v4008, %v4018
        %v4029 = vadd.f32 %v4009, %v4018
        %v4030 = vadd.f32 %v4010, %v4018
        %v4031 = vadd.f32 %v4011, %v4018
        %v4032 = vadd.f32 %v4012, %v4018
        %v4033 = vadd.f32 %v4013, %v4018
        %v4034 = vadd.f32 %v4014, %v4018
        %v4035 = vadd.f32 %v4015, %v4018
        %v4036 = vmax.f32 %v4020, 0.0
        %v4037 = vmax.f32 %v4021, 0.0
        %v4038 = vmax.f32 %v4022, 0.0
        %v4039 = vmax.f32 %v4023, 0.0
        %v4040 = vmax.f32 %v4024, 0.0
        %v4041 = vmax.f32 %v4025, 0.0
        %v4042 = vmax.f32 %v4026, 0.0
        %v4043 = vmax.f32 %v4027, 0.0
        %v4044 = vmax.f32 %v4028, 0.0
        %v4045 = vmax.f32 %v4029, 0.0
        %v4046 = vmax.f32 %v4030, 0.0
        %v4047 = vmax.f32 %v4031, 0.0
        %v4048 = vmax.f32 %v4032, 0.0
        %v4049 = vmax.f32 %v4033, 0.0
        %v4050 = vmax.f32 %v4034, 0.0
        %v4051 = vmax.f32 %v4035, 0.0
        %4052 = vst.msk [vmem:[%s241] sm:$0xff] %vm2026, %v4036
        %4053 = vst.msk [vmem:[%s241 + $0x8] sm:$0xff] %vm2026, %v4037
        %4054 = vst.msk [vmem:[%s241 + $0x10] sm:$0xff] %vm2026, %v4038
        %4055 = vst.msk [vmem:[%s241 + $0x18] sm:$0xff] %vm2026, %v4039
        %4056 = vst.msk [vmem:[%s241 + $0x20] sm:$0xff] %vm2026, %v4040
        %4057 = vst.msk [vmem:[%s241 + $0x28] sm:$0xff] %vm2026, %v4041
        %4058 = vst.msk [vmem:[%s241 + $0x30] sm:$0xff] %vm2026, %v4042
        %4059 = vst.msk [vmem:[%s241 + $0x38] sm:$0xff] %vm2026, %v4043
        %4060 = vst.msk [vmem:[%s241 + $0x40] sm:$0xff] %vm2026, %v4044
        %4061 = vst.msk [vmem:[%s241 + $0x48] sm:$0xff] %vm2026, %v4045
        %4062 = vst.msk [vmem:[%s241 + $0x50] sm:$0xff] %vm2026, %v4046
        %4063 = vst.msk [vmem:[%s241 + $0x58] sm:$0xff] %vm2026, %v4047
        %4064 = vst.msk [vmem:[%s241 + $0x60] sm:$0xff] %vm2026, %v4048
        %4065 = vst.msk [vmem:[%s241 + $0x68] sm:$0xff] %vm2026, %v4049
        %4066 = vst.msk [vmem:[%s241 + $0x70] sm:$0xff] %vm2026, %v4050
        %4067 = vst.msk [vmem:[%s241 + $0x78] sm:$0xff] %vm2026, %v4051
        %s4068 = sand.u32 %s153, 1
        %s4069 = scalar_lea.sflag [#allocation4], %s4068
        %s4070 = sand.u32 %s153, 1
        %s4071 = smul.addr %s4070, 128
        %s4072 = scalar_lea.vmem [#allocation3], %s4071
        // Predicated region
        $region41: #{block1_forward.1} parent=39 // pred_check
          %p4073 = pneg %p163
        $region42: #{block1_forward.1} parent=39 // pred_check_branch
          %4075 = sbr.rel (%p4073) target = $region44
        $region43: #{block1_forward.1} parent=39 // pred_region
          %s4076 = smul.u32 8, %s24
          %4078 = vsyncadd %s4069, 0
          %s4079 = smul.addr %s4076, 2
          %s4080 = smul.addr %s23, 32
          %s4081 = sadd.s32 %s4079, %s4080
          %s4082 = smul.addr %s4081, 8
          %s4083 = scalar_lea.hbm %s5, %s4082
          %s4084 = sshll.u32 %s4072, 4
          %s4085 = int_to_ptr.vmem [resolvable:$true] %s4084
          %s4086 = sshll.u32 %s4083, 4
          %s4087 = int_to_ptr.hbm [resolvable:$true] %s4086
          %4092 = dma.vmem_to_hbm [thread:$0]  %s4085, 2048, %s4087, %s4069, 128, 128, 8
        $region44: #{block1_forward.1} parent=39 // pred_fallthru
          _
      $region40: #{block1_forward.1} parent=5 // pred_fallthru
        _
      %p4093 = scmp.le.s32.totalorder 2, %s14
      // Predicated region
      $region45: #{block1_forward.1} parent=5 // pred_check
        %p4094 = pneg %p4093
      $region46: #{block1_forward.1} parent=5 // pred_check_branch
        %4096 = sbr.rel (%p4094) target = $region48
      $region47: #{block1_forward.1} parent=5 // pred_region
        %s4097 = ssub.s32 %s14, 2
        // Predicated region
        $region49: #{block1_forward.1} parent=47 // pred_check
          %p4098 = pneg %p169
        $region50: #{block1_forward.1} parent=47 // pred_check_branch
          %4100 = sbr.rel (%p4098) target = $region52
        $region51: #{block1_forward.1} parent=47 // pred_region
          %s4101 = sand.u32 %s154, 1
          %s4102 = scalar_lea.sflag [#allocation4], %s4101
          %s4103 = sand.u32 %s154, 1
          %s4104 = smul.addr %s4103, 128
          %s4105 = scalar_lea.vmem [#allocation3], %s4104
          %4107 = dma.done %s4102, 2048
        $region52: #{block1_forward.1} parent=47 // pred_fallthru
          _
      $region48: #{block1_forward.1} parent=5 // pred_fallthru
        _
    $region6: #{block1_forward.1} parent=1 // loop_footer
      %s18 = sadd.s32 1, %s14
    $region7: #{block1_forward.1} parent=1 // loop_footer_branch
      %13 = sbr.rel target = $region3
    $region8: #{block1_forward.1} parent=1 // loop_exit
      _
    %4108 = vsyncpa [#allocation4], 1
    %s4109 = scalar_lea.sflag [#allocation4], 1
    %4110 = vsyncpa %s4109, 1

</llo_original>
